<compile_context>
chip_gen: v5e
topology: v5e:2x2
jax: 0.10.0
libtpu: 0.0.40
codegen_flags: <defaults>
</compile_context>

<pallas_src>
import jax
import jax.numpy as jnp
from jax.experimental import pallas as pl
from jax.experimental.pallas import tpu as pltpu

# Module constants (from gpt.py)
BLOCK_SZ = 64
N_EMBD = 384
NUM_HEADS = 6
HEAD_SZ = N_EMBD // NUM_HEADS          # 64; head_sz * num_heads == n_embd
HHS = NUM_HEADS * HEAD_SZ              # 384 (concat width)

# TODO(synk): dropout (p=0.2) is a no-op in eval mode; training-mode dropout
# would need pltpu.prng_seed/prng_random_bits and is intentionally omitted.


# ----------------------------------------------------------------------------
# Fused kernel: QKV for all heads + per-head causal softmax-attention + the
# output projection proj(x).  grid = (B,); one program per batch element.
# ----------------------------------------------------------------------------
def _mha_kernel(x_ref, wqkv_ref, wproj_ref, bproj_ref, out_ref, heads_ref):
    x = x_ref[0]                               # (T, C) bf16

    # --- fused QKV: single (T,C)@(C,3*H*Hs) MXU matmul, f32 accumulation ---
    qkv = jnp.dot(x, wqkv_ref[...],
                  preferred_element_type=jnp.float32)        # (T, 3*HHS) f32
    q = qkv[:, 0 * HHS:1 * HHS]                # head h lives at cols [h*Hs,(h+1)*Hs)
    k = qkv[:, 1 * HHS:2 * HHS]
    v = qkv[:, 2 * HHS:3 * HHS]

    T = x.shape[0]
    row = jax.lax.broadcasted_iota(jnp.int32, (T, T), 0)
    col = jax.lax.broadcasted_iota(jnp.int32, (T, T), 1)
    causal = col <= row                        # tril mask
    neg_big = jnp.float32(-1e30)               # finite (NaN-safe masking)
    scale = jnp.float32(HEAD_SZ) ** -0.5

    head_outs = []
    for h in range(NUM_HEADS):                 # unrolled at trace time
        qh = q[:, h * HEAD_SZ:(h + 1) * HEAD_SZ]
        kh = k[:, h * HEAD_SZ:(h + 1) * HEAD_SZ]
        vh = v[:, h * HEAD_SZ:(h + 1) * HEAD_SZ]

        # scores: contract last dims directly (q @ k^T without materializing k.T)
        s = jax.lax.dot_general(
            qh, kh, (((1,), (1,)), ((), ())),
            preferred_element_type=jnp.float32) * scale      # (T, T)
        s = jnp.where(causal, s, neg_big)

        # softmax in f32; reciprocal runs on the EUP slot
        s = s - jnp.max(s, axis=-1, keepdims=True)
        p = jnp.exp(s)
        p = p * pl.reciprocal(jnp.sum(p, axis=-1, keepdims=True), approx=True)

        head_outs.append(jnp.dot(p, vh, preferred_element_type=jnp.float32))

    # One lane-dense (T, H*Hs)=(64,384) store — no per-head masked stores.
    heads_ref[0] = jnp.concatenate(head_outs, axis=-1).astype(heads_ref.dtype)

    # Output projection applied to x (the module's quirky forward: proj(x)).
    y = jnp.dot(x, wproj_ref[...], preferred_element_type=jnp.float32)
    out_ref[0] = (y + bproj_ref[...]).astype(out_ref.dtype)


def _fuse_qkv(params):
    """Concatenate per-head q/k/v weights into one (C, 3*H*Hs) slab: [Q | K | V].

    Per-head weight w is (H, C, Hs); head h lands at columns [h*Hs,(h+1)*Hs)
    of its section.  One-time, tiny weight prep outside the kernel — no
    hot-path transposes on activations.
    """
    def flat(w):
        return jnp.transpose(w, (1, 0, 2)).reshape(N_EMBD, HHS)
    return jnp.concatenate(
        [flat(params["wq"]), flat(params["wk"]), flat(params["wv"])], axis=-1)


def multi_head_attention_forward(x, params):
    """Returns (proj(x), concat_heads(x)).  The PyTorch module returns the
    first; the second is the (discarded-by-the-module) attention result,
    kept so the kernel's work matches the module forward and can be checked."""
    B, T, C = x.shape
    xb = x.astype(jnp.bfloat16)                 # bf16 MXU operands
    w_qkv = _fuse_qkv(params)                   # (C, 3*H*Hs) bf16

    out, heads = pl.pallas_call(
        _mha_kernel,
        out_shape=(
            jax.ShapeDtypeStruct((B, T, N_EMBD), jnp.float32),
            jax.ShapeDtypeStruct((B, T, HHS), jnp.float32),
        ),
        grid_spec=pltpu.PrefetchScalarGridSpec(
            num_scalar_prefetch=0,
            grid=(B,),
            in_specs=[
                pl.BlockSpec((1, T, C), lambda b: (b, 0, 0)),          # x
                pl.BlockSpec((C, 3 * HHS), lambda b: (0, 0)),          # W_qkv
                pl.BlockSpec((HHS, N_EMBD), lambda b: (0, 0)),         # W_proj
                pl.BlockSpec((1, N_EMBD), lambda b: (0, 0)),           # b_proj
            ],
            out_specs=[
                pl.BlockSpec((1, T, N_EMBD), lambda b: (b, 0, 0)),     # proj(x)
                pl.BlockSpec((1, T, HHS), lambda b: (b, 0, 0)),        # heads
            ],
        ),
        compiler_params=pltpu.CompilerParams(
            dimension_semantics=("parallel",)),   # batch → both TCs on v7x
    )(xb, w_qkv, params["w_proj"], params["b_proj"])
    return out, heads


def init_params(key):
    kq, kk, kv, kp, kb = jax.random.split(key, 5)
    scale_in = 1.0 / jnp.sqrt(N_EMBD)
    u = lambda k, shape: jax.random.uniform(k, shape, jnp.float32,
                                            -scale_in, scale_in)
    return {
        # per-head linear weights, stored as (H, C, Hs) so y = x @ W; bf16 operands
        "wq": u(kq, (NUM_HEADS, N_EMBD, HEAD_SZ)).astype(jnp.bfloat16),
        "wk": u(kk, (NUM_HEADS, N_EMBD, HEAD_SZ)).astype(jnp.bfloat16),
        "wv": u(kv, (NUM_HEADS, N_EMBD, HEAD_SZ)).astype(jnp.bfloat16),
        # proj: nn.Linear(H*Hs, n_embd); stored transposed as (H*Hs, n_embd)
        "w_proj": u(kp, (HHS, N_EMBD)).astype(jnp.bfloat16),
        "b_proj": u(kb, (1, N_EMBD)),           # bias stays f32
    }


def _reference(x, params):
    """Plain-JAX reference (same bf16 operands, f32 accumulation)."""
    xb = x.astype(jnp.bfloat16)
    q = jnp.einsum("btc,hcd->bhtd", xb, params["wq"],
                   preferred_element_type=jnp.float32)
    k = jnp.einsum("btc,hcd->bhtd", xb, params["wk"],
                   preferred_element_type=jnp.float32)
    v = jnp.einsum("btc,hcd->bhtd", xb, params["wv"],
                   preferred_element_type=jnp.float32)
    s = jnp.einsum("bhtd,bhsd->bhts", q, k,
                   preferred_element_type=jnp.float32) * (HEAD_SZ ** -0.5)
    T = x.shape[1]
    mask = jnp.tril(jnp.ones((T, T), bool))
    s = jnp.where(mask, s, -jnp.inf)
    p = jax.nn.softmax(s, axis=-1)
    heads = jnp.einsum("bhts,bhsd->bhtd", p, v,
                       preferred_element_type=jnp.float32)
    heads = jnp.transpose(heads, (0, 2, 1, 3)).reshape(x.shape[0], T, -1)
    out = jnp.einsum("btc,cd->btd", xb, params["w_proj"],
                     preferred_element_type=jnp.float32) + params["b_proj"]
    return out, heads


if __name__ == "__main__":
    key = jax.random.PRNGKey(0)
    kx, kp = jax.random.split(key)

    B, T = 2, BLOCK_SZ                      # T = block_sz = 64, n_embd = 384
    x = jax.random.normal(kx, (B, T, N_EMBD), jnp.float32)
    params = init_params(kp)

    out, heads_out = multi_head_attention_forward(x, params)
    out = jax.block_until_ready(out)
    heads_out = jax.block_until_ready(heads_out)

    ref_out, ref_heads = _reference(x, params)
    assert jnp.allclose(out, ref_out, atol=2e-3, rtol=2e-3), "proj(x) mismatch"
    assert jnp.allclose(heads_out, ref_heads, atol=5e-3, rtol=5e-3), "heads mismatch"

    print("KERNEL_OK")
</pallas_src>

<mosaic_0001>
module attributes {stable_mosaic.version = 11 : i64} {
  func.func @_mha_kernel(%arg0: i32, %arg1: memref<1x64x384xbf16, #tpu.memory_space<vmem>>, %arg2: memref<384x1152xbf16, #tpu.memory_space<vmem>>, %arg3: memref<384x384xbf16, #tpu.memory_space<vmem>>, %arg4: memref<1x384xf32, #tpu.memory_space<vmem>>, %arg5: memref<1x64x384xf32, #tpu.memory_space<vmem>>, %arg6: memref<1x64x384xf32, #tpu.memory_space<vmem>>) attributes {dimension_semantics = [#tpu.dimension_semantics<parallel>], iteration_bounds = array<i64: 2>, scalar_prefetch = 0 : i64, scratch_operands = 0 : i64, tpu.core_type = #tpu.core_type<tc>, window_params = [{transform_indices = @transform_0, window_bounds = array<i64: 1, 64, 384>}, {pipeline_mode = #tpu.pipeline_mode<synchronous>, transform_indices = @transform_1, window_bounds = array<i64: 384, 1152>}, {pipeline_mode = #tpu.pipeline_mode<synchronous>, transform_indices = @transform_2, window_bounds = array<i64: 384, 384>}, {pipeline_mode = #tpu.pipeline_mode<synchronous>, transform_indices = @transform_3, window_bounds = array<i64: 1, 384>}, {transform_indices = @transform_4, window_bounds = array<i64: 1, 64, 384>}, {transform_indices = @transform_5, window_bounds = array<i64: 1, 64, 384>}]} {
    %c0 = arith.constant 0 : index
    %c0_0 = arith.constant 0 : index
    %c0_1 = arith.constant 0 : index
    %0 = vector.load %arg1[%c0, %c0_0, %c0_1] : memref<1x64x384xbf16, #tpu.memory_space<vmem>>, vector<1x64x384xbf16>
    %1 = vector.shape_cast %0 : vector<1x64x384xbf16> to vector<64x384xbf16>
    %c0_2 = arith.constant 0 : index
    %c0_3 = arith.constant 0 : index
    %2 = vector.load %arg2[%c0_2, %c0_3] : memref<384x1152xbf16, #tpu.memory_space<vmem>>, vector<384x1152xbf16>
    %cst = arith.constant dense<0.000000e+00> : vector<64x1152xf32>
    %3 = tpu.matmul %1, %2, %cst {dimension_numbers = #tpu.dot_dimension_numbers<[1], [0], [0], [1], [0, 0, 1, 1], [], []>} : vector<64x384xbf16>, vector<384x1152xbf16>, vector<64x1152xf32> -> vector<64x1152xf32>
    %4 = vector.extract_strided_slice %3 {offsets = [0, 0], sizes = [64, 384], strides = [1, 1]} : vector<64x1152xf32> to vector<64x384xf32>
    %5 = vector.extract_strided_slice %3 {offsets = [0, 384], sizes = [64, 384], strides = [1, 1]} : vector<64x1152xf32> to vector<64x384xf32>
    %6 = vector.extract_strided_slice %3 {offsets = [0, 768], sizes = [64, 384], strides = [1, 1]} : vector<64x1152xf32> to vector<64x384xf32>
    %7 = tpu.iota {dimensions = array<i32: 0>} : vector<64x64xi32>
    %8 = tpu.iota {dimensions = array<i32: 1>} : vector<64x64xi32>
    %9 = arith.cmpi sle, %8, %7 : vector<64x64xi32>
    %cst_4 = arith.constant 6.400000e+01 : f32
    %cst_5 = arith.constant -5.000000e-01 : f32
    %10 = math.powf %cst_4, %cst_5 : f32
    %11 = vector.extract_strided_slice %4 {offsets = [0, 0], sizes = [64, 64], strides = [1, 1]} : vector<64x384xf32> to vector<64x64xf32>
    %12 = vector.extract_strided_slice %5 {offsets = [0, 0], sizes = [64, 64], strides = [1, 1]} : vector<64x384xf32> to vector<64x64xf32>
    %13 = vector.extract_strided_slice %6 {offsets = [0, 0], sizes = [64, 64], strides = [1, 1]} : vector<64x384xf32> to vector<64x64xf32>
    %cst_6 = arith.constant dense<0.000000e+00> : vector<64x64xf32>
    %14 = tpu.matmul %11, %12, %cst_6 {dimension_numbers = #tpu.dot_dimension_numbers<[1], [1], [0], [0], [0, 0, 1, 0], [], []>} : vector<64x64xf32>, vector<64x64xf32>, vector<64x64xf32> -> vector<64x64xf32>
    %15 = vector.broadcast %10 : f32 to vector<64x64xf32>
    %16 = arith.mulf %14, %15 : vector<64x64xf32>
    %cst_7 = arith.constant -1.000000e+30 : f32
    %17 = vector.broadcast %cst_7 : f32 to vector<64x64xf32>
    %18 = arith.select %9, %16, %17 : vector<64x64xi1>, vector<64x64xf32>
    %cst_8 = arith.constant dense<0xFF800000> : vector<64xf32>
    %19 = vector.multi_reduction <maximumf>, %18, %cst_8 [1] : vector<64x64xf32> to vector<64xf32>
    %20 = vector.shape_cast %19 : vector<64xf32> to vector<64x1xf32>
    %21 = vector.broadcast %20 : vector<64x1xf32> to vector<64x64xf32>
    %22 = arith.subf %18, %21 : vector<64x64xf32>
    %23 = math.exp %22 : vector<64x64xf32>
    %cst_9 = arith.constant dense<0.000000e+00> : vector<64xf32>
    %24 = vector.multi_reduction <add>, %23, %cst_9 [1] : vector<64x64xf32> to vector<64xf32>
    %25 = vector.shape_cast %24 : vector<64xf32> to vector<64x1xf32>
    %26 = tpu.reciprocal %25 {approx = true} : vector<64x1xf32> -> vector<64x1xf32>
    %27 = vector.broadcast %26 : vector<64x1xf32> to vector<64x64xf32>
    %28 = arith.mulf %23, %27 : vector<64x64xf32>
    %cst_10 = arith.constant dense<0.000000e+00> : vector<64x64xf32>
    %29 = tpu.matmul %28, %13, %cst_10 {dimension_numbers = #tpu.dot_dimension_numbers<[1], [0], [0], [1], [0, 0, 1, 1], [], []>} : vector<64x64xf32>, vector<64x64xf32>, vector<64x64xf32> -> vector<64x64xf32>
    %30 = vector.extract_strided_slice %4 {offsets = [0, 64], sizes = [64, 64], strides = [1, 1]} : vector<64x384xf32> to vector<64x64xf32>
    %31 = vector.extract_strided_slice %5 {offsets = [0, 64], sizes = [64, 64], strides = [1, 1]} : vector<64x384xf32> to vector<64x64xf32>
    %32 = vector.extract_strided_slice %6 {offsets = [0, 64], sizes = [64, 64], strides = [1, 1]} : vector<64x384xf32> to vector<64x64xf32>
    %cst_11 = arith.constant dense<0.000000e+00> : vector<64x64xf32>
    %33 = tpu.matmul %30, %31, %cst_11 {dimension_numbers = #tpu.dot_dimension_numbers<[1], [1], [0], [0], [0, 0, 1, 0], [], []>} : vector<64x64xf32>, vector<64x64xf32>, vector<64x64xf32> -> vector<64x64xf32>
    %34 = vector.broadcast %10 : f32 to vector<64x64xf32>
    %35 = arith.mulf %33, %34 : vector<64x64xf32>
    %cst_12 = arith.constant -1.000000e+30 : f32
    %36 = vector.broadcast %cst_12 : f32 to vector<64x64xf32>
    %37 = arith.select %9, %35, %36 : vector<64x64xi1>, vector<64x64xf32>
    %cst_13 = arith.constant dense<0xFF800000> : vector<64xf32>
    %38 = vector.multi_reduction <maximumf>, %37, %cst_13 [1] : vector<64x64xf32> to vector<64xf32>
    %39 = vector.shape_cast %38 : vector<64xf32> to vector<64x1xf32>
    %40 = vector.broadcast %39 : vector<64x1xf32> to vector<64x64xf32>
    %41 = arith.subf %37, %40 : vector<64x64xf32>
    %42 = math.exp %41 : vector<64x64xf32>
    %cst_14 = arith.constant dense<0.000000e+00> : vector<64xf32>
    %43 = vector.multi_reduction <add>, %42, %cst_14 [1] : vector<64x64xf32> to vector<64xf32>
    %44 = vector.shape_cast %43 : vector<64xf32> to vector<64x1xf32>
    %45 = tpu.reciprocal %44 {approx = true} : vector<64x1xf32> -> vector<64x1xf32>
    %46 = vector.broadcast %45 : vector<64x1xf32> to vector<64x64xf32>
    %47 = arith.mulf %42, %46 : vector<64x64xf32>
    %cst_15 = arith.constant dense<0.000000e+00> : vector<64x64xf32>
    %48 = tpu.matmul %47, %32, %cst_15 {dimension_numbers = #tpu.dot_dimension_numbers<[1], [0], [0], [1], [0, 0, 1, 1], [], []>} : vector<64x64xf32>, vector<64x64xf32>, vector<64x64xf32> -> vector<64x64xf32>
    %49 = vector.extract_strided_slice %4 {offsets = [0, 128], sizes = [64, 64], strides = [1, 1]} : vector<64x384xf32> to vector<64x64xf32>
    %50 = vector.extract_strided_slice %5 {offsets = [0, 128], sizes = [64, 64], strides = [1, 1]} : vector<64x384xf32> to vector<64x64xf32>
    %51 = vector.extract_strided_slice %6 {offsets = [0, 128], sizes = [64, 64], strides = [1, 1]} : vector<64x384xf32> to vector<64x64xf32>
    %cst_16 = arith.constant dense<0.000000e+00> : vector<64x64xf32>
    %52 = tpu.matmul %49, %50, %cst_16 {dimension_numbers = #tpu.dot_dimension_numbers<[1], [1], [0], [0], [0, 0, 1, 0], [], []>} : vector<64x64xf32>, vector<64x64xf32>, vector<64x64xf32> -> vector<64x64xf32>
    %53 = vector.broadcast %10 : f32 to vector<64x64xf32>
    %54 = arith.mulf %52, %53 : vector<64x64xf32>
    %cst_17 = arith.constant -1.000000e+30 : f32
    %55 = vector.broadcast %cst_17 : f32 to vector<64x64xf32>
    %56 = arith.select %9, %54, %55 : vector<64x64xi1>, vector<64x64xf32>
    %cst_18 = arith.constant dense<0xFF800000> : vector<64xf32>
    %57 = vector.multi_reduction <maximumf>, %56, %cst_18 [1] : vector<64x64xf32> to vector<64xf32>
    %58 = vector.shape_cast %57 : vector<64xf32> to vector<64x1xf32>
    %59 = vector.broadcast %58 : vector<64x1xf32> to vector<64x64xf32>
    %60 = arith.subf %56, %59 : vector<64x64xf32>
    %61 = math.exp %60 : vector<64x64xf32>
    %cst_19 = arith.constant dense<0.000000e+00> : vector<64xf32>
    %62 = vector.multi_reduction <add>, %61, %cst_19 [1] : vector<64x64xf32> to vector<64xf32>
    %63 = vector.shape_cast %62 : vector<64xf32> to vector<64x1xf32>
    %64 = tpu.reciprocal %63 {approx = true} : vector<64x1xf32> -> vector<64x1xf32>
    %65 = vector.broadcast %64 : vector<64x1xf32> to vector<64x64xf32>
    %66 = arith.mulf %61, %65 : vector<64x64xf32>
    %cst_20 = arith.constant dense<0.000000e+00> : vector<64x64xf32>
    %67 = tpu.matmul %66, %51, %cst_20 {dimension_numbers = #tpu.dot_dimension_numbers<[1], [0], [0], [1], [0, 0, 1, 1], [], []>} : vector<64x64xf32>, vector<64x64xf32>, vector<64x64xf32> -> vector<64x64xf32>
    %68 = vector.extract_strided_slice %4 {offsets = [0, 192], sizes = [64, 64], strides = [1, 1]} : vector<64x384xf32> to vector<64x64xf32>
    %69 = vector.extract_strided_slice %5 {offsets = [0, 192], sizes = [64, 64], strides = [1, 1]} : vector<64x384xf32> to vector<64x64xf32>
    %70 = vector.extract_strided_slice %6 {offsets = [0, 192], sizes = [64, 64], strides = [1, 1]} : vector<64x384xf32> to vector<64x64xf32>
    %cst_21 = arith.constant dense<0.000000e+00> : vector<64x64xf32>
    %71 = tpu.matmul %68, %69, %cst_21 {dimension_numbers = #tpu.dot_dimension_numbers<[1], [1], [0], [0], [0, 0, 1, 0], [], []>} : vector<64x64xf32>, vector<64x64xf32>, vector<64x64xf32> -> vector<64x64xf32>
    %72 = vector.broadcast %10 : f32 to vector<64x64xf32>
    %73 = arith.mulf %71, %72 : vector<64x64xf32>
    %cst_22 = arith.constant -1.000000e+30 : f32
    %74 = vector.broadcast %cst_22 : f32 to vector<64x64xf32>
    %75 = arith.select %9, %73, %74 : vector<64x64xi1>, vector<64x64xf32>
    %cst_23 = arith.constant dense<0xFF800000> : vector<64xf32>
    %76 = vector.multi_reduction <maximumf>, %75, %cst_23 [1] : vector<64x64xf32> to vector<64xf32>
    %77 = vector.shape_cast %76 : vector<64xf32> to vector<64x1xf32>
    %78 = vector.broadcast %77 : vector<64x1xf32> to vector<64x64xf32>
    %79 = arith.subf %75, %78 : vector<64x64xf32>
    %80 = math.exp %79 : vector<64x64xf32>
    %cst_24 = arith.constant dense<0.000000e+00> : vector<64xf32>
    %81 = vector.multi_reduction <add>, %80, %cst_24 [1] : vector<64x64xf32> to vector<64xf32>
    %82 = vector.shape_cast %81 : vector<64xf32> to vector<64x1xf32>
    %83 = tpu.reciprocal %82 {approx = true} : vector<64x1xf32> -> vector<64x1xf32>
    %84 = vector.broadcast %83 : vector<64x1xf32> to vector<64x64xf32>
    %85 = arith.mulf %80, %84 : vector<64x64xf32>
    %cst_25 = arith.constant dense<0.000000e+00> : vector<64x64xf32>
    %86 = tpu.matmul %85, %70, %cst_25 {dimension_numbers = #tpu.dot_dimension_numbers<[1], [0], [0], [1], [0, 0, 1, 1], [], []>} : vector<64x64xf32>, vector<64x64xf32>, vector<64x64xf32> -> vector<64x64xf32>
    %87 = vector.extract_strided_slice %4 {offsets = [0, 256], sizes = [64, 64], strides = [1, 1]} : vector<64x384xf32> to vector<64x64xf32>
    %88 = vector.extract_strided_slice %5 {offsets = [0, 256], sizes = [64, 64], strides = [1, 1]} : vector<64x384xf32> to vector<64x64xf32>
    %89 = vector.extract_strided_slice %6 {offsets = [0, 256], sizes = [64, 64], strides = [1, 1]} : vector<64x384xf32> to vector<64x64xf32>
    %cst_26 = arith.constant dense<0.000000e+00> : vector<64x64xf32>
    %90 = tpu.matmul %87, %88, %cst_26 {dimension_numbers = #tpu.dot_dimension_numbers<[1], [1], [0], [0], [0, 0, 1, 0], [], []>} : vector<64x64xf32>, vector<64x64xf32>, vector<64x64xf32> -> vector<64x64xf32>
    %91 = vector.broadcast %10 : f32 to vector<64x64xf32>
    %92 = arith.mulf %90, %91 : vector<64x64xf32>
    %cst_27 = arith.constant -1.000000e+30 : f32
    %93 = vector.broadcast %cst_27 : f32 to vector<64x64xf32>
    %94 = arith.select %9, %92, %93 : vector<64x64xi1>, vector<64x64xf32>
    %cst_28 = arith.constant dense<0xFF800000> : vector<64xf32>
    %95 = vector.multi_reduction <maximumf>, %94, %cst_28 [1] : vector<64x64xf32> to vector<64xf32>
    %96 = vector.shape_cast %95 : vector<64xf32> to vector<64x1xf32>
    %97 = vector.broadcast %96 : vector<64x1xf32> to vector<64x64xf32>
    %98 = arith.subf %94, %97 : vector<64x64xf32>
    %99 = math.exp %98 : vector<64x64xf32>
    %cst_29 = arith.constant dense<0.000000e+00> : vector<64xf32>
    %100 = vector.multi_reduction <add>, %99, %cst_29 [1] : vector<64x64xf32> to vector<64xf32>
    %101 = vector.shape_cast %100 : vector<64xf32> to vector<64x1xf32>
    %102 = tpu.reciprocal %101 {approx = true} : vector<64x1xf32> -> vector<64x1xf32>
    %103 = vector.broadcast %102 : vector<64x1xf32> to vector<64x64xf32>
    %104 = arith.mulf %99, %103 : vector<64x64xf32>
    %cst_30 = arith.constant dense<0.000000e+00> : vector<64x64xf32>
    %105 = tpu.matmul %104, %89, %cst_30 {dimension_numbers = #tpu.dot_dimension_numbers<[1], [0], [0], [1], [0, 0, 1, 1], [], []>} : vector<64x64xf32>, vector<64x64xf32>, vector<64x64xf32> -> vector<64x64xf32>
    %106 = vector.extract_strided_slice %4 {offsets = [0, 320], sizes = [64, 64], strides = [1, 1]} : vector<64x384xf32> to vector<64x64xf32>
    %107 = vector.extract_strided_slice %5 {offsets = [0, 320], sizes = [64, 64], strides = [1, 1]} : vector<64x384xf32> to vector<64x64xf32>
    %108 = vector.extract_strided_slice %6 {offsets = [0, 320], sizes = [64, 64], strides = [1, 1]} : vector<64x384xf32> to vector<64x64xf32>
    %cst_31 = arith.constant dense<0.000000e+00> : vector<64x64xf32>
    %109 = tpu.matmul %106, %107, %cst_31 {dimension_numbers = #tpu.dot_dimension_numbers<[1], [1], [0], [0], [0, 0, 1, 0], [], []>} : vector<64x64xf32>, vector<64x64xf32>, vector<64x64xf32> -> vector<64x64xf32>
    %110 = vector.broadcast %10 : f32 to vector<64x64xf32>
    %111 = arith.mulf %109, %110 : vector<64x64xf32>
    %cst_32 = arith.constant -1.000000e+30 : f32
    %112 = vector.broadcast %cst_32 : f32 to vector<64x64xf32>
    %113 = arith.select %9, %111, %112 : vector<64x64xi1>, vector<64x64xf32>
    %cst_33 = arith.constant dense<0xFF800000> : vector<64xf32>
    %114 = vector.multi_reduction <maximumf>, %113, %cst_33 [1] : vector<64x64xf32> to vector<64xf32>
    %115 = vector.shape_cast %114 : vector<64xf32> to vector<64x1xf32>
    %116 = vector.broadcast %115 : vector<64x1xf32> to vector<64x64xf32>
    %117 = arith.subf %113, %116 : vector<64x64xf32>
    %118 = math.exp %117 : vector<64x64xf32>
    %cst_34 = arith.constant dense<0.000000e+00> : vector<64xf32>
    %119 = vector.multi_reduction <add>, %118, %cst_34 [1] : vector<64x64xf32> to vector<64xf32>
    %120 = vector.shape_cast %119 : vector<64xf32> to vector<64x1xf32>
    %121 = tpu.reciprocal %120 {approx = true} : vector<64x1xf32> -> vector<64x1xf32>
    %122 = vector.broadcast %121 : vector<64x1xf32> to vector<64x64xf32>
    %123 = arith.mulf %118, %122 : vector<64x64xf32>
    %cst_35 = arith.constant dense<0.000000e+00> : vector<64x64xf32>
    %124 = tpu.matmul %123, %108, %cst_35 {dimension_numbers = #tpu.dot_dimension_numbers<[1], [0], [0], [1], [0, 0, 1, 1], [], []>} : vector<64x64xf32>, vector<64x64xf32>, vector<64x64xf32> -> vector<64x64xf32>
    %125 = tpu.concatenate %29, %48, %67, %86, %105, %124 in 1 : vector<64x64xf32>, vector<64x64xf32>, vector<64x64xf32>, vector<64x64xf32>, vector<64x64xf32>, vector<64x64xf32> -> vector<64x384xf32>
    %c0_36 = arith.constant 0 : index
    %c0_37 = arith.constant 0 : index
    %c0_38 = arith.constant 0 : index
    %126 = vector.load %arg6[%c0_36, %c0_37, %c0_38] : memref<1x64x384xf32, #tpu.memory_space<vmem>>, vector<1x64x384xf32>
    %127 = vector.shape_cast %126 : vector<1x64x384xf32> to vector<64x384xf32>
    %128 = vector.shape_cast %125 : vector<64x384xf32> to vector<1x64x384xf32>
    tpu.vector_store %arg6[%c0_36, %c0_37, %c0_38], %128 {strides = array<i32>} : memref<1x64x384xf32, #tpu.memory_space<vmem>>, vector<1x64x384xf32>,
    %c0_39 = arith.constant 0 : index
    %c0_40 = arith.constant 0 : index
    %129 = vector.load %arg3[%c0_39, %c0_40] : memref<384x384xbf16, #tpu.memory_space<vmem>>, vector<384x384xbf16>
    %cst_41 = arith.constant dense<0.000000e+00> : vector<64x384xf32>
    %130 = tpu.matmul %1, %129, %cst_41 {dimension_numbers = #tpu.dot_dimension_numbers<[1], [0], [0], [1], [0, 0, 1, 1], [], []>} : vector<64x384xbf16>, vector<384x384xbf16>, vector<64x384xf32> -> vector<64x384xf32>
    %c0_42 = arith.constant 0 : index
    %c0_43 = arith.constant 0 : index
    %131 = vector.load %arg4[%c0_42, %c0_43] : memref<1x384xf32, #tpu.memory_space<vmem>>, vector<1x384xf32>
    %132 = vector.broadcast %131 : vector<1x384xf32> to vector<64x384xf32>
    %133 = arith.addf %130, %132 : vector<64x384xf32>
    %c0_44 = arith.constant 0 : index
    %c0_45 = arith.constant 0 : index
    %c0_46 = arith.constant 0 : index
    %134 = vector.load %arg5[%c0_44, %c0_45, %c0_46] : memref<1x64x384xf32, #tpu.memory_space<vmem>>, vector<1x64x384xf32>
    %135 = vector.shape_cast %134 : vector<1x64x384xf32> to vector<64x384xf32>
    %136 = vector.shape_cast %133 : vector<64x384xf32> to vector<1x64x384xf32>
    tpu.vector_store %arg5[%c0_44, %c0_45, %c0_46], %136 {strides = array<i32>} : memref<1x64x384xf32, #tpu.memory_space<vmem>>, vector<1x64x384xf32>,
    return
  }
  func.func @transform_0(%arg0: i32) -> (i32, i32, i32) {
    %c0_i32 = arith.constant 0 : i32
    %c0_i32_0 = arith.constant 0 : i32
    %c0_i32_1 = arith.constant 0 : i32
    return %arg0, %c0_i32, %c0_i32_0 : i32, i32, i32
  }
  func.func @transform_1(%arg0: i32) -> (i32, i32) {
    %c0_i32 = arith.constant 0 : i32
    %c0_i32_0 = arith.constant 0 : i32
    %c0_i32_1 = arith.constant 0 : i32
    return %c0_i32, %c0_i32_0 : i32, i32
  }
  func.func @transform_2(%arg0: i32) -> (i32, i32) {
    %c0_i32 = arith.constant 0 : i32
    %c0_i32_0 = arith.constant 0 : i32
    %c0_i32_1 = arith.constant 0 : i32
    return %c0_i32, %c0_i32_0 : i32, i32
  }
  func.func @transform_3(%arg0: i32) -> (i32, i32) {
    %c0_i32 = arith.constant 0 : i32
    %c0_i32_0 = arith.constant 0 : i32
    %c0_i32_1 = arith.constant 0 : i32
    return %c0_i32, %c0_i32_0 : i32, i32
  }
  func.func @transform_4(%arg0: i32) -> (i32, i32, i32) {
    %c0_i32 = arith.constant 0 : i32
    %c0_i32_0 = arith.constant 0 : i32
    %c0_i32_1 = arith.constant 0 : i32
    return %arg0, %c0_i32, %c0_i32_0 : i32, i32, i32
  }
  func.func @transform_5(%arg0: i32) -> (i32, i32, i32) {
    %c0_i32 = arith.constant 0 : i32
    %c0_i32_0 = arith.constant 0 : i32
    %c0_i32_1 = arith.constant 0 : i32
    return %arg0, %c0_i32, %c0_i32_0 : i32, i32, i32
  }
}

</mosaic_0001>

<llo_original>
// kernel: tpu_custom_call.1
$region0: #{tpu_custom_call.1}
  #allocation0 [shape = 'u32[]', space=smem, size = 0x4, offset = 0x4, fixed_abs, tag = 'smem constant byte address 0x4 - core index']
  #allocation1 [shape = 'u32[72,128]{1,0:T(1,128)}', space=vmem, size = 0x9000, scoped, tag = 'internal scratch']
  %s0 = inlined_call_operand.hbm [shape: bf16[2,64,384], index: 0, kind: input, shape index: {}]
  %s1 = inlined_call_operand.hbm [shape: bf16[384,1152], index: 1, kind: input, shape index: {}]
  %s2 = inlined_call_operand.hbm [shape: bf16[384,384], index: 2, kind: input, shape index: {}]
  %s3 = inlined_call_operand.hbm [shape: f32[1,384], index: 3, kind: input, shape index: {}]
  %s4 = inlined_call_operand.hbm [shape: f32[2,64,384], index: 4, kind: output, shape index: {0}]
  %s5 = inlined_call_operand.hbm [shape: f32[2,64,384], index: 5, kind: output, shape index: {1}]
  %6 = xla_tuple %s4, %s5
  %s7 = sld [smem:[#allocation0]]
  $region73: #{tpu_custom_call.1} parent=0
    _
  %s9 = ssub.s32 1, %s7
  %s10 = scalar_select 0, %s9, %s7
  $region1: #{tpu_custom_call.1} parent=0
    #allocation2 [shape = 'u8[98304]{0}', space=vmem, size = 0x18000, scoped, tag = 'input window, operand 0']
    #allocation3 [shape = 's32[2]{0}', space=sflag, size = 0x8, scoped, tag = 'scoped memory for tpu_custom_call.1']
    #allocation4 [shape = 's32[2]{0}', space=sflag, size = 0x8, scoped, tag = 'scoped memory for tpu_custom_call.1']
    #allocation5 [shape = 'u8[884736]{0}', space=vmem, size = 0xd8000, scoped, tag = 'input window, operand 1, single buffered']
    #allocation6 [shape = 's32[1]{0}', space=sflag, size = 0x4, scoped, tag = 'scoped memory for tpu_custom_call.1']
    #allocation7 [shape = 'u8[294912]{0}', space=vmem, size = 0x48000, scoped, tag = 'input window, operand 2, single buffered']
    #allocation8 [shape = 'u8[1536]{0}', space=vmem, size = 0x800, scoped, tag = 'input window, operand 3, single buffered']
    #allocation9 [shape = 's32[1]{0}', space=sflag, size = 0x4, scoped, tag = 'scoped memory for tpu_custom_call.1']
    #allocation10 [shape = 'u8[196608]{0}', space=vmem, size = 0x30000, scoped, tag = 'output window, operand 0']
    #allocation11 [shape = 'u8[196608]{0}', space=vmem, size = 0x30000, scoped, tag = 'output window, operand 1']
    #allocation12 [shape = 's32[2]{0}', space=sflag, size = 0x8, scoped, tag = 'scoped memory for tpu_custom_call.1']
    %11 = vsyncpa [#allocation3], 0
    %s12 = scalar_lea.sflag [#allocation3], 1
    %13 = vsyncpa %s12, 0
    %14 = vsyncpa [#allocation6], 0
    %15 = vsyncpa [#allocation9], 0
    %16 = vsyncpa [#allocation4], 0
    %s17 = scalar_lea.sflag [#allocation4], 1
    %18 = vsyncpa %s17, 0
    %19 = vsyncpa [#allocation12], 0
    %s20 = scalar_lea.sflag [#allocation12], 1
    %21 = vsyncpa %s20, 0
    loop: start=0, step=1, limit=4
    $region2: #{tpu_custom_call.1} parent=1 // loop_pre_header
      _
    $region3: #{tpu_custom_call.1} parent=1 // loop_header
      %s23 = sphi 0, %s27
      %p24 = scmp.ge.s32.totalorder %s23, 4
      %s33 = sphi 0, %s35
      %s36 = sphi 0, %s33
      %s37 = sphi 0, %s36
      %s53 = sphi 0, %s37
      %s57 = sphi 0, %s57
      %s59 = sphi 0, %s57
      %s60 = sphi 0, %s59
      %s74 = sphi 0, %s60
      %s78 = sphi 0, %s78
      %s80 = sphi 0, %s78
      %s81 = sphi 0, %s80
      %s95 = sphi 0, %s81
      %s99 = sphi 0, %s99
      %s101 = sphi 0, %s99
      %s102 = sphi 0, %s101
      %s116 = sphi 0, %s102
      %s122 = sphi 0, %s124
      %s125 = sphi 0, %s122
      %s126 = sphi 0, %s125
      %s142 = sphi 0, %s126
      %s148 = sphi 0, %s150
      %s151 = sphi 0, %s148
      %s152 = sphi 0, %s151
      %s168 = sphi 0, %s152
    $region4: #{tpu_custom_call.1} parent=1 // loop_header_branch
      %26 = sbr.rel (%p24) target = $region8
    $region5: #{tpu_custom_call.1} parent=1 // loop_body
      %s28 = ssub.s32 %s23, 1
      %s29 = ssub.s32 %s23, 2
      %s30 = sadd.s32 %s23, 1
      %s31 = ssub.s32 %s23, %s30
      %p32 = scmp.eq.s32.totalorder %s31, 0
      %s34 = sadd.s32 %s33, 1
      %s35 = scalar_select %p32, %s33, %s34
      %p38 = pneg %p32
      %p39 = scmp.eq.s32.totalorder %s23, 1
      %p40 = por %p38, %p39
      %p41 = scmp.ne.s32.totalorder %s33, %s36
      %p42 = scmp.eq.s32.totalorder %s23, 0
      %p43 = por %p41, %p42
      %p44 = scmp.ne.s32.totalorder %s33, %s36
      %p45 = scmp.eq.s32.totalorder %s28, 1
      %p46 = por %p44, %p45
      %p47 = scmp.ne.s32.totalorder %s36, %s37
      %p48 = scmp.eq.s32.totalorder %s28, 0
      %p49 = por %p47, %p48
      %p50 = scmp.ne.s32.totalorder %s36, %s37
      %p51 = scmp.eq.s32.totalorder %s29, 1
      %p52 = por %p50, %p51
      %p54 = scmp.ne.s32.totalorder %s37, %s53
      %p55 = scmp.eq.s32.totalorder %s29, 0
      %p56 = por %p54, %p55
      %s58 = sadd.s32 %s57, 1
      %p61 = scmp.eq.s32.totalorder %s23, 1
      %p62 = scmp.ne.s32.totalorder %s57, %s59
      %p63 = scmp.eq.s32.totalorder %s23, 0
      %p64 = por %p62, %p63
      %p65 = scmp.ne.s32.totalorder %s57, %s59
      %p66 = scmp.eq.s32.totalorder %s28, 1
      %p67 = por %p65, %p66
      %p68 = scmp.ne.s32.totalorder %s59, %s60
      %p69 = scmp.eq.s32.totalorder %s28, 0
      %p70 = por %p68, %p69
      %p71 = scmp.ne.s32.totalorder %s59, %s60
      %p72 = scmp.eq.s32.totalorder %s29, 1
      %p73 = por %p71, %p72
      %p75 = scmp.ne.s32.totalorder %s60, %s74
      %p76 = scmp.eq.s32.totalorder %s29, 0
      %p77 = por %p75, %p76
      %s79 = sadd.s32 %s78, 1
      %p82 = scmp.eq.s32.totalorder %s23, 1
      %p83 = scmp.ne.s32.totalorder %s78, %s80
      %p84 = scmp.eq.s32.totalorder %s23, 0
      %p85 = por %p83, %p84
      %p86 = scmp.ne.s32.totalorder %s78, %s80
      %p87 = scmp.eq.s32.totalorder %s28, 1
      %p88 = por %p86, %p87
      %p89 = scmp.ne.s32.totalorder %s80, %s81
      %p90 = scmp.eq.s32.totalorder %s28, 0
      %p91 = por %p89, %p90
      %p92 = scmp.ne.s32.totalorder %s80, %s81
      %p93 = scmp.eq.s32.totalorder %s29, 1
      %p94 = por %p92, %p93
      %p96 = scmp.ne.s32.totalorder %s81, %s95
      %p97 = scmp.eq.s32.totalorder %s29, 0
      %p98 = por %p96, %p97
      %s100 = sadd.s32 %s99, 1
      %p103 = scmp.eq.s32.totalorder %s23, 1
      %p104 = scmp.ne.s32.totalorder %s99, %s101
      %p105 = scmp.eq.s32.totalorder %s23, 0
      %p106 = por %p104, %p105
      %p107 = scmp.ne.s32.totalorder %s99, %s101
      %p108 = scmp.eq.s32.totalorder %s28, 1
      %p109 = por %p107, %p108
      %p110 = scmp.ne.s32.totalorder %s101, %s102
      %p111 = scmp.eq.s32.totalorder %s28, 0
      %p112 = por %p110, %p111
      %p113 = scmp.ne.s32.totalorder %s101, %s102
      %p114 = scmp.eq.s32.totalorder %s29, 1
      %p115 = por %p113, %p114
      %p117 = scmp.ne.s32.totalorder %s102, %s116
      %p118 = scmp.eq.s32.totalorder %s29, 0
      %p119 = por %p117, %p118
      %s120 = ssub.s32 %s23, %s30
      %p121 = scmp.eq.s32.totalorder %s120, 0
      %s123 = sadd.s32 %s122, 1
      %s124 = scalar_select %p121, %s122, %s123
      %p127 = pneg %p121
      %p128 = scmp.eq.s32.totalorder %s23, 1
      %p129 = por %p127, %p128
      %p130 = scmp.ne.s32.totalorder %s122, %s125
      %p131 = scmp.eq.s32.totalorder %s23, 0
      %p132 = por %p130, %p131
      %p133 = scmp.ne.s32.totalorder %s122, %s125
      %p134 = scmp.eq.s32.totalorder %s28, 1
      %p135 = por %p133, %p134
      %p136 = scmp.ne.s32.totalorder %s125, %s126
      %p137 = scmp.eq.s32.totalorder %s28, 0
      %p138 = por %p136, %p137
      %p139 = scmp.ne.s32.totalorder %s125, %s126
      %p140 = scmp.eq.s32.totalorder %s29, 1
      %p141 = por %p139, %p140
      %p143 = scmp.ne.s32.totalorder %s126, %s142
      %p144 = scmp.eq.s32.totalorder %s29, 0
      %p145 = por %p143, %p144
      %s146 = ssub.s32 %s23, %s30
      %p147 = scmp.eq.s32.totalorder %s146, 0
      %s149 = sadd.s32 %s148, 1
      %s150 = scalar_select %p147, %s148, %s149
      %p153 = pneg %p147
      %p154 = scmp.eq.s32.totalorder %s23, 1
      %p155 = por %p153, %p154
      %p156 = scmp.ne.s32.totalorder %s148, %s151
      %p157 = scmp.eq.s32.totalorder %s23, 0
      %p158 = por %p156, %p157
      %p159 = scmp.ne.s32.totalorder %s148, %s151
      %p160 = scmp.eq.s32.totalorder %s28, 1
      %p161 = por %p159, %p160
      %p162 = scmp.ne.s32.totalorder %s151, %s152
      %p163 = scmp.eq.s32.totalorder %s28, 0
      %p164 = por %p162, %p163
      %p165 = scmp.ne.s32.totalorder %s151, %s152
      %p166 = scmp.eq.s32.totalorder %s29, 1
      %p167 = por %p165, %p166
      %p169 = scmp.ne.s32.totalorder %s152, %s168
      %p170 = scmp.eq.s32.totalorder %s29, 0
      %p171 = por %p169, %p170
      %p172 = scmp.le.s32.totalorder 1, %s23
      %p173 = scmp.lt.s32.totalorder %s23, 3
      %p174 = pnand %p172, %p173
      %p175 = pneg %p174
      // Predicated region
      $region9: #{tpu_custom_call.1} parent=5 // pred_check
        _
      $region10: #{tpu_custom_call.1} parent=5 // pred_check_branch
        %177 = sbr.rel (%p174) target = $region12
      $region11: #{tpu_custom_call.1} parent=5 // pred_region
        %s178 = ssub.s32 %s23, 1
        // Predicated region
        $region13: #{tpu_custom_call.1} parent=11 // pred_check
          %p179 = pneg %p70
        $region14: #{tpu_custom_call.1} parent=11 // pred_check_branch
          %181 = sbr.rel (%p179) target = $region16
        $region15: #{tpu_custom_call.1} parent=11 // pred_region
          %183 = vsyncadd [#allocation6], 0
          %s184 = sshll.u32 %s1, 4
          %s185 = int_to_ptr.hbm [resolvable:$true] %s184
          %s186 = sshll.u32 [#allocation5], 4
          %s187 = int_to_ptr.vmem [resolvable:$true] %s186
          %192 = dma.hbm_to_vmem [thread:$0]  %s185, 27648, %s187, [#allocation6], 576, 576, 36
        $region16: #{tpu_custom_call.1} parent=11 // pred_fallthru
          _
        // Predicated region
        $region17: #{tpu_custom_call.1} parent=11 // pred_check
          %p193 = pneg %p91
        $region18: #{tpu_custom_call.1} parent=11 // pred_check_branch
          %195 = sbr.rel (%p193) target = $region20
        $region19: #{tpu_custom_call.1} parent=11 // pred_region
          %197 = vsyncadd [#allocation6], 0
          %s198 = sshll.u32 %s2, 4
          %s199 = int_to_ptr.hbm [resolvable:$true] %s198
          %s200 = sshll.u32 [#allocation7], 4
          %s201 = int_to_ptr.vmem [resolvable:$true] %s200
          %206 = dma.hbm_to_vmem [thread:$0]  %s199, 9216, %s201, [#allocation6], 192, 192, 12
        $region20: #{tpu_custom_call.1} parent=11 // pred_fallthru
          _
        // Predicated region
        $region21: #{tpu_custom_call.1} parent=11 // pred_check
          %p207 = pneg %p112
        $region22: #{tpu_custom_call.1} parent=11 // pred_check_branch
          %209 = sbr.rel (%p207) target = $region24
        $region23: #{tpu_custom_call.1} parent=11 // pred_region
          %211 = vsyncadd [#allocation9], 0
          %s213 = sshll.u32 %s3, 4
          %s214 = int_to_ptr.hbm [resolvable:$true] %s213
          %s215 = sshll.u32 [#allocation8], 4
          %s216 = int_to_ptr.vmem [resolvable:$true] %s215
          %218 = dma.hbm_to_vmem [thread:$0]  %s214, 48, %s216, [#allocation9]
        $region24: #{tpu_custom_call.1} parent=11 // pred_fallthru
          _
      $region12: #{tpu_custom_call.1} parent=5 // pred_fallthru
        _
      %p219 = scmp.lt.s32.totalorder %s23, 2
      // Predicated region
      $region25: #{tpu_custom_call.1} parent=5 // pred_check
        %p220 = pneg %p219
      $region26: #{tpu_custom_call.1} parent=5 // pred_check_branch
        %222 = sbr.rel (%p220) target = $region28
      $region27: #{tpu_custom_call.1} parent=5 // pred_region
        // Predicated region
        $region29: #{tpu_custom_call.1} parent=27 // pred_check
          %p223 = pneg %p43
        $region30: #{tpu_custom_call.1} parent=27 // pred_check_branch
          %225 = sbr.rel (%p223) target = $region32
        $region31: #{tpu_custom_call.1} parent=27 // pred_region
          %s226 = sand.u32 %s33, 1
          %s227 = scalar_lea.sflag [#allocation3], %s226
          %s228 = sand.u32 %s33, 1
          %s229 = smul.addr %s228, 96
          %s230 = scalar_lea.vmem [#allocation2], %s229
          %232 = vsyncadd %s227, 0
          %s233 = smul.addr %s23, 24
          %s234 = smul.addr %s233, 4
          %s235 = scalar_lea.hbm %s0, %s234
          %s236 = sshll.u32 %s235, 4
          %s237 = int_to_ptr.hbm [resolvable:$true] %s236
          %s238 = sshll.u32 %s230, 4
          %s239 = int_to_ptr.vmem [resolvable:$true] %s238
          %244 = dma.hbm_to_vmem [thread:$0]  %s237, 1536, %s239, %s227, 192, 192, 12
        $region32: #{tpu_custom_call.1} parent=27 // pred_fallthru
          _
      $region28: #{tpu_custom_call.1} parent=5 // pred_fallthru
        _
      %p245 = scmp.le.s32.totalorder 1, %s23
      %p246 = scmp.lt.s32.totalorder %s23, 3
      %p247 = pnand %p245, %p246
      %p248 = pneg %p247
      // Predicated region
      $region33: #{tpu_custom_call.1} parent=5 // pred_check
        _
      $region34: #{tpu_custom_call.1} parent=5 // pred_check_branch
        %250 = sbr.rel (%p247) target = $region36
      $region35: #{tpu_custom_call.1} parent=5 // pred_region
        %s251 = ssub.s32 %s23, 1
        %s252 = sand.u32 %s36, 1
        %s253 = scalar_lea.sflag [#allocation3], %s252
        %s254 = sand.u32 %s36, 1
        %s255 = smul.addr %s254, 96
        %s256 = scalar_lea.vmem [#allocation2], %s255
        // Predicated region
        $region37: #{tpu_custom_call.1} parent=35 // pred_check
          %p257 = pneg %p49
        $region38: #{tpu_custom_call.1} parent=35 // pred_check_branch
          %259 = sbr.rel (%p257) target = $region40
        $region39: #{tpu_custom_call.1} parent=35 // pred_region
          %261 = dma.done %s253, 1536
        $region40: #{tpu_custom_call.1} parent=35 // pred_fallthru
          _
        // Predicated region
        $region41: #{tpu_custom_call.1} parent=35 // pred_check
          %p262 = pneg %p70
        $region42: #{tpu_custom_call.1} parent=35 // pred_check_branch
          %264 = sbr.rel (%p262) target = $region44
        $region43: #{tpu_custom_call.1} parent=35 // pred_region
          %266 = dma.done [#allocation6], 27648
        $region44: #{tpu_custom_call.1} parent=35 // pred_fallthru
          _
        // Predicated region
        $region45: #{tpu_custom_call.1} parent=35 // pred_check
          %p267 = pneg %p91
        $region46: #{tpu_custom_call.1} parent=35 // pred_check_branch
          %269 = sbr.rel (%p267) target = $region48
        $region47: #{tpu_custom_call.1} parent=35 // pred_region
          %271 = dma.done [#allocation6], 9216
        $region48: #{tpu_custom_call.1} parent=35 // pred_fallthru
          _
        // Predicated region
        $region49: #{tpu_custom_call.1} parent=35 // pred_check
          %p272 = pneg %p112
        $region50: #{tpu_custom_call.1} parent=35 // pred_check_branch
          %274 = sbr.rel (%p272) target = $region52
        $region51: #{tpu_custom_call.1} parent=35 // pred_region
          %276 = dma.done [#allocation9], 48
        $region52: #{tpu_custom_call.1} parent=35 // pred_fallthru
          _
        %s277 = sand.u32 %s36, 1
        %s278 = scalar_lea.sflag [#allocation3], %s277
        %s279 = sand.u32 %s36, 1
        %s280 = smul.addr %s279, 96
        %s281 = scalar_lea.vmem [#allocation2], %s280
        %p282 = pneg %p49
        %p283 = pneg %p46
        %p284 = pneg %p70
        %p285 = pneg %p67
        %p286 = pneg %p91
        %p287 = pneg %p88
        %p288 = pneg %p112
        %p289 = pneg %p109
        %p290 = pneg %p138
        %p291 = pneg %p135
        %s292 = sand.u32 %s125, 1
        %s293 = scalar_lea.sflag [#allocation4], %s292
        %s294 = sand.u32 %s125, 1
        %s295 = smul.addr %s294, 192
        %s296 = scalar_lea.vmem [#allocation10], %s295
        %p297 = pneg %p164
        %p298 = pneg %p161
        %s299 = sand.u32 %s151, 1
        %s300 = scalar_lea.sflag [#allocation12], %s299
        %s301 = sand.u32 %s151, 1
        %s302 = smul.addr %s301, 192
        %s303 = scalar_lea.vmem [#allocation11], %s302
        %v304 = vld [vmem:[%s256] sm:$0xff]
        %v305 = vld [vmem:[%s256 + $0x8] sm:$0xf]
        %v306 = vld [vmem:[%s256 + $0xc] sm:$0xff]
        %v307 = vld [vmem:[%s256 + $0x14] sm:$0xf]
        %v308 = vld [vmem:[%s256 + $0x18] sm:$0xff]
        %v309 = vld [vmem:[%s256 + $0x20] sm:$0xf]
        %v310 = vld [vmem:[%s256 + $0x24] sm:$0xff]
        %v311 = vld [vmem:[%s256 + $0x2c] sm:$0xf]
        %v312 = vld [vmem:[%s256 + $0x30] sm:$0xff]
        %v313 = vld [vmem:[%s256 + $0x38] sm:$0xf]
        %v314 = vld [vmem:[%s256 + $0x3c] sm:$0xff]
        %v315 = vld [vmem:[%s256 + $0x44] sm:$0xf]
        %v316 = vld [vmem:[%s256 + $0x48] sm:$0xff]
        %v317 = vld [vmem:[%s256 + $0x50] sm:$0xf]
        %v318 = vld [vmem:[%s256 + $0x54] sm:$0xff]
        %v319 = vld [vmem:[%s256 + $0x5c] sm:$0xf]
        %v320 = vld [vmem:[#allocation5] sm:$0xff]
        %v321 = vld [vmem:[#allocation5 + $0x8] sm:$0xff]
        %v322 = vld [vmem:[#allocation5 + $0x10] sm:$0xff]
        %v323 = vld [vmem:[#allocation5 + $0x18] sm:$0xff]
        %v324 = vld [vmem:[#allocation5 + $0x20] sm:$0xf]
        %v325 = vld [vmem:[#allocation5 + $0x24] sm:$0xff]
        %v326 = vld [vmem:[#allocation5 + $0x2c] sm:$0xff]
        %v327 = vld [vmem:[#allocation5 + $0x34] sm:$0xff]
        %v328 = vld [vmem:[#allocation5 + $0x3c] sm:$0xff]
        %v329 = vld [vmem:[#allocation5 + $0x44] sm:$0xf]
        %v330 = vld [vmem:[#allocation5 + $0x48] sm:$0xff]
        %v331 = vld [vmem:[#allocation5 + $0x50] sm:$0xff]
        %v332 = vld [vmem:[#allocation5 + $0x58] sm:$0xff]
        %v333 = vld [vmem:[#allocation5 + $0x60] sm:$0xff]
        %v334 = vld [vmem:[#allocation5 + $0x68] sm:$0xf]
        %v335 = vld [vmem:[#allocation5 + $0x6c] sm:$0xff]
        %v336 = vld [vmem:[#allocation5 + $0x74] sm:$0xff]
        %v337 = vld [vmem:[#allocation5 + $0x7c] sm:$0xff]
        %v338 = vld [vmem:[#allocation5 + $0x84] sm:$0xff]
        %v339 = vld [vmem:[#allocation5 + $0x8c] sm:$0xf]
        %v340 = vld [vmem:[#allocation5 + $0x90] sm:$0xff]
        %v341 = vld [vmem:[#allocation5 + $0x98] sm:$0xff]
        %v342 = vld [vmem:[#allocation5 + $0xa0] sm:$0xff]
        %v343 = vld [vmem:[#allocation5 + $0xa8] sm:$0xff]
        %v344 = vld [vmem:[#allocation5 + $0xb0] sm:$0xf]
        %v345 = vld [vmem:[#allocation5 + $0xb4] sm:$0xff]
        %v346 = vld [vmem:[#allocation5 + $0xbc] sm:$0xff]
        %v347 = vld [vmem:[#allocation5 + $0xc4] sm:$0xff]
        %v348 = vld [vmem:[#allocation5 + $0xcc] sm:$0xff]
        %v349 = vld [vmem:[#allocation5 + $0xd4] sm:$0xf]
        %v350 = vld [vmem:[#allocation5 + $0xd8] sm:$0xff]
        %v351 = vld [vmem:[#allocation5 + $0xe0] sm:$0xff]
        %v352 = vld [vmem:[#allocation5 + $0xe8] sm:$0xff]
        %v353 = vld [vmem:[#allocation5 + $0xf0] sm:$0xff]
        %v354 = vld [vmem:[#allocation5 + $0xf8] sm:$0xf]
        %v355 = vld [vmem:[#allocation5 + $0xfc] sm:$0xff]
        %v356 = vld [vmem:[#allocation5 + $0x104] sm:$0xff]
        %v357 = vld [vmem:[#allocation5 + $0x10c] sm:$0xff]
        %v358 = vld [vmem:[#allocation5 + $0x114] sm:$0xff]
        %v359 = vld [vmem:[#allocation5 + $0x11c] sm:$0xf]
        %v360 = vld [vmem:[#allocation5 + $0x120] sm:$0xff]
        %v361 = vld [vmem:[#allocation5 + $0x128] sm:$0xff]
        %v362 = vld [vmem:[#allocation5 + $0x130] sm:$0xff]
        %v363 = vld [vmem:[#allocation5 + $0x138] sm:$0xff]
        %v364 = vld [vmem:[#allocation5 + $0x140] sm:$0xf]
        %v365 = vld [vmem:[#allocation5 + $0x144] sm:$0xff]
        %v366 = vld [vmem:[#allocation5 + $0x14c] sm:$0xff]
        %v367 = vld [vmem:[#allocation5 + $0x154] sm:$0xff]
        %v368 = vld [vmem:[#allocation5 + $0x15c] sm:$0xff]
        %v369 = vld [vmem:[#allocation5 + $0x164] sm:$0xf]
        %v370 = vld [vmem:[#allocation5 + $0x168] sm:$0xff]
        %v371 = vld [vmem:[#allocation5 + $0x170] sm:$0xff]
        %v372 = vld [vmem:[#allocation5 + $0x178] sm:$0xff]
        %v373 = vld [vmem:[#allocation5 + $0x180] sm:$0xff]
        %v374 = vld [vmem:[#allocation5 + $0x188] sm:$0xf]
        %v375 = vld [vmem:[#allocation5 + $0x18c] sm:$0xff]
        %v376 = vld [vmem:[#allocation5 + $0x194] sm:$0xff]
        %v377 = vld [vmem:[#allocation5 + $0x19c] sm:$0xff]
        %v378 = vld [vmem:[#allocation5 + $0x1a4] sm:$0xff]
        %v379 = vld [vmem:[#allocation5 + $0x1ac] sm:$0xf]
        %v380 = vld [vmem:[#allocation5 + $0x1b0] sm:$0xff]
        %v381 = vld [vmem:[#allocation5 + $0x1b8] sm:$0xff]
        %v382 = vld [vmem:[#allocation5 + $0x1c0] sm:$0xff]
        %v383 = vld [vmem:[#allocation5 + $0x1c8] sm:$0xff]
        %v384 = vld [vmem:[#allocation5 + $0x1d0] sm:$0xf]
        %v385 = vld [vmem:[#allocation5 + $0x1d4] sm:$0xff]
        %v386 = vld [vmem:[#allocation5 + $0x1dc] sm:$0xff]
        %v387 = vld [vmem:[#allocation5 + $0x1e4] sm:$0xff]
        %v388 = vld [vmem:[#allocation5 + $0x1ec] sm:$0xff]
        %v389 = vld [vmem:[#allocation5 + $0x1f4] sm:$0xf]
        %v390 = vld [vmem:[#allocation5 + $0x1f8] sm:$0xff]
        %v391 = vld [vmem:[#allocation5 + $0x200] sm:$0xff]
        %v392 = vld [vmem:[#allocation5 + $0x208] sm:$0xff]
        %v393 = vld [vmem:[#allocation5 + $0x210] sm:$0xff]
        %v394 = vld [vmem:[#allocation5 + $0x218] sm:$0xf]
        %v395 = vld [vmem:[#allocation5 + $0x21c] sm:$0xff]
        %v396 = vld [vmem:[#allocation5 + $0x224] sm:$0xff]
        %v397 = vld [vmem:[#allocation5 + $0x22c] sm:$0xff]
        %v398 = vld [vmem:[#allocation5 + $0x234] sm:$0xff]
        %v399 = vld [vmem:[#allocation5 + $0x23c] sm:$0xf]
        %v400 = vld [vmem:[#allocation5 + $0x240] sm:$0xff]
        %v401 = vld [vmem:[#allocation5 + $0x248] sm:$0xff]
        %v402 = vld [vmem:[#allocation5 + $0x250] sm:$0xff]
        %v403 = vld [vmem:[#allocation5 + $0x258] sm:$0xff]
        %v404 = vld [vmem:[#allocation5 + $0x260] sm:$0xf]
        %v405 = vld [vmem:[#allocation5 + $0x264] sm:$0xff]
        %v406 = vld [vmem:[#allocation5 + $0x26c] sm:$0xff]
        %v407 = vld [vmem:[#allocation5 + $0x274] sm:$0xff]
        %v408 = vld [vmem:[#allocation5 + $0x27c] sm:$0xff]
        %v409 = vld [vmem:[#allocation5 + $0x284] sm:$0xf]
        %v410 = vld [vmem:[#allocation5 + $0x288] sm:$0xff]
        %v411 = vld [vmem:[#allocation5 + $0x290] sm:$0xff]
        %v412 = vld [vmem:[#allocation5 + $0x298] sm:$0xff]
        %v413 = vld [vmem:[#allocation5 + $0x2a0] sm:$0xff]
        %v414 = vld [vmem:[#allocation5 + $0x2a8] sm:$0xf]
        %v415 = vld [vmem:[#allocation5 + $0x2ac] sm:$0xff]
        %v416 = vld [vmem:[#allocation5 + $0x2b4] sm:$0xff]
        %v417 = vld [vmem:[#allocation5 + $0x2bc] sm:$0xff]
        %v418 = vld [vmem:[#allocation5 + $0x2c4] sm:$0xff]
        %v419 = vld [vmem:[#allocation5 + $0x2cc] sm:$0xf]
        %v420 = vld [vmem:[#allocation5 + $0x2d0] sm:$0xff]
        %v421 = vld [vmem:[#allocation5 + $0x2d8] sm:$0xff]
        %v422 = vld [vmem:[#allocation5 + $0x2e0] sm:$0xff]
        %v423 = vld [vmem:[#allocation5 + $0x2e8] sm:$0xff]
        %v424 = vld [vmem:[#allocation5 + $0x2f0] sm:$0xf]
        %v425 = vld [vmem:[#allocation5 + $0x2f4] sm:$0xff]
        %v426 = vld [vmem:[#allocation5 + $0x2fc] sm:$0xff]
        %v427 = vld [vmem:[#allocation5 + $0x304] sm:$0xff]
        %v428 = vld [vmem:[#allocation5 + $0x30c] sm:$0xff]
        %v429 = vld [vmem:[#allocation5 + $0x314] sm:$0xf]
        %v430 = vld [vmem:[#allocation5 + $0x318] sm:$0xff]
        %v431 = vld [vmem:[#allocation5 + $0x320] sm:$0xff]
        %v432 = vld [vmem:[#allocation5 + $0x328] sm:$0xff]
        %v433 = vld [vmem:[#allocation5 + $0x330] sm:$0xff]
        %v434 = vld [vmem:[#allocation5 + $0x338] sm:$0xf]
        %v435 = vld [vmem:[#allocation5 + $0x33c] sm:$0xff]
        %v436 = vld [vmem:[#allocation5 + $0x344] sm:$0xff]
        %v437 = vld [vmem:[#allocation5 + $0x34c] sm:$0xff]
        %v438 = vld [vmem:[#allocation5 + $0x354] sm:$0xff]
        %v439 = vld [vmem:[#allocation5 + $0x35c] sm:$0xf]
        %v440 = vld [vmem:[#allocation5 + $0x360] sm:$0xff]
        %v441 = vld [vmem:[#allocation5 + $0x368] sm:$0xff]
        %v442 = vld [vmem:[#allocation5 + $0x370] sm:$0xff]
        %v443 = vld [vmem:[#allocation5 + $0x378] sm:$0xff]
        %v444 = vld [vmem:[#allocation5 + $0x380] sm:$0xf]
        %v445 = vld [vmem:[#allocation5 + $0x384] sm:$0xff]
        %v446 = vld [vmem:[#allocation5 + $0x38c] sm:$0xff]
        %v447 = vld [vmem:[#allocation5 + $0x394] sm:$0xff]
        %v448 = vld [vmem:[#allocation5 + $0x39c] sm:$0xff]
        %v449 = vld [vmem:[#allocation5 + $0x3a4] sm:$0xf]
        %v450 = vld [vmem:[#allocation5 + $0x3a8] sm:$0xff]
        %v451 = vld [vmem:[#allocation5 + $0x3b0] sm:$0xff]
        %v452 = vld [vmem:[#allocation5 + $0x3b8] sm:$0xff]
        %v453 = vld [vmem:[#allocation5 + $0x3c0] sm:$0xff]
        %v454 = vld [vmem:[#allocation5 + $0x3c8] sm:$0xf]
        %v455 = vld [vmem:[#allocation5 + $0x3cc] sm:$0xff]
        %v456 = vld [vmem:[#allocation5 + $0x3d4] sm:$0xff]
        %v457 = vld [vmem:[#allocation5 + $0x3dc] sm:$0xff]
        %v458 = vld [vmem:[#allocation5 + $0x3e4] sm:$0xff]
        %v459 = vld [vmem:[#allocation5 + $0x3ec] sm:$0xf]
        %v460 = vld [vmem:[#allocation5 + $0x3f0] sm:$0xff]
        %v461 = vld [vmem:[#allocation5 + $0x3f8] sm:$0xff]
        %v462 = vld [vmem:[#allocation5 + $0x400] sm:$0xff]
        %v463 = vld [vmem:[#allocation5 + $0x408] sm:$0xff]
        %v464 = vld [vmem:[#allocation5 + $0x410] sm:$0xf]
        %v465 = vld [vmem:[#allocation5 + $0x414] sm:$0xff]
        %v466 = vld [vmem:[#allocation5 + $0x41c] sm:$0xff]
        %v467 = vld [vmem:[#allocation5 + $0x424] sm:$0xff]
        %v468 = vld [vmem:[#allocation5 + $0x42c] sm:$0xff]
        %v469 = vld [vmem:[#allocation5 + $0x434] sm:$0xf]
        %v470 = vld [vmem:[#allocation5 + $0x438] sm:$0xff]
        %v471 = vld [vmem:[#allocation5 + $0x440] sm:$0xff]
        %v472 = vld [vmem:[#allocation5 + $0x448] sm:$0xff]
        %v473 = vld [vmem:[#allocation5 + $0x450] sm:$0xff]
        %v474 = vld [vmem:[#allocation5 + $0x458] sm:$0xf]
        %v475 = vld [vmem:[#allocation5 + $0x45c] sm:$0xff]
        %v476 = vld [vmem:[#allocation5 + $0x464] sm:$0xff]
        %v477 = vld [vmem:[#allocation5 + $0x46c] sm:$0xff]
        %v478 = vld [vmem:[#allocation5 + $0x474] sm:$0xff]
        %v479 = vld [vmem:[#allocation5 + $0x47c] sm:$0xf]
        %v480 = vld [vmem:[#allocation5 + $0x480] sm:$0xff]
        %v481 = vld [vmem:[#allocation5 + $0x488] sm:$0xff]
        %v482 = vld [vmem:[#allocation5 + $0x490] sm:$0xff]
        %v483 = vld [vmem:[#allocation5 + $0x498] sm:$0xff]
        %v484 = vld [vmem:[#allocation5 + $0x4a0] sm:$0xf]
        %v485 = vld [vmem:[#allocation5 + $0x4a4] sm:$0xff]
        %v486 = vld [vmem:[#allocation5 + $0x4ac] sm:$0xff]
        %v487 = vld [vmem:[#allocation5 + $0x4b4] sm:$0xff]
        %v488 = vld [vmem:[#allocation5 + $0x4bc] sm:$0xff]
        %v489 = vld [vmem:[#allocation5 + $0x4c4] sm:$0xf]
        %v490 = vld [vmem:[#allocation5 + $0x4c8] sm:$0xff]
        %v491 = vld [vmem:[#allocation5 + $0x4d0] sm:$0xff]
        %v492 = vld [vmem:[#allocation5 + $0x4d8] sm:$0xff]
        %v493 = vld [vmem:[#allocation5 + $0x4e0] sm:$0xff]
        %v494 = vld [vmem:[#allocation5 + $0x4e8] sm:$0xf]
        %v495 = vld [vmem:[#allocation5 + $0x4ec] sm:$0xff]
        %v496 = vld [vmem:[#allocation5 + $0x4f4] sm:$0xff]
        %v497 = vld [vmem:[#allocation5 + $0x4fc] sm:$0xff]
        %v498 = vld [vmem:[#allocation5 + $0x504] sm:$0xff]
        %v499 = vld [vmem:[#allocation5 + $0x50c] sm:$0xf]
        %v500 = vld [vmem:[#allocation5 + $0x510] sm:$0xff]
        %v501 = vld [vmem:[#allocation5 + $0x518] sm:$0xff]
        %v502 = vld [vmem:[#allocation5 + $0x520] sm:$0xff]
        %v503 = vld [vmem:[#allocation5 + $0x528] sm:$0xff]
        %v504 = vld [vmem:[#allocation5 + $0x530] sm:$0xf]
        %v505 = vld [vmem:[#allocation5 + $0x534] sm:$0xff]
        %v506 = vld [vmem:[#allocation5 + $0x53c] sm:$0xff]
        %v507 = vld [vmem:[#allocation5 + $0x544] sm:$0xff]
        %v508 = vld [vmem:[#allocation5 + $0x54c] sm:$0xff]
        %v509 = vld [vmem:[#allocation5 + $0x554] sm:$0xf]
        %v510 = vld [vmem:[#allocation5 + $0x558] sm:$0xff]
        %v511 = vld [vmem:[#allocation5 + $0x560] sm:$0xff]
        %v512 = vld [vmem:[#allocation5 + $0x568] sm:$0xff]
        %v513 = vld [vmem:[#allocation5 + $0x570] sm:$0xff]
        %v514 = vld [vmem:[#allocation5 + $0x578] sm:$0xf]
        %v515 = vld [vmem:[#allocation5 + $0x57c] sm:$0xff]
        %v516 = vld [vmem:[#allocation5 + $0x584] sm:$0xff]
        %v517 = vld [vmem:[#allocation5 + $0x58c] sm:$0xff]
        %v518 = vld [vmem:[#allocation5 + $0x594] sm:$0xff]
        %v519 = vld [vmem:[#allocation5 + $0x59c] sm:$0xf]
        %v520 = vld [vmem:[#allocation5 + $0x5a0] sm:$0xff]
        %v521 = vld [vmem:[#allocation5 + $0x5a8] sm:$0xff]
        %v522 = vld [vmem:[#allocation5 + $0x5b0] sm:$0xff]
        %v523 = vld [vmem:[#allocation5 + $0x5b8] sm:$0xff]
        %v524 = vld [vmem:[#allocation5 + $0x5c0] sm:$0xf]
        %v525 = vld [vmem:[#allocation5 + $0x5c4] sm:$0xff]
        %v526 = vld [vmem:[#allocation5 + $0x5cc] sm:$0xff]
        %v527 = vld [vmem:[#allocation5 + $0x5d4] sm:$0xff]
        %v528 = vld [vmem:[#allocation5 + $0x5dc] sm:$0xff]
        %v529 = vld [vmem:[#allocation5 + $0x5e4] sm:$0xf]
        %v530 = vld [vmem:[#allocation5 + $0x5e8] sm:$0xff]
        %v531 = vld [vmem:[#allocation5 + $0x5f0] sm:$0xff]
        %v532 = vld [vmem:[#allocation5 + $0x5f8] sm:$0xff]
        %v533 = vld [vmem:[#allocation5 + $0x600] sm:$0xff]
        %v534 = vld [vmem:[#allocation5 + $0x608] sm:$0xf]
        %v535 = vld [vmem:[#allocation5 + $0x60c] sm:$0xff]
        %v536 = vld [vmem:[#allocation5 + $0x614] sm:$0xff]
        %v537 = vld [vmem:[#allocation5 + $0x61c] sm:$0xff]
        %v538 = vld [vmem:[#allocation5 + $0x624] sm:$0xff]
        %v539 = vld [vmem:[#allocation5 + $0x62c] sm:$0xf]
        %v540 = vld [vmem:[#allocation5 + $0x630] sm:$0xff]
        %v541 = vld [vmem:[#allocation5 + $0x638] sm:$0xff]
        %v542 = vld [vmem:[#allocation5 + $0x640] sm:$0xff]
        %v543 = vld [vmem:[#allocation5 + $0x648] sm:$0xff]
        %v544 = vld [vmem:[#allocation5 + $0x650] sm:$0xf]
        %v545 = vld [vmem:[#allocation5 + $0x654] sm:$0xff]
        %v546 = vld [vmem:[#allocation5 + $0x65c] sm:$0xff]
        %v547 = vld [vmem:[#allocation5 + $0x664] sm:$0xff]
        %v548 = vld [vmem:[#allocation5 + $0x66c] sm:$0xff]
        %v549 = vld [vmem:[#allocation5 + $0x674] sm:$0xf]
        %v550 = vld [vmem:[#allocation5 + $0x678] sm:$0xff]
        %v551 = vld [vmem:[#allocation5 + $0x680] sm:$0xff]
        %v552 = vld [vmem:[#allocation5 + $0x688] sm:$0xff]
        %v553 = vld [vmem:[#allocation5 + $0x690] sm:$0xff]
        %v554 = vld [vmem:[#allocation5 + $0x698] sm:$0xf]
        %v555 = vld [vmem:[#allocation5 + $0x69c] sm:$0xff]
        %v556 = vld [vmem:[#allocation5 + $0x6a4] sm:$0xff]
        %v557 = vld [vmem:[#allocation5 + $0x6ac] sm:$0xff]
        %v558 = vld [vmem:[#allocation5 + $0x6b4] sm:$0xff]
        %v559 = vld [vmem:[#allocation5 + $0x6bc] sm:$0xf]
        %v576 = vunpack.c.l.b16 %v304
        %v577 = vunpack.c.h.b16 %v304
        %v578 = vunpack.c.l.b16 %v305
        %v579 = vunpack.c.l.b16 %v306
        %v580 = vunpack.c.h.b16 %v306
        %v581 = vunpack.c.l.b16 %v307
        %v582 = vunpack.c.l.b16 %v308
        %v583 = vunpack.c.h.b16 %v308
        %v584 = vunpack.c.l.b16 %v309
        %v585 = vunpack.c.l.b16 %v310
        %v586 = vunpack.c.h.b16 %v310
        %v587 = vunpack.c.l.b16 %v311
        %v588 = vunpack.c.l.b16 %v312
        %v589 = vunpack.c.h.b16 %v312
        %v590 = vunpack.c.l.b16 %v313
        %v591 = vunpack.c.l.b16 %v314
        %v592 = vunpack.c.h.b16 %v314
        %v593 = vunpack.c.l.b16 %v315
        %v594 = vunpack.c.l.b16 %v316
        %v595 = vunpack.c.h.b16 %v316
        %v596 = vunpack.c.l.b16 %v317
        %v597 = vunpack.c.l.b16 %v318
        %v598 = vunpack.c.h.b16 %v318
        %v599 = vunpack.c.l.b16 %v319
        %v600 = vpack.c.b16 %v579, %v576
        %v601 = vpack.c.b16 %v580, %v577
        %v602 = vpack.c.b16 %v581, %v578
        %v603 = vpack.c.b16 %v585, %v582
        %v604 = vpack.c.b16 %v586, %v583
        %v605 = vpack.c.b16 %v587, %v584
        %v606 = vpack.c.b16 %v591, %v588
        %v607 = vpack.c.b16 %v592, %v589
        %v608 = vpack.c.b16 %v593, %v590
        %v609 = vpack.c.b16 %v597, %v594
        %v610 = vpack.c.b16 %v598, %v595
        %v611 = vpack.c.b16 %v599, %v596
        %v864 = vunpack.c.l.b16 %v320
        %v865 = vunpack.c.h.b16 %v320
        %v866 = vunpack.c.l.b16 %v321
        %v867 = vunpack.c.h.b16 %v321
        %v868 = vunpack.c.l.b16 %v322
        %v869 = vunpack.c.h.b16 %v322
        %v870 = vunpack.c.l.b16 %v323
        %v871 = vunpack.c.h.b16 %v323
        %v872 = vunpack.c.l.b16 %v324
        %v873 = vunpack.c.l.b16 %v325
        %v874 = vunpack.c.h.b16 %v325
        %v875 = vunpack.c.l.b16 %v326
        %v876 = vunpack.c.h.b16 %v326
        %v877 = vunpack.c.l.b16 %v327
        %v878 = vunpack.c.h.b16 %v327
        %v879 = vunpack.c.l.b16 %v328
        %v880 = vunpack.c.h.b16 %v328
        %v881 = vunpack.c.l.b16 %v329
        %v882 = vunpack.c.l.b16 %v330
        %v883 = vunpack.c.h.b16 %v330
        %v884 = vunpack.c.l.b16 %v331
        %v885 = vunpack.c.h.b16 %v331
        %v886 = vunpack.c.l.b16 %v332
        %v887 = vunpack.c.h.b16 %v332
        %v888 = vunpack.c.l.b16 %v333
        %v889 = vunpack.c.h.b16 %v333
        %v890 = vunpack.c.l.b16 %v334
        %v891 = vunpack.c.l.b16 %v335
        %v892 = vunpack.c.h.b16 %v335
        %v893 = vunpack.c.l.b16 %v336
        %v894 = vunpack.c.h.b16 %v336
        %v895 = vunpack.c.l.b16 %v337
        %v896 = vunpack.c.h.b16 %v337
        %v897 = vunpack.c.l.b16 %v338
        %v898 = vunpack.c.h.b16 %v338
        %v899 = vunpack.c.l.b16 %v339
        %v900 = vunpack.c.l.b16 %v340
        %v901 = vunpack.c.h.b16 %v340
        %v902 = vunpack.c.l.b16 %v341
        %v903 = vunpack.c.h.b16 %v341
        %v904 = vunpack.c.l.b16 %v342
        %v905 = vunpack.c.h.b16 %v342
        %v906 = vunpack.c.l.b16 %v343
        %v907 = vunpack.c.h.b16 %v343
        %v908 = vunpack.c.l.b16 %v344
        %v909 = vunpack.c.l.b16 %v345
        %v910 = vunpack.c.h.b16 %v345
        %v911 = vunpack.c.l.b16 %v346
        %v912 = vunpack.c.h.b16 %v346
        %v913 = vunpack.c.l.b16 %v347
        %v914 = vunpack.c.h.b16 %v347
        %v915 = vunpack.c.l.b16 %v348
        %v916 = vunpack.c.h.b16 %v348
        %v917 = vunpack.c.l.b16 %v349
        %v918 = vunpack.c.l.b16 %v350
        %v919 = vunpack.c.h.b16 %v350
        %v920 = vunpack.c.l.b16 %v351
        %v921 = vunpack.c.h.b16 %v351
        %v922 = vunpack.c.l.b16 %v352
        %v923 = vunpack.c.h.b16 %v352
        %v924 = vunpack.c.l.b16 %v353
        %v925 = vunpack.c.h.b16 %v353
        %v926 = vunpack.c.l.b16 %v354
        %v927 = vunpack.c.l.b16 %v355
        %v928 = vunpack.c.h.b16 %v355
        %v929 = vunpack.c.l.b16 %v356
        %v930 = vunpack.c.h.b16 %v356
        %v931 = vunpack.c.l.b16 %v357
        %v932 = vunpack.c.h.b16 %v357
        %v933 = vunpack.c.l.b16 %v358
        %v934 = vunpack.c.h.b16 %v358
        %v935 = vunpack.c.l.b16 %v359
        %v936 = vunpack.c.l.b16 %v360
        %v937 = vunpack.c.h.b16 %v360
        %v938 = vunpack.c.l.b16 %v361
        %v939 = vunpack.c.h.b16 %v361
        %v940 = vunpack.c.l.b16 %v362
        %v941 = vunpack.c.h.b16 %v362
        %v942 = vunpack.c.l.b16 %v363
        %v943 = vunpack.c.h.b16 %v363
        %v944 = vunpack.c.l.b16 %v364
        %v945 = vunpack.c.l.b16 %v365
        %v946 = vunpack.c.h.b16 %v365
        %v947 = vunpack.c.l.b16 %v366
        %v948 = vunpack.c.h.b16 %v366
        %v949 = vunpack.c.l.b16 %v367
        %v950 = vunpack.c.h.b16 %v367
        %v951 = vunpack.c.l.b16 %v368
        %v952 = vunpack.c.h.b16 %v368
        %v953 = vunpack.c.l.b16 %v369
        %v954 = vunpack.c.l.b16 %v370
        %v955 = vunpack.c.h.b16 %v370
        %v956 = vunpack.c.l.b16 %v371
        %v957 = vunpack.c.h.b16 %v371
        %v958 = vunpack.c.l.b16 %v372
        %v959 = vunpack.c.h.b16 %v372
        %v960 = vunpack.c.l.b16 %v373
        %v961 = vunpack.c.h.b16 %v373
        %v962 = vunpack.c.l.b16 %v374
        %v963 = vunpack.c.l.b16 %v375
        %v964 = vunpack.c.h.b16 %v375
        %v965 = vunpack.c.l.b16 %v376
        %v966 = vunpack.c.h.b16 %v376
        %v967 = vunpack.c.l.b16 %v377
        %v968 = vunpack.c.h.b16 %v377
        %v969 = vunpack.c.l.b16 %v378
        %v970 = vunpack.c.h.b16 %v378
        %v971 = vunpack.c.l.b16 %v379
        %v972 = vunpack.c.l.b16 %v380
        %v973 = vunpack.c.h.b16 %v380
        %v974 = vunpack.c.l.b16 %v381
        %v975 = vunpack.c.h.b16 %v381
        %v976 = vunpack.c.l.b16 %v382
        %v977 = vunpack.c.h.b16 %v382
        %v978 = vunpack.c.l.b16 %v383
        %v979 = vunpack.c.h.b16 %v383
        %v980 = vunpack.c.l.b16 %v384
        %v981 = vunpack.c.l.b16 %v385
        %v982 = vunpack.c.h.b16 %v385
        %v983 = vunpack.c.l.b16 %v386
        %v984 = vunpack.c.h.b16 %v386
        %v985 = vunpack.c.l.b16 %v387
        %v986 = vunpack.c.h.b16 %v387
        %v987 = vunpack.c.l.b16 %v388
        %v988 = vunpack.c.h.b16 %v388
        %v989 = vunpack.c.l.b16 %v389
        %v990 = vunpack.c.l.b16 %v390
        %v991 = vunpack.c.h.b16 %v390
        %v992 = vunpack.c.l.b16 %v391
        %v993 = vunpack.c.h.b16 %v391
        %v994 = vunpack.c.l.b16 %v392
        %v995 = vunpack.c.h.b16 %v392
        %v996 = vunpack.c.l.b16 %v393
        %v997 = vunpack.c.h.b16 %v393
        %v998 = vunpack.c.l.b16 %v394
        %v999 = vunpack.c.l.b16 %v395
        %v1000 = vunpack.c.h.b16 %v395
        %v1001 = vunpack.c.l.b16 %v396
        %v1002 = vunpack.c.h.b16 %v396
        %v1003 = vunpack.c.l.b16 %v397
        %v1004 = vunpack.c.h.b16 %v397
        %v1005 = vunpack.c.l.b16 %v398
        %v1006 = vunpack.c.h.b16 %v398
        %v1007 = vunpack.c.l.b16 %v399
        %v1008 = vunpack.c.l.b16 %v400
        %v1009 = vunpack.c.h.b16 %v400
        %v1010 = vunpack.c.l.b16 %v401
        %v1011 = vunpack.c.h.b16 %v401
        %v1012 = vunpack.c.l.b16 %v402
        %v1013 = vunpack.c.h.b16 %v402
        %v1014 = vunpack.c.l.b16 %v403
        %v1015 = vunpack.c.h.b16 %v403
        %v1016 = vunpack.c.l.b16 %v404
        %v1017 = vunpack.c.l.b16 %v405
        %v1018 = vunpack.c.h.b16 %v405
        %v1019 = vunpack.c.l.b16 %v406
        %v1020 = vunpack.c.h.b16 %v406
        %v1021 = vunpack.c.l.b16 %v407
        %v1022 = vunpack.c.h.b16 %v407
        %v1023 = vunpack.c.l.b16 %v408
        %v1024 = vunpack.c.h.b16 %v408
        %v1025 = vunpack.c.l.b16 %v409
        %v1026 = vunpack.c.l.b16 %v410
        %v1027 = vunpack.c.h.b16 %v410
        %v1028 = vunpack.c.l.b16 %v411
        %v1029 = vunpack.c.h.b16 %v411
        %v1030 = vunpack.c.l.b16 %v412
        %v1031 = vunpack.c.h.b16 %v412
        %v1032 = vunpack.c.l.b16 %v413
        %v1033 = vunpack.c.h.b16 %v413
        %v1034 = vunpack.c.l.b16 %v414
        %v1035 = vunpack.c.l.b16 %v415
        %v1036 = vunpack.c.h.b16 %v415
        %v1037 = vunpack.c.l.b16 %v416
        %v1038 = vunpack.c.h.b16 %v416
        %v1039 = vunpack.c.l.b16 %v417
        %v1040 = vunpack.c.h.b16 %v417
        %v1041 = vunpack.c.l.b16 %v418
        %v1042 = vunpack.c.h.b16 %v418
        %v1043 = vunpack.c.l.b16 %v419
        %v1044 = vunpack.c.l.b16 %v420
        %v1045 = vunpack.c.h.b16 %v420
        %v1046 = vunpack.c.l.b16 %v421
        %v1047 = vunpack.c.h.b16 %v421
        %v1048 = vunpack.c.l.b16 %v422
        %v1049 = vunpack.c.h.b16 %v422
        %v1050 = vunpack.c.l.b16 %v423
        %v1051 = vunpack.c.h.b16 %v423
        %v1052 = vunpack.c.l.b16 %v424
        %v1053 = vunpack.c.l.b16 %v425
        %v1054 = vunpack.c.h.b16 %v425
        %v1055 = vunpack.c.l.b16 %v426
        %v1056 = vunpack.c.h.b16 %v426
        %v1057 = vunpack.c.l.b16 %v427
        %v1058 = vunpack.c.h.b16 %v427
        %v1059 = vunpack.c.l.b16 %v428
        %v1060 = vunpack.c.h.b16 %v428
        %v1061 = vunpack.c.l.b16 %v429
        %v1062 = vunpack.c.l.b16 %v430
        %v1063 = vunpack.c.h.b16 %v430
        %v1064 = vunpack.c.l.b16 %v431
        %v1065 = vunpack.c.h.b16 %v431
        %v1066 = vunpack.c.l.b16 %v432
        %v1067 = vunpack.c.h.b16 %v432
        %v1068 = vunpack.c.l.b16 %v433
        %v1069 = vunpack.c.h.b16 %v433
        %v1070 = vunpack.c.l.b16 %v434
        %v1071 = vunpack.c.l.b16 %v435
        %v1072 = vunpack.c.h.b16 %v435
        %v1073 = vunpack.c.l.b16 %v436
        %v1074 = vunpack.c.h.b16 %v436
        %v1075 = vunpack.c.l.b16 %v437
        %v1076 = vunpack.c.h.b16 %v437
        %v1077 = vunpack.c.l.b16 %v438
        %v1078 = vunpack.c.h.b16 %v438
        %v1079 = vunpack.c.l.b16 %v439
        %v1080 = vunpack.c.l.b16 %v440
        %v1081 = vunpack.c.h.b16 %v440
        %v1082 = vunpack.c.l.b16 %v441
        %v1083 = vunpack.c.h.b16 %v441
        %v1084 = vunpack.c.l.b16 %v442
        %v1085 = vunpack.c.h.b16 %v442
        %v1086 = vunpack.c.l.b16 %v443
        %v1087 = vunpack.c.h.b16 %v443
        %v1088 = vunpack.c.l.b16 %v444
        %v1089 = vunpack.c.l.b16 %v445
        %v1090 = vunpack.c.h.b16 %v445
        %v1091 = vunpack.c.l.b16 %v446
        %v1092 = vunpack.c.h.b16 %v446
        %v1093 = vunpack.c.l.b16 %v447
        %v1094 = vunpack.c.h.b16 %v447
        %v1095 = vunpack.c.l.b16 %v448
        %v1096 = vunpack.c.h.b16 %v448
        %v1097 = vunpack.c.l.b16 %v449
        %v1098 = vunpack.c.l.b16 %v450
        %v1099 = vunpack.c.h.b16 %v450
        %v1100 = vunpack.c.l.b16 %v451
        %v1101 = vunpack.c.h.b16 %v451
        %v1102 = vunpack.c.l.b16 %v452
        %v1103 = vunpack.c.h.b16 %v452
        %v1104 = vunpack.c.l.b16 %v453
        %v1105 = vunpack.c.h.b16 %v453
        %v1106 = vunpack.c.l.b16 %v454
        %v1107 = vunpack.c.l.b16 %v455
        %v1108 = vunpack.c.h.b16 %v455
        %v1109 = vunpack.c.l.b16 %v456
        %v1110 = vunpack.c.h.b16 %v456
        %v1111 = vunpack.c.l.b16 %v457
        %v1112 = vunpack.c.h.b16 %v457
        %v1113 = vunpack.c.l.b16 %v458
        %v1114 = vunpack.c.h.b16 %v458
        %v1115 = vunpack.c.l.b16 %v459
        %v1116 = vunpack.c.l.b16 %v460
        %v1117 = vunpack.c.h.b16 %v460
        %v1118 = vunpack.c.l.b16 %v461
        %v1119 = vunpack.c.h.b16 %v461
        %v1120 = vunpack.c.l.b16 %v462
        %v1121 = vunpack.c.h.b16 %v462
        %v1122 = vunpack.c.l.b16 %v463
        %v1123 = vunpack.c.h.b16 %v463
        %v1124 = vunpack.c.l.b16 %v464
        %v1125 = vunpack.c.l.b16 %v465
        %v1126 = vunpack.c.h.b16 %v465
        %v1127 = vunpack.c.l.b16 %v466
        %v1128 = vunpack.c.h.b16 %v466
        %v1129 = vunpack.c.l.b16 %v467
        %v1130 = vunpack.c.h.b16 %v467
        %v1131 = vunpack.c.l.b16 %v468
        %v1132 = vunpack.c.h.b16 %v468
        %v1133 = vunpack.c.l.b16 %v469
        %v1134 = vunpack.c.l.b16 %v470
        %v1135 = vunpack.c.h.b16 %v470
        %v1136 = vunpack.c.l.b16 %v471
        %v1137 = vunpack.c.h.b16 %v471
        %v1138 = vunpack.c.l.b16 %v472
        %v1139 = vunpack.c.h.b16 %v472
        %v1140 = vunpack.c.l.b16 %v473
        %v1141 = vunpack.c.h.b16 %v473
        %v1142 = vunpack.c.l.b16 %v474
        %v1143 = vunpack.c.l.b16 %v475
        %v1144 = vunpack.c.h.b16 %v475
        %v1145 = vunpack.c.l.b16 %v476
        %v1146 = vunpack.c.h.b16 %v476
        %v1147 = vunpack.c.l.b16 %v477
        %v1148 = vunpack.c.h.b16 %v477
        %v1149 = vunpack.c.l.b16 %v478
        %v1150 = vunpack.c.h.b16 %v478
        %v1151 = vunpack.c.l.b16 %v479
        %v1152 = vunpack.c.l.b16 %v480
        %v1153 = vunpack.c.h.b16 %v480
        %v1154 = vunpack.c.l.b16 %v481
        %v1155 = vunpack.c.h.b16 %v481
        %v1156 = vunpack.c.l.b16 %v482
        %v1157 = vunpack.c.h.b16 %v482
        %v1158 = vunpack.c.l.b16 %v483
        %v1159 = vunpack.c.h.b16 %v483
        %v1160 = vunpack.c.l.b16 %v484
        %v1161 = vunpack.c.l.b16 %v485
        %v1162 = vunpack.c.h.b16 %v485
        %v1163 = vunpack.c.l.b16 %v486
        %v1164 = vunpack.c.h.b16 %v486
        %v1165 = vunpack.c.l.b16 %v487
        %v1166 = vunpack.c.h.b16 %v487
        %v1167 = vunpack.c.l.b16 %v488
        %v1168 = vunpack.c.h.b16 %v488
        %v1169 = vunpack.c.l.b16 %v489
        %v1170 = vunpack.c.l.b16 %v490
        %v1171 = vunpack.c.h.b16 %v490
        %v1172 = vunpack.c.l.b16 %v491
        %v1173 = vunpack.c.h.b16 %v491
        %v1174 = vunpack.c.l.b16 %v492
        %v1175 = vunpack.c.h.b16 %v492
        %v1176 = vunpack.c.l.b16 %v493
        %v1177 = vunpack.c.h.b16 %v493
        %v1178 = vunpack.c.l.b16 %v494
        %v1179 = vunpack.c.l.b16 %v495
        %v1180 = vunpack.c.h.b16 %v495
        %v1181 = vunpack.c.l.b16 %v496
        %v1182 = vunpack.c.h.b16 %v496
        %v1183 = vunpack.c.l.b16 %v497
        %v1184 = vunpack.c.h.b16 %v497
        %v1185 = vunpack.c.l.b16 %v498
        %v1186 = vunpack.c.h.b16 %v498
        %v1187 = vunpack.c.l.b16 %v499
        %v1188 = vunpack.c.l.b16 %v500
        %v1189 = vunpack.c.h.b16 %v500
        %v1190 = vunpack.c.l.b16 %v501
        %v1191 = vunpack.c.h.b16 %v501
        %v1192 = vunpack.c.l.b16 %v502
        %v1193 = vunpack.c.h.b16 %v502
        %v1194 = vunpack.c.l.b16 %v503
        %v1195 = vunpack.c.h.b16 %v503
        %v1196 = vunpack.c.l.b16 %v504
        %v1197 = vunpack.c.l.b16 %v505
        %v1198 = vunpack.c.h.b16 %v505
        %v1199 = vunpack.c.l.b16 %v506
        %v1200 = vunpack.c.h.b16 %v506
        %v1201 = vunpack.c.l.b16 %v507
        %v1202 = vunpack.c.h.b16 %v507
        %v1203 = vunpack.c.l.b16 %v508
        %v1204 = vunpack.c.h.b16 %v508
        %v1205 = vunpack.c.l.b16 %v509
        %v1206 = vunpack.c.l.b16 %v510
        %v1207 = vunpack.c.h.b16 %v510
        %v1208 = vunpack.c.l.b16 %v511
        %v1209 = vunpack.c.h.b16 %v511
        %v1210 = vunpack.c.l.b16 %v512
        %v1211 = vunpack.c.h.b16 %v512
        %v1212 = vunpack.c.l.b16 %v513
        %v1213 = vunpack.c.h.b16 %v513
        %v1214 = vunpack.c.l.b16 %v514
        %v1215 = vunpack.c.l.b16 %v515
        %v1216 = vunpack.c.h.b16 %v515
        %v1217 = vunpack.c.l.b16 %v516
        %v1218 = vunpack.c.h.b16 %v516
        %v1219 = vunpack.c.l.b16 %v517
        %v1220 = vunpack.c.h.b16 %v517
        %v1221 = vunpack.c.l.b16 %v518
        %v1222 = vunpack.c.h.b16 %v518
        %v1223 = vunpack.c.l.b16 %v519
        %v1224 = vunpack.c.l.b16 %v520
        %v1225 = vunpack.c.h.b16 %v520
        %v1226 = vunpack.c.l.b16 %v521
        %v1227 = vunpack.c.h.b16 %v521
        %v1228 = vunpack.c.l.b16 %v522
        %v1229 = vunpack.c.h.b16 %v522
        %v1230 = vunpack.c.l.b16 %v523
        %v1231 = vunpack.c.h.b16 %v523
        %v1232 = vunpack.c.l.b16 %v524
        %v1233 = vunpack.c.l.b16 %v525
        %v1234 = vunpack.c.h.b16 %v525
        %v1235 = vunpack.c.l.b16 %v526
        %v1236 = vunpack.c.h.b16 %v526
        %v1237 = vunpack.c.l.b16 %v527
        %v1238 = vunpack.c.h.b16 %v527
        %v1239 = vunpack.c.l.b16 %v528
        %v1240 = vunpack.c.h.b16 %v528
        %v1241 = vunpack.c.l.b16 %v529
        %v1242 = vunpack.c.l.b16 %v530
        %v1243 = vunpack.c.h.b16 %v530
        %v1244 = vunpack.c.l.b16 %v531
        %v1245 = vunpack.c.h.b16 %v531
        %v1246 = vunpack.c.l.b16 %v532
        %v1247 = vunpack.c.h.b16 %v532
        %v1248 = vunpack.c.l.b16 %v533
        %v1249 = vunpack.c.h.b16 %v533
        %v1250 = vunpack.c.l.b16 %v534
        %v1251 = vunpack.c.l.b16 %v535
        %v1252 = vunpack.c.h.b16 %v535
        %v1253 = vunpack.c.l.b16 %v536
        %v1254 = vunpack.c.h.b16 %v536
        %v1255 = vunpack.c.l.b16 %v537
        %v1256 = vunpack.c.h.b16 %v537
        %v1257 = vunpack.c.l.b16 %v538
        %v1258 = vunpack.c.h.b16 %v538
        %v1259 = vunpack.c.l.b16 %v539
        %v1260 = vunpack.c.l.b16 %v540
        %v1261 = vunpack.c.h.b16 %v540
        %v1262 = vunpack.c.l.b16 %v541
        %v1263 = vunpack.c.h.b16 %v541
        %v1264 = vunpack.c.l.b16 %v542
        %v1265 = vunpack.c.h.b16 %v542
        %v1266 = vunpack.c.l.b16 %v543
        %v1267 = vunpack.c.h.b16 %v543
        %v1268 = vunpack.c.l.b16 %v544
        %v1269 = vunpack.c.l.b16 %v545
        %v1270 = vunpack.c.h.b16 %v545
        %v1271 = vunpack.c.l.b16 %v546
        %v1272 = vunpack.c.h.b16 %v546
        %v1273 = vunpack.c.l.b16 %v547
        %v1274 = vunpack.c.h.b16 %v547
        %v1275 = vunpack.c.l.b16 %v548
        %v1276 = vunpack.c.h.b16 %v548
        %v1277 = vunpack.c.l.b16 %v549
        %v1278 = vunpack.c.l.b16 %v550
        %v1279 = vunpack.c.h.b16 %v550
        %v1280 = vunpack.c.l.b16 %v551
        %v1281 = vunpack.c.h.b16 %v551
        %v1282 = vunpack.c.l.b16 %v552
        %v1283 = vunpack.c.h.b16 %v552
        %v1284 = vunpack.c.l.b16 %v553
        %v1285 = vunpack.c.h.b16 %v553
        %v1286 = vunpack.c.l.b16 %v554
        %v1287 = vunpack.c.l.b16 %v555
        %v1288 = vunpack.c.h.b16 %v555
        %v1289 = vunpack.c.l.b16 %v556
        %v1290 = vunpack.c.h.b16 %v556
        %v1291 = vunpack.c.l.b16 %v557
        %v1292 = vunpack.c.h.b16 %v557
        %v1293 = vunpack.c.l.b16 %v558
        %v1294 = vunpack.c.h.b16 %v558
        %v1295 = vunpack.c.l.b16 %v559
        %v1296 = vpack.c.b16 %v873, %v864
        %v1297 = vpack.c.b16 %v874, %v865
        %v1298 = vpack.c.b16 %v875, %v866
        %v1299 = vpack.c.b16 %v876, %v867
        %v1300 = vpack.c.b16 %v877, %v868
        %v1301 = vpack.c.b16 %v878, %v869
        %v1302 = vpack.c.b16 %v879, %v870
        %v1303 = vpack.c.b16 %v880, %v871
        %v1304 = vpack.c.b16 %v881, %v872
        %v1305 = vpack.c.b16 %v891, %v882
        %v1306 = vpack.c.b16 %v892, %v883
        %v1307 = vpack.c.b16 %v893, %v884
        %v1308 = vpack.c.b16 %v894, %v885
        %v1309 = vpack.c.b16 %v895, %v886
        %v1310 = vpack.c.b16 %v896, %v887
        %v1311 = vpack.c.b16 %v897, %v888
        %v1312 = vpack.c.b16 %v898, %v889
        %v1313 = vpack.c.b16 %v899, %v890
        %v1314 = vpack.c.b16 %v909, %v900
        %v1315 = vpack.c.b16 %v910, %v901
        %v1316 = vpack.c.b16 %v911, %v902
        %v1317 = vpack.c.b16 %v912, %v903
        %v1318 = vpack.c.b16 %v913, %v904
        %v1319 = vpack.c.b16 %v914, %v905
        %v1320 = vpack.c.b16 %v915, %v906
        %v1321 = vpack.c.b16 %v916, %v907
        %v1322 = vpack.c.b16 %v917, %v908
        %v1323 = vpack.c.b16 %v927, %v918
        %v1324 = vpack.c.b16 %v928, %v919
        %v1325 = vpack.c.b16 %v929, %v920
        %v1326 = vpack.c.b16 %v930, %v921
        %v1327 = vpack.c.b16 %v931, %v922
        %v1328 = vpack.c.b16 %v932, %v923
        %v1329 = vpack.c.b16 %v933, %v924
        %v1330 = vpack.c.b16 %v934, %v925
        %v1331 = vpack.c.b16 %v935, %v926
        %v1332 = vpack.c.b16 %v945, %v936
        %v1333 = vpack.c.b16 %v946, %v937
        %v1334 = vpack.c.b16 %v947, %v938
        %v1335 = vpack.c.b16 %v948, %v939
        %v1336 = vpack.c.b16 %v949, %v940
        %v1337 = vpack.c.b16 %v950, %v941
        %v1338 = vpack.c.b16 %v951, %v942
        %v1339 = vpack.c.b16 %v952, %v943
        %v1340 = vpack.c.b16 %v953, %v944
        %v1341 = vpack.c.b16 %v963, %v954
        %v1342 = vpack.c.b16 %v964, %v955
        %v1343 = vpack.c.b16 %v965, %v956
        %v1344 = vpack.c.b16 %v966, %v957
        %v1345 = vpack.c.b16 %v967, %v958
        %v1346 = vpack.c.b16 %v968, %v959
        %v1347 = vpack.c.b16 %v969, %v960
        %v1348 = vpack.c.b16 %v970, %v961
        %v1349 = vpack.c.b16 %v971, %v962
        %v1350 = vpack.c.b16 %v981, %v972
        %v1351 = vpack.c.b16 %v982, %v973
        %v1352 = vpack.c.b16 %v983, %v974
        %v1353 = vpack.c.b16 %v984, %v975
        %v1354 = vpack.c.b16 %v985, %v976
        %v1355 = vpack.c.b16 %v986, %v977
        %v1356 = vpack.c.b16 %v987, %v978
        %v1357 = vpack.c.b16 %v988, %v979
        %v1358 = vpack.c.b16 %v989, %v980
        %v1359 = vpack.c.b16 %v999, %v990
        %v1360 = vpack.c.b16 %v1000, %v991
        %v1361 = vpack.c.b16 %v1001, %v992
        %v1362 = vpack.c.b16 %v1002, %v993
        %v1363 = vpack.c.b16 %v1003, %v994
        %v1364 = vpack.c.b16 %v1004, %v995
        %v1365 = vpack.c.b16 %v1005, %v996
        %v1366 = vpack.c.b16 %v1006, %v997
        %v1367 = vpack.c.b16 %v1007, %v998
        %v1368 = vpack.c.b16 %v1017, %v1008
        %v1369 = vpack.c.b16 %v1018, %v1009
        %v1370 = vpack.c.b16 %v1019, %v1010
        %v1371 = vpack.c.b16 %v1020, %v1011
        %v1372 = vpack.c.b16 %v1021, %v1012
        %v1373 = vpack.c.b16 %v1022, %v1013
        %v1374 = vpack.c.b16 %v1023, %v1014
        %v1375 = vpack.c.b16 %v1024, %v1015
        %v1376 = vpack.c.b16 %v1025, %v1016
        %v1377 = vpack.c.b16 %v1035, %v1026
        %v1378 = vpack.c.b16 %v1036, %v1027
        %v1379 = vpack.c.b16 %v1037, %v1028
        %v1380 = vpack.c.b16 %v1038, %v1029
        %v1381 = vpack.c.b16 %v1039, %v1030
        %v1382 = vpack.c.b16 %v1040, %v1031
        %v1383 = vpack.c.b16 %v1041, %v1032
        %v1384 = vpack.c.b16 %v1042, %v1033
        %v1385 = vpack.c.b16 %v1043, %v1034
        %v1386 = vpack.c.b16 %v1053, %v1044
        %v1387 = vpack.c.b16 %v1054, %v1045
        %v1388 = vpack.c.b16 %v1055, %v1046
        %v1389 = vpack.c.b16 %v1056, %v1047
        %v1390 = vpack.c.b16 %v1057, %v1048
        %v1391 = vpack.c.b16 %v1058, %v1049
        %v1392 = vpack.c.b16 %v1059, %v1050
        %v1393 = vpack.c.b16 %v1060, %v1051
        %v1394 = vpack.c.b16 %v1061, %v1052
        %v1395 = vpack.c.b16 %v1071, %v1062
        %v1396 = vpack.c.b16 %v1072, %v1063
        %v1397 = vpack.c.b16 %v1073, %v1064
        %v1398 = vpack.c.b16 %v1074, %v1065
        %v1399 = vpack.c.b16 %v1075, %v1066
        %v1400 = vpack.c.b16 %v1076, %v1067
        %v1401 = vpack.c.b16 %v1077, %v1068
        %v1402 = vpack.c.b16 %v1078, %v1069
        %v1403 = vpack.c.b16 %v1079, %v1070
        %v1404 = vpack.c.b16 %v1089, %v1080
        %v1405 = vpack.c.b16 %v1090, %v1081
        %v1406 = vpack.c.b16 %v1091, %v1082
        %v1407 = vpack.c.b16 %v1092, %v1083
        %v1408 = vpack.c.b16 %v1093, %v1084
        %v1409 = vpack.c.b16 %v1094, %v1085
        %v1410 = vpack.c.b16 %v1095, %v1086
        %v1411 = vpack.c.b16 %v1096, %v1087
        %v1412 = vpack.c.b16 %v1097, %v1088
        %v1413 = vpack.c.b16 %v1107, %v1098
        %v1414 = vpack.c.b16 %v1108, %v1099
        %v1415 = vpack.c.b16 %v1109, %v1100
        %v1416 = vpack.c.b16 %v1110, %v1101
        %v1417 = vpack.c.b16 %v1111, %v1102
        %v1418 = vpack.c.b16 %v1112, %v1103
        %v1419 = vpack.c.b16 %v1113, %v1104
        %v1420 = vpack.c.b16 %v1114, %v1105
        %v1421 = vpack.c.b16 %v1115, %v1106
        %v1422 = vpack.c.b16 %v1125, %v1116
        %v1423 = vpack.c.b16 %v1126, %v1117
        %v1424 = vpack.c.b16 %v1127, %v1118
        %v1425 = vpack.c.b16 %v1128, %v1119
        %v1426 = vpack.c.b16 %v1129, %v1120
        %v1427 = vpack.c.b16 %v1130, %v1121
        %v1428 = vpack.c.b16 %v1131, %v1122
        %v1429 = vpack.c.b16 %v1132, %v1123
        %v1430 = vpack.c.b16 %v1133, %v1124
        %v1431 = vpack.c.b16 %v1143, %v1134
        %v1432 = vpack.c.b16 %v1144, %v1135
        %v1433 = vpack.c.b16 %v1145, %v1136
        %v1434 = vpack.c.b16 %v1146, %v1137
        %v1435 = vpack.c.b16 %v1147, %v1138
        %v1436 = vpack.c.b16 %v1148, %v1139
        %v1437 = vpack.c.b16 %v1149, %v1140
        %v1438 = vpack.c.b16 %v1150, %v1141
        %v1439 = vpack.c.b16 %v1151, %v1142
        %v1440 = vpack.c.b16 %v1161, %v1152
        %v1441 = vpack.c.b16 %v1162, %v1153
        %v1442 = vpack.c.b16 %v1163, %v1154
        %v1443 = vpack.c.b16 %v1164, %v1155
        %v1444 = vpack.c.b16 %v1165, %v1156
        %v1445 = vpack.c.b16 %v1166, %v1157
        %v1446 = vpack.c.b16 %v1167, %v1158
        %v1447 = vpack.c.b16 %v1168, %v1159
        %v1448 = vpack.c.b16 %v1169, %v1160
        %v1449 = vpack.c.b16 %v1179, %v1170
        %v1450 = vpack.c.b16 %v1180, %v1171
        %v1451 = vpack.c.b16 %v1181, %v1172
        %v1452 = vpack.c.b16 %v1182, %v1173
        %v1453 = vpack.c.b16 %v1183, %v1174
        %v1454 = vpack.c.b16 %v1184, %v1175
        %v1455 = vpack.c.b16 %v1185, %v1176
        %v1456 = vpack.c.b16 %v1186, %v1177
        %v1457 = vpack.c.b16 %v1187, %v1178
        %v1458 = vpack.c.b16 %v1197, %v1188
        %v1459 = vpack.c.b16 %v1198, %v1189
        %v1460 = vpack.c.b16 %v1199, %v1190
        %v1461 = vpack.c.b16 %v1200, %v1191
        %v1462 = vpack.c.b16 %v1201, %v1192
        %v1463 = vpack.c.b16 %v1202, %v1193
        %v1464 = vpack.c.b16 %v1203, %v1194
        %v1465 = vpack.c.b16 %v1204, %v1195
        %v1466 = vpack.c.b16 %v1205, %v1196
        %v1467 = vpack.c.b16 %v1215, %v1206
        %v1468 = vpack.c.b16 %v1216, %v1207
        %v1469 = vpack.c.b16 %v1217, %v1208
        %v1470 = vpack.c.b16 %v1218, %v1209
        %v1471 = vpack.c.b16 %v1219, %v1210
        %v1472 = vpack.c.b16 %v1220, %v1211
        %v1473 = vpack.c.b16 %v1221, %v1212
        %v1474 = vpack.c.b16 %v1222, %v1213
        %v1475 = vpack.c.b16 %v1223, %v1214
        %v1476 = vpack.c.b16 %v1233, %v1224
        %v1477 = vpack.c.b16 %v1234, %v1225
        %v1478 = vpack.c.b16 %v1235, %v1226
        %v1479 = vpack.c.b16 %v1236, %v1227
        %v1480 = vpack.c.b16 %v1237, %v1228
        %v1481 = vpack.c.b16 %v1238, %v1229
        %v1482 = vpack.c.b16 %v1239, %v1230
        %v1483 = vpack.c.b16 %v1240, %v1231
        %v1484 = vpack.c.b16 %v1241, %v1232
        %v1485 = vpack.c.b16 %v1251, %v1242
        %v1486 = vpack.c.b16 %v1252, %v1243
        %v1487 = vpack.c.b16 %v1253, %v1244
        %v1488 = vpack.c.b16 %v1254, %v1245
        %v1489 = vpack.c.b16 %v1255, %v1246
        %v1490 = vpack.c.b16 %v1256, %v1247
        %v1491 = vpack.c.b16 %v1257, %v1248
        %v1492 = vpack.c.b16 %v1258, %v1249
        %v1493 = vpack.c.b16 %v1259, %v1250
        %v1494 = vpack.c.b16 %v1269, %v1260
        %v1495 = vpack.c.b16 %v1270, %v1261
        %v1496 = vpack.c.b16 %v1271, %v1262
        %v1497 = vpack.c.b16 %v1272, %v1263
        %v1498 = vpack.c.b16 %v1273, %v1264
        %v1499 = vpack.c.b16 %v1274, %v1265
        %v1500 = vpack.c.b16 %v1275, %v1266
        %v1501 = vpack.c.b16 %v1276, %v1267
        %v1502 = vpack.c.b16 %v1277, %v1268
        %v1503 = vpack.c.b16 %v1287, %v1278
        %v1504 = vpack.c.b16 %v1288, %v1279
        %v1505 = vpack.c.b16 %v1289, %v1280
        %v1506 = vpack.c.b16 %v1290, %v1281
        %v1507 = vpack.c.b16 %v1291, %v1282
        %v1508 = vpack.c.b16 %v1292, %v1283
        %v1509 = vpack.c.b16 %v1293, %v1284
        %v1510 = vpack.c.b16 %v1294, %v1285
        %v1511 = vpack.c.b16 %v1295, %v1286
        %1728 = vmatpush.bf16.msra.mxu0 %v1359
        %1729 = vmatpush.bf16.msra.mxu0 %v1350
        %1730 = vmatpush.bf16.msra.mxu0 %v1341
        %1731 = vmatpush.bf16.msra.mxu0 %v1332
        %1732 = vmatpush.bf16.msra.mxu0 %v1323
        %1733 = vmatpush.bf16.msra.mxu0 %v1314
        %1734 = vmatpush.bf16.msra.mxu0 %v1305
        %1735 = vmatpush.bf16.msra.mxu0 %v1296
        %1736 = vmatmul.bf16.gmra.mxu0 %v600
        %v1737 = vpop.f32.mrf.mxu0
        %v1738 = vadd.f32 0.0, %v1737
        %v1739 = vpop.f32.mrf.mxu0
        %v1740 = vadd.f32 0.0, %v1739
        %1741 = vmatmul.bf16.gmra.mxu0 %v603
        %v1742 = vpop.f32.mrf.mxu0
        %v1743 = vadd.f32 0.0, %v1742
        %v1744 = vpop.f32.mrf.mxu0
        %v1745 = vadd.f32 0.0, %v1744
        %1746 = vmatmul.bf16.gmra.mxu0 %v606
        %v1747 = vpop.f32.mrf.mxu0
        %v1748 = vadd.f32 0.0, %v1747
        %v1749 = vpop.f32.mrf.mxu0
        %v1750 = vadd.f32 0.0, %v1749
        %1751 = vmatmul.bf16.gmra.mxu0 %v609
        %v1752 = vpop.f32.mrf.mxu0
        %v1753 = vadd.f32 0.0, %v1752
        %v1754 = vpop.f32.mrf.mxu0
        %v1755 = vadd.f32 0.0, %v1754
        %1756 = vdwg.mxu0
        %1757 = vmatpush.bf16.msra.mxu0 %v1431
        %1758 = vmatpush.bf16.msra.mxu0 %v1422
        %1759 = vmatpush.bf16.msra.mxu0 %v1413
        %1760 = vmatpush.bf16.msra.mxu0 %v1404
        %1761 = vmatpush.bf16.msra.mxu0 %v1395
        %1762 = vmatpush.bf16.msra.mxu0 %v1386
        %1763 = vmatpush.bf16.msra.mxu0 %v1377
        %1764 = vmatpush.bf16.msra.mxu0 %v1368
        %1765 = vmatmul.bf16.gmra.mxu0 %v601
        %v1766 = vpop.f32.mrf.mxu0
        %v1767 = vadd.f32 %v1738, %v1766
        %v1768 = vpop.f32.mrf.mxu0
        %v1769 = vadd.f32 %v1740, %v1768
        %1770 = vmatmul.bf16.gmra.mxu0 %v604
        %v1771 = vpop.f32.mrf.mxu0
        %v1772 = vadd.f32 %v1743, %v1771
        %v1773 = vpop.f32.mrf.mxu0
        %v1774 = vadd.f32 %v1745, %v1773
        %1775 = vmatmul.bf16.gmra.mxu0 %v607
        %v1776 = vpop.f32.mrf.mxu0
        %v1777 = vadd.f32 %v1748, %v1776
        %v1778 = vpop.f32.mrf.mxu0
        %v1779 = vadd.f32 %v1750, %v1778
        %1780 = vmatmul.bf16.gmra.mxu0 %v610
        %v1781 = vpop.f32.mrf.mxu0
        %v1782 = vadd.f32 %v1753, %v1781
        %v1783 = vpop.f32.mrf.mxu0
        %v1784 = vadd.f32 %v1755, %v1783
        %1785 = vdwg.mxu0
        %1786 = vmatpush.bf16.msra.mxu0 %v1503
        %1787 = vmatpush.bf16.msra.mxu0 %v1494
        %1788 = vmatpush.bf16.msra.mxu0 %v1485
        %1789 = vmatpush.bf16.msra.mxu0 %v1476
        %1790 = vmatpush.bf16.msra.mxu0 %v1467
        %1791 = vmatpush.bf16.msra.mxu0 %v1458
        %1792 = vmatpush.bf16.msra.mxu0 %v1449
        %1793 = vmatpush.bf16.msra.mxu0 %v1440
        %1794 = vmatmul.bf16.gmra.mxu0 %v602
        %v1795 = vpop.f32.mrf.mxu0
        %v1796 = vadd.f32 %v1767, %v1795
        %v1797 = vpop.f32.mrf.mxu0
        %v1798 = vadd.f32 %v1769, %v1797
        %1799 = vmatmul.bf16.gmra.mxu0 %v605
        %v1800 = vpop.f32.mrf.mxu0
        %v1801 = vadd.f32 %v1772, %v1800
        %v1802 = vpop.f32.mrf.mxu0
        %v1803 = vadd.f32 %v1774, %v1802
        %1804 = vmatmul.bf16.gmra.mxu0 %v608
        %v1805 = vpop.f32.mrf.mxu0
        %v1806 = vadd.f32 %v1777, %v1805
        %v1807 = vpop.f32.mrf.mxu0
        %v1808 = vadd.f32 %v1779, %v1807
        %1809 = vmatmul.bf16.gmra.mxu0 %v611
        %v1810 = vpop.f32.mrf.mxu0
        %v1811 = vadd.f32 %v1782, %v1810
        %v1812 = vpop.f32.mrf.mxu0
        %v1813 = vadd.f32 %v1784, %v1812
        %1814 = vdwg.mxu0
        %1815 = vmatpush.bf16.msra.mxu0 %v1360
        %1816 = vmatpush.bf16.msra.mxu0 %v1351
        %1817 = vmatpush.bf16.msra.mxu0 %v1342
        %1818 = vmatpush.bf16.msra.mxu0 %v1333
        %1819 = vmatpush.bf16.msra.mxu0 %v1324
        %1820 = vmatpush.bf16.msra.mxu0 %v1315
        %1821 = vmatpush.bf16.msra.mxu0 %v1306
        %1822 = vmatpush.bf16.msra.mxu0 %v1297
        %1823 = vmatmul.bf16.gmra.mxu0 %v600
        %v1824 = vpop.f32.mrf.mxu0
        %v1825 = vadd.f32 0.0, %v1824
        %v1826 = vpop.f32.mrf.mxu0
        %v1827 = vadd.f32 0.0, %v1826
        %1828 = vmatmul.bf16.gmra.mxu0 %v603
        %v1829 = vpop.f32.mrf.mxu0
        %v1830 = vadd.f32 0.0, %v1829
        %v1831 = vpop.f32.mrf.mxu0
        %v1832 = vadd.f32 0.0, %v1831
        %1833 = vmatmul.bf16.gmra.mxu0 %v606
        %v1834 = vpop.f32.mrf.mxu0
        %v1835 = vadd.f32 0.0, %v1834
        %v1836 = vpop.f32.mrf.mxu0
        %v1837 = vadd.f32 0.0, %v1836
        %1838 = vmatmul.bf16.gmra.mxu0 %v609
        %v1839 = vpop.f32.mrf.mxu0
        %v1840 = vadd.f32 0.0, %v1839
        %v1841 = vpop.f32.mrf.mxu0
        %v1842 = vadd.f32 0.0, %v1841
        %1843 = vdwg.mxu0
        %1844 = vmatpush.bf16.msra.mxu0 %v1432
        %1845 = vmatpush.bf16.msra.mxu0 %v1423
        %1846 = vmatpush.bf16.msra.mxu0 %v1414
        %1847 = vmatpush.bf16.msra.mxu0 %v1405
        %1848 = vmatpush.bf16.msra.mxu0 %v1396
        %1849 = vmatpush.bf16.msra.mxu0 %v1387
        %1850 = vmatpush.bf16.msra.mxu0 %v1378
        %1851 = vmatpush.bf16.msra.mxu0 %v1369
        %1852 = vmatmul.bf16.gmra.mxu0 %v601
        %v1853 = vpop.f32.mrf.mxu0
        %v1854 = vadd.f32 %v1825, %v1853
        %v1855 = vpop.f32.mrf.mxu0
        %v1856 = vadd.f32 %v1827, %v1855
        %1857 = vmatmul.bf16.gmra.mxu0 %v604
        %v1858 = vpop.f32.mrf.mxu0
        %v1859 = vadd.f32 %v1830, %v1858
        %v1860 = vpop.f32.mrf.mxu0
        %v1861 = vadd.f32 %v1832, %v1860
        %1862 = vmatmul.bf16.gmra.mxu0 %v607
        %v1863 = vpop.f32.mrf.mxu0
        %v1864 = vadd.f32 %v1835, %v1863
        %v1865 = vpop.f32.mrf.mxu0
        %v1866 = vadd.f32 %v1837, %v1865
        %1867 = vmatmul.bf16.gmra.mxu0 %v610
        %v1868 = vpop.f32.mrf.mxu0
        %v1869 = vadd.f32 %v1840, %v1868
        %v1870 = vpop.f32.mrf.mxu0
        %v1871 = vadd.f32 %v1842, %v1870
        %1872 = vdwg.mxu0
        %1873 = vmatpush.bf16.msra.mxu0 %v1504
        %1874 = vmatpush.bf16.msra.mxu0 %v1495
        %1875 = vmatpush.bf16.msra.mxu0 %v1486
        %1876 = vmatpush.bf16.msra.mxu0 %v1477
        %1877 = vmatpush.bf16.msra.mxu0 %v1468
        %1878 = vmatpush.bf16.msra.mxu0 %v1459
        %1879 = vmatpush.bf16.msra.mxu0 %v1450
        %1880 = vmatpush.bf16.msra.mxu0 %v1441
        %1881 = vmatmul.bf16.gmra.mxu0 %v602
        %v1882 = vpop.f32.mrf.mxu0
        %v1883 = vadd.f32 %v1854, %v1882
        %v1884 = vpop.f32.mrf.mxu0
        %v1885 = vadd.f32 %v1856, %v1884
        %1886 = vmatmul.bf16.gmra.mxu0 %v605
        %v1887 = vpop.f32.mrf.mxu0
        %v1888 = vadd.f32 %v1859, %v1887
        %v1889 = vpop.f32.mrf.mxu0
        %v1890 = vadd.f32 %v1861, %v1889
        %1891 = vmatmul.bf16.gmra.mxu0 %v608
        %v1892 = vpop.f32.mrf.mxu0
        %v1893 = vadd.f32 %v1864, %v1892
        %v1894 = vpop.f32.mrf.mxu0
        %v1895 = vadd.f32 %v1866, %v1894
        %1896 = vmatmul.bf16.gmra.mxu0 %v611
        %v1897 = vpop.f32.mrf.mxu0
        %v1898 = vadd.f32 %v1869, %v1897
        %v1899 = vpop.f32.mrf.mxu0
        %v1900 = vadd.f32 %v1871, %v1899
        %1901 = vdwg.mxu0
        %1902 = vmatpush.bf16.msra.mxu0 %v1361
        %1903 = vmatpush.bf16.msra.mxu0 %v1352
        %1904 = vmatpush.bf16.msra.mxu0 %v1343
        %1905 = vmatpush.bf16.msra.mxu0 %v1334
        %1906 = vmatpush.bf16.msra.mxu0 %v1325
        %1907 = vmatpush.bf16.msra.mxu0 %v1316
        %1908 = vmatpush.bf16.msra.mxu0 %v1307
        %1909 = vmatpush.bf16.msra.mxu0 %v1298
        %1910 = vmatmul.bf16.gmra.mxu0 %v600
        %v1911 = vpop.f32.mrf.mxu0
        %v1912 = vadd.f32 0.0, %v1911
        %v1913 = vpop.f32.mrf.mxu0
        %v1914 = vadd.f32 0.0, %v1913
        %1915 = vmatmul.bf16.gmra.mxu0 %v603
        %v1916 = vpop.f32.mrf.mxu0
        %v1917 = vadd.f32 0.0, %v1916
        %v1918 = vpop.f32.mrf.mxu0
        %v1919 = vadd.f32 0.0, %v1918
        %1920 = vmatmul.bf16.gmra.mxu0 %v606
        %v1921 = vpop.f32.mrf.mxu0
        %v1922 = vadd.f32 0.0, %v1921
        %v1923 = vpop.f32.mrf.mxu0
        %v1924 = vadd.f32 0.0, %v1923
        %1925 = vmatmul.bf16.gmra.mxu0 %v609
        %v1926 = vpop.f32.mrf.mxu0
        %v1927 = vadd.f32 0.0, %v1926
        %v1928 = vpop.f32.mrf.mxu0
        %v1929 = vadd.f32 0.0, %v1928
        %1930 = vdwg.mxu0
        %1931 = vmatpush.bf16.msra.mxu0 %v1433
        %1932 = vmatpush.bf16.msra.mxu0 %v1424
        %1933 = vmatpush.bf16.msra.mxu0 %v1415
        %1934 = vmatpush.bf16.msra.mxu0 %v1406
        %1935 = vmatpush.bf16.msra.mxu0 %v1397
        %1936 = vmatpush.bf16.msra.mxu0 %v1388
        %1937 = vmatpush.bf16.msra.mxu0 %v1379
        %1938 = vmatpush.bf16.msra.mxu0 %v1370
        %1939 = vmatmul.bf16.gmra.mxu0 %v601
        %v1940 = vpop.f32.mrf.mxu0
        %v1941 = vadd.f32 %v1912, %v1940
        %v1942 = vpop.f32.mrf.mxu0
        %v1943 = vadd.f32 %v1914, %v1942
        %1944 = vmatmul.bf16.gmra.mxu0 %v604
        %v1945 = vpop.f32.mrf.mxu0
        %v1946 = vadd.f32 %v1917, %v1945
        %v1947 = vpop.f32.mrf.mxu0
        %v1948 = vadd.f32 %v1919, %v1947
        %1949 = vmatmul.bf16.gmra.mxu0 %v607
        %v1950 = vpop.f32.mrf.mxu0
        %v1951 = vadd.f32 %v1922, %v1950
        %v1952 = vpop.f32.mrf.mxu0
        %v1953 = vadd.f32 %v1924, %v1952
        %1954 = vmatmul.bf16.gmra.mxu0 %v610
        %v1955 = vpop.f32.mrf.mxu0
        %v1956 = vadd.f32 %v1927, %v1955
        %v1957 = vpop.f32.mrf.mxu0
        %v1958 = vadd.f32 %v1929, %v1957
        %1959 = vdwg.mxu0
        %1960 = vmatpush.bf16.msra.mxu0 %v1505
        %1961 = vmatpush.bf16.msra.mxu0 %v1496
        %1962 = vmatpush.bf16.msra.mxu0 %v1487
        %1963 = vmatpush.bf16.msra.mxu0 %v1478
        %1964 = vmatpush.bf16.msra.mxu0 %v1469
        %1965 = vmatpush.bf16.msra.mxu0 %v1460
        %1966 = vmatpush.bf16.msra.mxu0 %v1451
        %1967 = vmatpush.bf16.msra.mxu0 %v1442
        %1968 = vmatmul.bf16.gmra.mxu0 %v602
        %v1969 = vpop.f32.mrf.mxu0
        %v1970 = vadd.f32 %v1941, %v1969
        %v1971 = vpop.f32.mrf.mxu0
        %v1972 = vadd.f32 %v1943, %v1971
        %1973 = vmatmul.bf16.gmra.mxu0 %v605
        %v1974 = vpop.f32.mrf.mxu0
        %v1975 = vadd.f32 %v1946, %v1974
        %v1976 = vpop.f32.mrf.mxu0
        %v1977 = vadd.f32 %v1948, %v1976
        %1978 = vmatmul.bf16.gmra.mxu0 %v608
        %v1979 = vpop.f32.mrf.mxu0
        %v1980 = vadd.f32 %v1951, %v1979
        %v1981 = vpop.f32.mrf.mxu0
        %v1982 = vadd.f32 %v1953, %v1981
        %1983 = vmatmul.bf16.gmra.mxu0 %v611
        %v1984 = vpop.f32.mrf.mxu0
        %v1985 = vadd.f32 %v1956, %v1984
        %v1986 = vpop.f32.mrf.mxu0
        %v1987 = vadd.f32 %v1958, %v1986
        %1988 = vdwg.mxu0
        %1989 = vmatpush.bf16.msra.mxu0 %v1362
        %1990 = vmatpush.bf16.msra.mxu0 %v1353
        %1991 = vmatpush.bf16.msra.mxu0 %v1344
        %1992 = vmatpush.bf16.msra.mxu0 %v1335
        %1993 = vmatpush.bf16.msra.mxu0 %v1326
        %1994 = vmatpush.bf16.msra.mxu0 %v1317
        %1995 = vmatpush.bf16.msra.mxu0 %v1308
        %1996 = vmatpush.bf16.msra.mxu0 %v1299
        %1997 = vmatmul.bf16.gmra.mxu0 %v600
        %v1998 = vpop.f32.mrf.mxu0
        %v1999 = vadd.f32 0.0, %v1998
        %v2000 = vpop.f32.mrf.mxu0
        %v2001 = vadd.f32 0.0, %v2000
        %2002 = vmatmul.bf16.gmra.mxu0 %v603
        %v2003 = vpop.f32.mrf.mxu0
        %v2004 = vadd.f32 0.0, %v2003
        %v2005 = vpop.f32.mrf.mxu0
        %v2006 = vadd.f32 0.0, %v2005
        %2007 = vmatmul.bf16.gmra.mxu0 %v606
        %v2008 = vpop.f32.mrf.mxu0
        %v2009 = vadd.f32 0.0, %v2008
        %v2010 = vpop.f32.mrf.mxu0
        %v2011 = vadd.f32 0.0, %v2010
        %2012 = vmatmul.bf16.gmra.mxu0 %v609
        %v2013 = vpop.f32.mrf.mxu0
        %v2014 = vadd.f32 0.0, %v2013
        %v2015 = vpop.f32.mrf.mxu0
        %v2016 = vadd.f32 0.0, %v2015
        %2017 = vdwg.mxu0
        %2018 = vmatpush.bf16.msra.mxu0 %v1434
        %2019 = vmatpush.bf16.msra.mxu0 %v1425
        %2020 = vmatpush.bf16.msra.mxu0 %v1416
        %2021 = vmatpush.bf16.msra.mxu0 %v1407
        %2022 = vmatpush.bf16.msra.mxu0 %v1398
        %2023 = vmatpush.bf16.msra.mxu0 %v1389
        %2024 = vmatpush.bf16.msra.mxu0 %v1380
        %2025 = vmatpush.bf16.msra.mxu0 %v1371
        %2026 = vmatmul.bf16.gmra.mxu0 %v601
        %v2027 = vpop.f32.mrf.mxu0
        %v2028 = vadd.f32 %v1999, %v2027
        %v2029 = vpop.f32.mrf.mxu0
        %v2030 = vadd.f32 %v2001, %v2029
        %2031 = vmatmul.bf16.gmra.mxu0 %v604
        %v2032 = vpop.f32.mrf.mxu0
        %v2033 = vadd.f32 %v2004, %v2032
        %v2034 = vpop.f32.mrf.mxu0
        %v2035 = vadd.f32 %v2006, %v2034
        %2036 = vmatmul.bf16.gmra.mxu0 %v607
        %v2037 = vpop.f32.mrf.mxu0
        %v2038 = vadd.f32 %v2009, %v2037
        %v2039 = vpop.f32.mrf.mxu0
        %v2040 = vadd.f32 %v2011, %v2039
        %2041 = vmatmul.bf16.gmra.mxu0 %v610
        %v2042 = vpop.f32.mrf.mxu0
        %v2043 = vadd.f32 %v2014, %v2042
        %v2044 = vpop.f32.mrf.mxu0
        %v2045 = vadd.f32 %v2016, %v2044
        %2046 = vdwg.mxu0
        %2047 = vmatpush.bf16.msra.mxu0 %v1506
        %2048 = vmatpush.bf16.msra.mxu0 %v1497
        %2049 = vmatpush.bf16.msra.mxu0 %v1488
        %2050 = vmatpush.bf16.msra.mxu0 %v1479
        %2051 = vmatpush.bf16.msra.mxu0 %v1470
        %2052 = vmatpush.bf16.msra.mxu0 %v1461
        %2053 = vmatpush.bf16.msra.mxu0 %v1452
        %2054 = vmatpush.bf16.msra.mxu0 %v1443
        %2055 = vmatmul.bf16.gmra.mxu0 %v602
        %v2056 = vpop.f32.mrf.mxu0
        %v2057 = vadd.f32 %v2028, %v2056
        %v2058 = vpop.f32.mrf.mxu0
        %v2059 = vadd.f32 %v2030, %v2058
        %2060 = vmatmul.bf16.gmra.mxu0 %v605
        %v2061 = vpop.f32.mrf.mxu0
        %v2062 = vadd.f32 %v2033, %v2061
        %v2063 = vpop.f32.mrf.mxu0
        %v2064 = vadd.f32 %v2035, %v2063
        %2065 = vmatmul.bf16.gmra.mxu0 %v608
        %v2066 = vpop.f32.mrf.mxu0
        %v2067 = vadd.f32 %v2038, %v2066
        %v2068 = vpop.f32.mrf.mxu0
        %v2069 = vadd.f32 %v2040, %v2068
        %2070 = vmatmul.bf16.gmra.mxu0 %v611
        %v2071 = vpop.f32.mrf.mxu0
        %v2072 = vadd.f32 %v2043, %v2071
        %v2073 = vpop.f32.mrf.mxu0
        %v2074 = vadd.f32 %v2045, %v2073
        %2075 = vdwg.mxu0
        %2076 = vmatpush.bf16.msra.mxu0 %v1363
        %2077 = vmatpush.bf16.msra.mxu0 %v1354
        %2078 = vmatpush.bf16.msra.mxu0 %v1345
        %2079 = vmatpush.bf16.msra.mxu0 %v1336
        %2080 = vmatpush.bf16.msra.mxu0 %v1327
        %2081 = vmatpush.bf16.msra.mxu0 %v1318
        %2082 = vmatpush.bf16.msra.mxu0 %v1309
        %2083 = vmatpush.bf16.msra.mxu0 %v1300
        %2084 = vmatmul.bf16.gmra.mxu0 %v600
        %v2085 = vpop.f32.mrf.mxu0
        %v2086 = vadd.f32 0.0, %v2085
        %v2087 = vpop.f32.mrf.mxu0
        %v2088 = vadd.f32 0.0, %v2087
        %2089 = vmatmul.bf16.gmra.mxu0 %v603
        %v2090 = vpop.f32.mrf.mxu0
        %v2091 = vadd.f32 0.0, %v2090
        %v2092 = vpop.f32.mrf.mxu0
        %v2093 = vadd.f32 0.0, %v2092
        %2094 = vmatmul.bf16.gmra.mxu0 %v606
        %v2095 = vpop.f32.mrf.mxu0
        %v2096 = vadd.f32 0.0, %v2095
        %v2097 = vpop.f32.mrf.mxu0
        %v2098 = vadd.f32 0.0, %v2097
        %2099 = vmatmul.bf16.gmra.mxu0 %v609
        %v2100 = vpop.f32.mrf.mxu0
        %v2101 = vadd.f32 0.0, %v2100
        %v2102 = vpop.f32.mrf.mxu0
        %v2103 = vadd.f32 0.0, %v2102
        %2104 = vdwg.mxu0
        %2105 = vmatpush.bf16.msra.mxu0 %v1435
        %2106 = vmatpush.bf16.msra.mxu0 %v1426
        %2107 = vmatpush.bf16.msra.mxu0 %v1417
        %2108 = vmatpush.bf16.msra.mxu0 %v1408
        %2109 = vmatpush.bf16.msra.mxu0 %v1399
        %2110 = vmatpush.bf16.msra.mxu0 %v1390
        %2111 = vmatpush.bf16.msra.mxu0 %v1381
        %2112 = vmatpush.bf16.msra.mxu0 %v1372
        %2113 = vmatmul.bf16.gmra.mxu0 %v601
        %v2114 = vpop.f32.mrf.mxu0
        %v2115 = vadd.f32 %v2086, %v2114
        %v2116 = vpop.f32.mrf.mxu0
        %v2117 = vadd.f32 %v2088, %v2116
        %2118 = vmatmul.bf16.gmra.mxu0 %v604
        %v2119 = vpop.f32.mrf.mxu0
        %v2120 = vadd.f32 %v2091, %v2119
        %v2121 = vpop.f32.mrf.mxu0
        %v2122 = vadd.f32 %v2093, %v2121
        %2123 = vmatmul.bf16.gmra.mxu0 %v607
        %v2124 = vpop.f32.mrf.mxu0
        %v2125 = vadd.f32 %v2096, %v2124
        %v2126 = vpop.f32.mrf.mxu0
        %v2127 = vadd.f32 %v2098, %v2126
        %2128 = vmatmul.bf16.gmra.mxu0 %v610
        %v2129 = vpop.f32.mrf.mxu0
        %v2130 = vadd.f32 %v2101, %v2129
        %v2131 = vpop.f32.mrf.mxu0
        %v2132 = vadd.f32 %v2103, %v2131
        %2133 = vdwg.mxu0
        %2134 = vmatpush.bf16.msra.mxu0 %v1507
        %2135 = vmatpush.bf16.msra.mxu0 %v1498
        %2136 = vmatpush.bf16.msra.mxu0 %v1489
        %2137 = vmatpush.bf16.msra.mxu0 %v1480
        %2138 = vmatpush.bf16.msra.mxu0 %v1471
        %2139 = vmatpush.bf16.msra.mxu0 %v1462
        %2140 = vmatpush.bf16.msra.mxu0 %v1453
        %2141 = vmatpush.bf16.msra.mxu0 %v1444
        %2142 = vmatmul.bf16.gmra.mxu0 %v602
        %v2143 = vpop.f32.mrf.mxu0
        %v2144 = vadd.f32 %v2115, %v2143
        %v2145 = vpop.f32.mrf.mxu0
        %v2146 = vadd.f32 %v2117, %v2145
        %2147 = vmatmul.bf16.gmra.mxu0 %v605
        %v2148 = vpop.f32.mrf.mxu0
        %v2149 = vadd.f32 %v2120, %v2148
        %v2150 = vpop.f32.mrf.mxu0
        %v2151 = vadd.f32 %v2122, %v2150
        %2152 = vmatmul.bf16.gmra.mxu0 %v608
        %v2153 = vpop.f32.mrf.mxu0
        %v2154 = vadd.f32 %v2125, %v2153
        %v2155 = vpop.f32.mrf.mxu0
        %v2156 = vadd.f32 %v2127, %v2155
        %2157 = vmatmul.bf16.gmra.mxu0 %v611
        %v2158 = vpop.f32.mrf.mxu0
        %v2159 = vadd.f32 %v2130, %v2158
        %v2160 = vpop.f32.mrf.mxu0
        %v2161 = vadd.f32 %v2132, %v2160
        %2162 = vdwg.mxu0
        %2163 = vmatpush.bf16.msra.mxu0 %v1364
        %2164 = vmatpush.bf16.msra.mxu0 %v1355
        %2165 = vmatpush.bf16.msra.mxu0 %v1346
        %2166 = vmatpush.bf16.msra.mxu0 %v1337
        %2167 = vmatpush.bf16.msra.mxu0 %v1328
        %2168 = vmatpush.bf16.msra.mxu0 %v1319
        %2169 = vmatpush.bf16.msra.mxu0 %v1310
        %2170 = vmatpush.bf16.msra.mxu0 %v1301
        %2171 = vmatmul.bf16.gmra.mxu0 %v600
        %v2172 = vpop.f32.mrf.mxu0
        %v2173 = vadd.f32 0.0, %v2172
        %v2174 = vpop.f32.mrf.mxu0
        %v2175 = vadd.f32 0.0, %v2174
        %2176 = vmatmul.bf16.gmra.mxu0 %v603
        %v2177 = vpop.f32.mrf.mxu0
        %v2178 = vadd.f32 0.0, %v2177
        %v2179 = vpop.f32.mrf.mxu0
        %v2180 = vadd.f32 0.0, %v2179
        %2181 = vmatmul.bf16.gmra.mxu0 %v606
        %v2182 = vpop.f32.mrf.mxu0
        %v2183 = vadd.f32 0.0, %v2182
        %v2184 = vpop.f32.mrf.mxu0
        %v2185 = vadd.f32 0.0, %v2184
        %2186 = vmatmul.bf16.gmra.mxu0 %v609
        %v2187 = vpop.f32.mrf.mxu0
        %v2188 = vadd.f32 0.0, %v2187
        %v2189 = vpop.f32.mrf.mxu0
        %v2190 = vadd.f32 0.0, %v2189
        %2191 = vdwg.mxu0
        %2192 = vmatpush.bf16.msra.mxu0 %v1436
        %2193 = vmatpush.bf16.msra.mxu0 %v1427
        %2194 = vmatpush.bf16.msra.mxu0 %v1418
        %2195 = vmatpush.bf16.msra.mxu0 %v1409
        %2196 = vmatpush.bf16.msra.mxu0 %v1400
        %2197 = vmatpush.bf16.msra.mxu0 %v1391
        %2198 = vmatpush.bf16.msra.mxu0 %v1382
        %2199 = vmatpush.bf16.msra.mxu0 %v1373
        %2200 = vmatmul.bf16.gmra.mxu0 %v601
        %v2201 = vpop.f32.mrf.mxu0
        %v2202 = vadd.f32 %v2173, %v2201
        %v2203 = vpop.f32.mrf.mxu0
        %v2204 = vadd.f32 %v2175, %v2203
        %2205 = vmatmul.bf16.gmra.mxu0 %v604
        %v2206 = vpop.f32.mrf.mxu0
        %v2207 = vadd.f32 %v2178, %v2206
        %v2208 = vpop.f32.mrf.mxu0
        %v2209 = vadd.f32 %v2180, %v2208
        %2210 = vmatmul.bf16.gmra.mxu0 %v607
        %v2211 = vpop.f32.mrf.mxu0
        %v2212 = vadd.f32 %v2183, %v2211
        %v2213 = vpop.f32.mrf.mxu0
        %v2214 = vadd.f32 %v2185, %v2213
        %2215 = vmatmul.bf16.gmra.mxu0 %v610
        %v2216 = vpop.f32.mrf.mxu0
        %v2217 = vadd.f32 %v2188, %v2216
        %v2218 = vpop.f32.mrf.mxu0
        %v2219 = vadd.f32 %v2190, %v2218
        %2220 = vdwg.mxu0
        %2221 = vmatpush.bf16.msra.mxu0 %v1508
        %2222 = vmatpush.bf16.msra.mxu0 %v1499
        %2223 = vmatpush.bf16.msra.mxu0 %v1490
        %2224 = vmatpush.bf16.msra.mxu0 %v1481
        %2225 = vmatpush.bf16.msra.mxu0 %v1472
        %2226 = vmatpush.bf16.msra.mxu0 %v1463
        %2227 = vmatpush.bf16.msra.mxu0 %v1454
        %2228 = vmatpush.bf16.msra.mxu0 %v1445
        %2229 = vmatmul.bf16.gmra.mxu0 %v602
        %v2230 = vpop.f32.mrf.mxu0
        %v2231 = vadd.f32 %v2202, %v2230
        %v2232 = vpop.f32.mrf.mxu0
        %v2233 = vadd.f32 %v2204, %v2232
        %2234 = vmatmul.bf16.gmra.mxu0 %v605
        %v2235 = vpop.f32.mrf.mxu0
        %v2236 = vadd.f32 %v2207, %v2235
        %v2237 = vpop.f32.mrf.mxu0
        %v2238 = vadd.f32 %v2209, %v2237
        %2239 = vmatmul.bf16.gmra.mxu0 %v608
        %v2240 = vpop.f32.mrf.mxu0
        %v2241 = vadd.f32 %v2212, %v2240
        %v2242 = vpop.f32.mrf.mxu0
        %v2243 = vadd.f32 %v2214, %v2242
        %2244 = vmatmul.bf16.gmra.mxu0 %v611
        %v2245 = vpop.f32.mrf.mxu0
        %v2246 = vadd.f32 %v2217, %v2245
        %v2247 = vpop.f32.mrf.mxu0
        %v2248 = vadd.f32 %v2219, %v2247
        %2249 = vdwg.mxu0
        %2250 = vmatpush.bf16.msra.mxu0 %v1365
        %2251 = vmatpush.bf16.msra.mxu0 %v1356
        %2252 = vmatpush.bf16.msra.mxu0 %v1347
        %2253 = vmatpush.bf16.msra.mxu0 %v1338
        %2254 = vmatpush.bf16.msra.mxu0 %v1329
        %2255 = vmatpush.bf16.msra.mxu0 %v1320
        %2256 = vmatpush.bf16.msra.mxu0 %v1311
        %2257 = vmatpush.bf16.msra.mxu0 %v1302
        %2258 = vmatmul.bf16.gmra.mxu0 %v600
        %v2259 = vpop.f32.mrf.mxu0
        %v2260 = vadd.f32 0.0, %v2259
        %v2261 = vpop.f32.mrf.mxu0
        %v2262 = vadd.f32 0.0, %v2261
        %2263 = vmatmul.bf16.gmra.mxu0 %v603
        %v2264 = vpop.f32.mrf.mxu0
        %v2265 = vadd.f32 0.0, %v2264
        %v2266 = vpop.f32.mrf.mxu0
        %v2267 = vadd.f32 0.0, %v2266
        %2268 = vmatmul.bf16.gmra.mxu0 %v606
        %v2269 = vpop.f32.mrf.mxu0
        %v2270 = vadd.f32 0.0, %v2269
        %v2271 = vpop.f32.mrf.mxu0
        %v2272 = vadd.f32 0.0, %v2271
        %2273 = vmatmul.bf16.gmra.mxu0 %v609
        %v2274 = vpop.f32.mrf.mxu0
        %v2275 = vadd.f32 0.0, %v2274
        %v2276 = vpop.f32.mrf.mxu0
        %v2277 = vadd.f32 0.0, %v2276
        %2278 = vdwg.mxu0
        %2279 = vmatpush.bf16.msra.mxu0 %v1437
        %2280 = vmatpush.bf16.msra.mxu0 %v1428
        %2281 = vmatpush.bf16.msra.mxu0 %v1419
        %2282 = vmatpush.bf16.msra.mxu0 %v1410
        %2283 = vmatpush.bf16.msra.mxu0 %v1401
        %2284 = vmatpush.bf16.msra.mxu0 %v1392
        %2285 = vmatpush.bf16.msra.mxu0 %v1383
        %2286 = vmatpush.bf16.msra.mxu0 %v1374
        %2287 = vmatmul.bf16.gmra.mxu0 %v601
        %v2288 = vpop.f32.mrf.mxu0
        %v2289 = vadd.f32 %v2260, %v2288
        %v2290 = vpop.f32.mrf.mxu0
        %v2291 = vadd.f32 %v2262, %v2290
        %2292 = vmatmul.bf16.gmra.mxu0 %v604
        %v2293 = vpop.f32.mrf.mxu0
        %v2294 = vadd.f32 %v2265, %v2293
        %v2295 = vpop.f32.mrf.mxu0
        %v2296 = vadd.f32 %v2267, %v2295
        %2297 = vmatmul.bf16.gmra.mxu0 %v607
        %v2298 = vpop.f32.mrf.mxu0
        %v2299 = vadd.f32 %v2270, %v2298
        %v2300 = vpop.f32.mrf.mxu0
        %v2301 = vadd.f32 %v2272, %v2300
        %2302 = vmatmul.bf16.gmra.mxu0 %v610
        %v2303 = vpop.f32.mrf.mxu0
        %v2304 = vadd.f32 %v2275, %v2303
        %v2305 = vpop.f32.mrf.mxu0
        %v2306 = vadd.f32 %v2277, %v2305
        %2307 = vdwg.mxu0
        %2308 = vmatpush.bf16.msra.mxu0 %v1509
        %2309 = vmatpush.bf16.msra.mxu0 %v1500
        %2310 = vmatpush.bf16.msra.mxu0 %v1491
        %2311 = vmatpush.bf16.msra.mxu0 %v1482
        %2312 = vmatpush.bf16.msra.mxu0 %v1473
        %2313 = vmatpush.bf16.msra.mxu0 %v1464
        %2314 = vmatpush.bf16.msra.mxu0 %v1455
        %2315 = vmatpush.bf16.msra.mxu0 %v1446
        %2316 = vmatmul.bf16.gmra.mxu0 %v602
        %v2317 = vpop.f32.mrf.mxu0
        %v2318 = vadd.f32 %v2289, %v2317
        %v2319 = vpop.f32.mrf.mxu0
        %v2320 = vadd.f32 %v2291, %v2319
        %2321 = vmatmul.bf16.gmra.mxu0 %v605
        %v2322 = vpop.f32.mrf.mxu0
        %v2323 = vadd.f32 %v2294, %v2322
        %v2324 = vpop.f32.mrf.mxu0
        %v2325 = vadd.f32 %v2296, %v2324
        %2326 = vmatmul.bf16.gmra.mxu0 %v608
        %v2327 = vpop.f32.mrf.mxu0
        %v2328 = vadd.f32 %v2299, %v2327
        %v2329 = vpop.f32.mrf.mxu0
        %v2330 = vadd.f32 %v2301, %v2329
        %2331 = vmatmul.bf16.gmra.mxu0 %v611
        %v2332 = vpop.f32.mrf.mxu0
        %v2333 = vadd.f32 %v2304, %v2332
        %v2334 = vpop.f32.mrf.mxu0
        %v2335 = vadd.f32 %v2306, %v2334
        %2336 = vdwg.mxu0
        %2337 = vmatpush.bf16.msra.mxu0 %v1366
        %2338 = vmatpush.bf16.msra.mxu0 %v1357
        %2339 = vmatpush.bf16.msra.mxu0 %v1348
        %2340 = vmatpush.bf16.msra.mxu0 %v1339
        %2341 = vmatpush.bf16.msra.mxu0 %v1330
        %2342 = vmatpush.bf16.msra.mxu0 %v1321
        %2343 = vmatpush.bf16.msra.mxu0 %v1312
        %2344 = vmatpush.bf16.msra.mxu0 %v1303
        %2345 = vmatmul.bf16.gmra.mxu0 %v600
        %v2346 = vpop.f32.mrf.mxu0
        %v2347 = vadd.f32 0.0, %v2346
        %v2348 = vpop.f32.mrf.mxu0
        %v2349 = vadd.f32 0.0, %v2348
        %2350 = vmatmul.bf16.gmra.mxu0 %v603
        %v2351 = vpop.f32.mrf.mxu0
        %v2352 = vadd.f32 0.0, %v2351
        %v2353 = vpop.f32.mrf.mxu0
        %v2354 = vadd.f32 0.0, %v2353
        %2355 = vmatmul.bf16.gmra.mxu0 %v606
        %v2356 = vpop.f32.mrf.mxu0
        %v2357 = vadd.f32 0.0, %v2356
        %v2358 = vpop.f32.mrf.mxu0
        %v2359 = vadd.f32 0.0, %v2358
        %2360 = vmatmul.bf16.gmra.mxu0 %v609
        %v2361 = vpop.f32.mrf.mxu0
        %v2362 = vadd.f32 0.0, %v2361
        %v2363 = vpop.f32.mrf.mxu0
        %v2364 = vadd.f32 0.0, %v2363
        %2365 = vdwg.mxu0
        %2366 = vmatpush.bf16.msra.mxu0 %v1438
        %2367 = vmatpush.bf16.msra.mxu0 %v1429
        %2368 = vmatpush.bf16.msra.mxu0 %v1420
        %2369 = vmatpush.bf16.msra.mxu0 %v1411
        %2370 = vmatpush.bf16.msra.mxu0 %v1402
        %2371 = vmatpush.bf16.msra.mxu0 %v1393
        %2372 = vmatpush.bf16.msra.mxu0 %v1384
        %2373 = vmatpush.bf16.msra.mxu0 %v1375
        %2374 = vmatmul.bf16.gmra.mxu0 %v601
        %v2375 = vpop.f32.mrf.mxu0
        %v2376 = vadd.f32 %v2347, %v2375
        %v2377 = vpop.f32.mrf.mxu0
        %v2378 = vadd.f32 %v2349, %v2377
        %2379 = vmatmul.bf16.gmra.mxu0 %v604
        %v2380 = vpop.f32.mrf.mxu0
        %v2381 = vadd.f32 %v2352, %v2380
        %v2382 = vpop.f32.mrf.mxu0
        %v2383 = vadd.f32 %v2354, %v2382
        %2384 = vmatmul.bf16.gmra.mxu0 %v607
        %v2385 = vpop.f32.mrf.mxu0
        %v2386 = vadd.f32 %v2357, %v2385
        %v2387 = vpop.f32.mrf.mxu0
        %v2388 = vadd.f32 %v2359, %v2387
        %2389 = vmatmul.bf16.gmra.mxu0 %v610
        %v2390 = vpop.f32.mrf.mxu0
        %v2391 = vadd.f32 %v2362, %v2390
        %v2392 = vpop.f32.mrf.mxu0
        %v2393 = vadd.f32 %v2364, %v2392
        %2394 = vdwg.mxu0
        %2395 = vmatpush.bf16.msra.mxu0 %v1510
        %2396 = vmatpush.bf16.msra.mxu0 %v1501
        %2397 = vmatpush.bf16.msra.mxu0 %v1492
        %2398 = vmatpush.bf16.msra.mxu0 %v1483
        %2399 = vmatpush.bf16.msra.mxu0 %v1474
        %2400 = vmatpush.bf16.msra.mxu0 %v1465
        %2401 = vmatpush.bf16.msra.mxu0 %v1456
        %2402 = vmatpush.bf16.msra.mxu0 %v1447
        %2403 = vmatmul.bf16.gmra.mxu0 %v602
        %v2404 = vpop.f32.mrf.mxu0
        %v2405 = vadd.f32 %v2376, %v2404
        %v2406 = vpop.f32.mrf.mxu0
        %v2407 = vadd.f32 %v2378, %v2406
        %2408 = vmatmul.bf16.gmra.mxu0 %v605
        %v2409 = vpop.f32.mrf.mxu0
        %v2410 = vadd.f32 %v2381, %v2409
        %v2411 = vpop.f32.mrf.mxu0
        %v2412 = vadd.f32 %v2383, %v2411
        %2413 = vmatmul.bf16.gmra.mxu0 %v608
        %v2414 = vpop.f32.mrf.mxu0
        %v2415 = vadd.f32 %v2386, %v2414
        %v2416 = vpop.f32.mrf.mxu0
        %v2417 = vadd.f32 %v2388, %v2416
        %2418 = vmatmul.bf16.gmra.mxu0 %v611
        %v2419 = vpop.f32.mrf.mxu0
        %v2420 = vadd.f32 %v2391, %v2419
        %v2421 = vpop.f32.mrf.mxu0
        %v2422 = vadd.f32 %v2393, %v2421
        %2423 = vdwg.mxu0
        %2424 = vmatpush.bf16.msra.mxu0 %v1367
        %2425 = vmatpush.bf16.msra.mxu0 %v1358
        %2426 = vmatpush.bf16.msra.mxu0 %v1349
        %2427 = vmatpush.bf16.msra.mxu0 %v1340
        %2428 = vmatpush.bf16.msra.mxu0 %v1331
        %2429 = vmatpush.bf16.msra.mxu0 %v1322
        %2430 = vmatpush.bf16.msra.mxu0 %v1313
        %2431 = vmatpush.bf16.msra.mxu0 %v1304
        %2432 = vmatmul.bf16.gmra.mxu0 %v600
        %v2433 = vpop.f32.mrf.mxu0
        %v2434 = vadd.f32 0.0, %v2433
        %v2435 = vpop.f32.mrf.mxu0
        %v2436 = vadd.f32 0.0, %v2435
        %2437 = vmatmul.bf16.gmra.mxu0 %v603
        %v2438 = vpop.f32.mrf.mxu0
        %v2439 = vadd.f32 0.0, %v2438
        %v2440 = vpop.f32.mrf.mxu0
        %v2441 = vadd.f32 0.0, %v2440
        %2442 = vmatmul.bf16.gmra.mxu0 %v606
        %v2443 = vpop.f32.mrf.mxu0
        %v2444 = vadd.f32 0.0, %v2443
        %v2445 = vpop.f32.mrf.mxu0
        %v2446 = vadd.f32 0.0, %v2445
        %2447 = vmatmul.bf16.gmra.mxu0 %v609
        %v2448 = vpop.f32.mrf.mxu0
        %v2449 = vadd.f32 0.0, %v2448
        %v2450 = vpop.f32.mrf.mxu0
        %v2451 = vadd.f32 0.0, %v2450
        %2452 = vdwg.mxu0
        %2453 = vmatpush.bf16.msra.mxu0 %v1439
        %2454 = vmatpush.bf16.msra.mxu0 %v1430
        %2455 = vmatpush.bf16.msra.mxu0 %v1421
        %2456 = vmatpush.bf16.msra.mxu0 %v1412
        %2457 = vmatpush.bf16.msra.mxu0 %v1403
        %2458 = vmatpush.bf16.msra.mxu0 %v1394
        %2459 = vmatpush.bf16.msra.mxu0 %v1385
        %2460 = vmatpush.bf16.msra.mxu0 %v1376
        %2461 = vmatmul.bf16.gmra.mxu0 %v601
        %v2462 = vpop.f32.mrf.mxu0
        %v2463 = vadd.f32 %v2434, %v2462
        %v2464 = vpop.f32.mrf.mxu0
        %v2465 = vadd.f32 %v2436, %v2464
        %2466 = vmatmul.bf16.gmra.mxu0 %v604
        %v2467 = vpop.f32.mrf.mxu0
        %v2468 = vadd.f32 %v2439, %v2467
        %v2469 = vpop.f32.mrf.mxu0
        %v2470 = vadd.f32 %v2441, %v2469
        %2471 = vmatmul.bf16.gmra.mxu0 %v607
        %v2472 = vpop.f32.mrf.mxu0
        %v2473 = vadd.f32 %v2444, %v2472
        %v2474 = vpop.f32.mrf.mxu0
        %v2475 = vadd.f32 %v2446, %v2474
        %2476 = vmatmul.bf16.gmra.mxu0 %v610
        %v2477 = vpop.f32.mrf.mxu0
        %v2478 = vadd.f32 %v2449, %v2477
        %v2479 = vpop.f32.mrf.mxu0
        %v2480 = vadd.f32 %v2451, %v2479
        %2481 = vdwg.mxu0
        %2482 = vmatpush.bf16.msra.mxu0 %v1511
        %2483 = vmatpush.bf16.msra.mxu0 %v1502
        %2484 = vmatpush.bf16.msra.mxu0 %v1493
        %2485 = vmatpush.bf16.msra.mxu0 %v1484
        %2486 = vmatpush.bf16.msra.mxu0 %v1475
        %2487 = vmatpush.bf16.msra.mxu0 %v1466
        %2488 = vmatpush.bf16.msra.mxu0 %v1457
        %2489 = vmatpush.bf16.msra.mxu0 %v1448
        %2490 = vmatmul.bf16.gmra.mxu0 %v602
        %v2491 = vpop.f32.mrf.mxu0
        %v2492 = vadd.f32 %v2463, %v2491
        %v2493 = vpop.f32.mrf.mxu0
        %v2494 = vadd.f32 %v2465, %v2493
        %2495 = vmatmul.bf16.gmra.mxu0 %v605
        %v2496 = vpop.f32.mrf.mxu0
        %v2497 = vadd.f32 %v2468, %v2496
        %v2498 = vpop.f32.mrf.mxu0
        %v2499 = vadd.f32 %v2470, %v2498
        %2500 = vmatmul.bf16.gmra.mxu0 %v608
        %v2501 = vpop.f32.mrf.mxu0
        %v2502 = vadd.f32 %v2473, %v2501
        %v2503 = vpop.f32.mrf.mxu0
        %v2504 = vadd.f32 %v2475, %v2503
        %2505 = vmatmul.bf16.gmra.mxu0 %v611
        %v2506 = vpop.f32.mrf.mxu0
        %v2507 = vadd.f32 %v2478, %v2506
        %v2508 = vpop.f32.mrf.mxu0
        %v2509 = vadd.f32 %v2480, %v2508
        %2510 = vdwg.mxu0
        %v2511 = vlaneseq
        %v2512 = vshrl.u32 %v2511, 7
        %v2513 = vadd.s32 %v2512, 8
        %v2514 = vadd.s32 %v2512, 16
        %v2515 = vadd.s32 %v2512, 24
        %v2516 = vadd.s32 %v2512, 32
        %v2517 = vadd.s32 %v2512, 40
        %v2518 = vadd.s32 %v2512, 48
        %v2519 = vadd.s32 %v2512, 56
        %v2520 = vlaneseq
        %v2521 = vand.u32 %v2520, 127
        %vm2522 = vcmp.le.s32.totalorder %v2521, %v2512
        %vm2523 = vcmp.le.s32.totalorder %v2521, %v2513
        %vm2524 = vcmp.le.s32.totalorder %v2521, %v2514
        %vm2525 = vcmp.le.s32.totalorder %v2521, %v2515
        %vm2526 = vcmp.le.s32.totalorder %v2521, %v2516
        %vm2527 = vcmp.le.s32.totalorder %v2521, %v2517
        %vm2528 = vcmp.le.s32.totalorder %v2521, %v2518
        %vm2529 = vcmp.le.s32.totalorder %v2521, %v2519
        %vm2530 = vcmask 523264
        %v2532 = vsel %vm2530, %v1796, 0
        %v2535 = vsel %vm2530, %v1798, 0
        %v2538 = vsel %vm2530, %v1801, 0
        %v2541 = vsel %vm2530, %v1803, 0
        %v2544 = vsel %vm2530, %v1806, 0
        %v2547 = vsel %vm2530, %v1808, 0
        %v2550 = vsel %vm2530, %v1811, 0
        %v2553 = vsel %vm2530, %v1813, 0
        %v2556 = vsel %vm2530, %v2057, 0
        %v2559 = vsel %vm2530, %v2059, 0
        %v2562 = vsel %vm2530, %v2062, 0
        %v2565 = vsel %vm2530, %v2064, 0
        %v2568 = vsel %vm2530, %v2067, 0
        %v2571 = vsel %vm2530, %v2069, 0
        %v2574 = vsel %vm2530, %v2072, 0
        %v2577 = vsel %vm2530, %v2074, 0
        %2579 = vmatpush.xpose.msra.mxu0 0.0
        %2580 = vmatpush.xpose.msra.mxu0 0.0
        %2581 = vmatpush.xpose.msra.mxu0 0.0
        %2582 = vmatpush.xpose.msra.mxu0 0.0
        %2583 = vmatpush.xpose.msra.mxu0 0.0
        %2584 = vmatpush.xpose.msra.mxu0 0.0
        %2585 = vmatpush.xpose.msra.mxu0 0.0
        %2586 = vmatpush.xpose.msra.mxu0 0.0
        %2587 = vmatpush.xpose.msra.mxu0 %v2577
        %2588 = vmatpush.xpose.msra.mxu0 %v2574
        %2589 = vmatpush.xpose.msra.mxu0 %v2571
        %2590 = vmatpush.xpose.msra.mxu0 %v2568
        %2591 = vmatpush.xpose.msra.mxu0 %v2565
        %2592 = vmatpush.xpose.msra.mxu0 %v2562
        %2593 = vmatpush.xpose.msra.mxu0 %v2559
        %2594 = vmatpush.xpose.msra.mxu0 %v2556
        %2595 = vmatmul.f32.gmra.mxu0 %v2532
        %v2596 = vpop.f32.mrf.mxu0
        %v2597 = vadd.f32 0.0, %v2596
        %2598 = vmatmul.f32.gmra.mxu0 %v2535
        %v2599 = vpop.f32.mrf.mxu0
        %v2600 = vadd.f32 0.0, %v2599
        %2601 = vmatmul.f32.gmra.mxu0 %v2538
        %v2602 = vpop.f32.mrf.mxu0
        %v2603 = vadd.f32 0.0, %v2602
        %2604 = vmatmul.f32.gmra.mxu0 %v2541
        %v2605 = vpop.f32.mrf.mxu0
        %v2606 = vadd.f32 0.0, %v2605
        %2607 = vmatmul.f32.gmra.mxu0 %v2544
        %v2608 = vpop.f32.mrf.mxu0
        %v2609 = vadd.f32 0.0, %v2608
        %2610 = vmatmul.f32.gmra.mxu0 %v2547
        %v2611 = vpop.f32.mrf.mxu0
        %v2612 = vadd.f32 0.0, %v2611
        %2613 = vmatmul.f32.gmra.mxu0 %v2550
        %v2614 = vpop.f32.mrf.mxu0
        %v2615 = vadd.f32 0.0, %v2614
        %2616 = vmatmul.f32.gmra.mxu0 %v2553
        %v2617 = vpop.f32.mrf.mxu0
        %v2618 = vadd.f32 0.0, %v2617
        %2619 = vdwg.mxu0
        %v2620 = vmul.f32 %v2597, 0.125
        %v2621 = vmul.f32 %v2600, 0.125
        %v2622 = vmul.f32 %v2603, 0.125
        %v2623 = vmul.f32 %v2606, 0.125
        %v2624 = vmul.f32 %v2609, 0.125
        %v2625 = vmul.f32 %v2612, 0.125
        %v2626 = vmul.f32 %v2615, 0.125
        %v2627 = vmul.f32 %v2618, 0.125
        %v2628 = vsel %vm2522, %v2620, -1e+30
        %v2629 = vsel %vm2523, %v2621, -1e+30
        %v2630 = vsel %vm2524, %v2622, -1e+30
        %v2631 = vsel %vm2525, %v2623, -1e+30
        %v2632 = vsel %vm2526, %v2624, -1e+30
        %v2633 = vsel %vm2527, %v2625, -1e+30
        %v2634 = vsel %vm2528, %v2626, -1e+30
        %v2635 = vsel %vm2529, %v2627, -1e+30
        %v2636 = vsel %vm2530, %v2628, -inf
        %2637 = vmax.xlane.f32.xlu0 %v2636
        %v2638 = vpop.xlane.xlu0 %2637
        %v2639 = vsel %vm2530, %v2629, -inf
        %2640 = vmax.xlane.f32.xlu0 %v2639
        %v2641 = vpop.xlane.xlu0 %2640
        %v2642 = vsel %vm2530, %v2630, -inf
        %2643 = vmax.xlane.f32.xlu0 %v2642
        %v2644 = vpop.xlane.xlu0 %2643
        %v2645 = vsel %vm2530, %v2631, -inf
        %2646 = vmax.xlane.f32.xlu0 %v2645
        %v2647 = vpop.xlane.xlu0 %2646
        %v2648 = vsel %vm2530, %v2632, -inf
        %2649 = vmax.xlane.f32.xlu0 %v2648
        %v2650 = vpop.xlane.xlu0 %2649
        %v2651 = vsel %vm2530, %v2633, -inf
        %2652 = vmax.xlane.f32.xlu0 %v2651
        %v2653 = vpop.xlane.xlu0 %2652
        %v2654 = vsel %vm2530, %v2634, -inf
        %2655 = vmax.xlane.f32.xlu0 %v2654
        %v2656 = vpop.xlane.xlu0 %2655
        %v2657 = vsel %vm2530, %v2635, -inf
        %2658 = vmax.xlane.f32.xlu0 %v2657
        %v2659 = vpop.xlane.xlu0 %2658
        %v2660 = vsub.f32 %v2628, %v2638
        %v2661 = vsub.f32 %v2629, %v2641
        %v2662 = vsub.f32 %v2630, %v2644
        %v2663 = vsub.f32 %v2631, %v2647
        %v2664 = vsub.f32 %v2632, %v2650
        %v2665 = vsub.f32 %v2633, %v2653
        %v2666 = vsub.f32 %v2634, %v2656
        %v2667 = vsub.f32 %v2635, %v2659
        %v2668 = vmul.f32 %v2660, 1.442695
        %v2669 = vpow.pop %v2668
        %v2670 = vmul.f32 %v2661, 1.442695
        %v2671 = vpow.pop %v2670
        %v2672 = vmul.f32 %v2662, 1.442695
        %v2673 = vpow.pop %v2672
        %v2674 = vmul.f32 %v2663, 1.442695
        %v2675 = vpow.pop %v2674
        %v2676 = vmul.f32 %v2664, 1.442695
        %v2677 = vpow.pop %v2676
        %v2678 = vmul.f32 %v2665, 1.442695
        %v2679 = vpow.pop %v2678
        %v2680 = vmul.f32 %v2666, 1.442695
        %v2681 = vpow.pop %v2680
        %v2682 = vmul.f32 %v2667, 1.442695
        %v2683 = vpow.pop %v2682
        %v2684 = vsel %vm2530, %v2669, 0.0
        %2685 = vadd.xlane.f32.xlu0 %v2684
        %v2686 = vpop.xlane.xlu0 %2685
        %v2687 = vsel %vm2530, %v2671, 0.0
        %2688 = vadd.xlane.f32.xlu0 %v2687
        %v2689 = vpop.xlane.xlu0 %2688
        %v2690 = vsel %vm2530, %v2673, 0.0
        %2691 = vadd.xlane.f32.xlu0 %v2690
        %v2692 = vpop.xlane.xlu0 %2691
        %v2693 = vsel %vm2530, %v2675, 0.0
        %2694 = vadd.xlane.f32.xlu0 %v2693
        %v2695 = vpop.xlane.xlu0 %2694
        %v2696 = vsel %vm2530, %v2677, 0.0
        %2697 = vadd.xlane.f32.xlu0 %v2696
        %v2698 = vpop.xlane.xlu0 %2697
        %v2699 = vsel %vm2530, %v2679, 0.0
        %2700 = vadd.xlane.f32.xlu0 %v2699
        %v2701 = vpop.xlane.xlu0 %2700
        %v2702 = vsel %vm2530, %v2681, 0.0
        %2703 = vadd.xlane.f32.xlu0 %v2702
        %v2704 = vpop.xlane.xlu0 %2703
        %v2705 = vsel %vm2530, %v2683, 0.0
        %2706 = vadd.xlane.f32.xlu0 %v2705
        %v2707 = vpop.xlane.xlu0 %2706
        %v2708 = vrcp.pop %v2686
        %v2709 = vrcp.pop %v2689
        %v2710 = vrcp.pop %v2692
        %v2711 = vrcp.pop %v2695
        %v2712 = vrcp.pop %v2698
        %v2713 = vrcp.pop %v2701
        %v2714 = vrcp.pop %v2704
        %v2715 = vrcp.pop %v2707
        %v2716 = vmul.f32 %v2669, %v2708
        %v2717 = vmul.f32 %v2671, %v2709
        %v2718 = vmul.f32 %v2673, %v2710
        %v2719 = vmul.f32 %v2675, %v2711
        %v2720 = vmul.f32 %v2677, %v2712
        %v2721 = vmul.f32 %v2679, %v2713
        %v2722 = vmul.f32 %v2681, %v2714
        %v2723 = vmul.f32 %v2683, %v2715
        %v2725 = vsel %vm2530, %v2716, 0
        %v2728 = vsel %vm2530, %v2717, 0
        %v2731 = vsel %vm2530, %v2718, 0
        %v2734 = vsel %vm2530, %v2719, 0
        %v2737 = vsel %vm2530, %v2720, 0
        %v2740 = vsel %vm2530, %v2721, 0
        %v2743 = vsel %vm2530, %v2722, 0
        %v2746 = vsel %vm2530, %v2723, 0
        %2748 = vmatpush.msra.mxu0 0.0
        %2749 = vmatpush.msra.mxu0 0.0
        %2750 = vmatpush.msra.mxu0 0.0
        %2751 = vmatpush.msra.mxu0 0.0
        %2752 = vmatpush.msra.mxu0 0.0
        %2753 = vmatpush.msra.mxu0 0.0
        %2754 = vmatpush.msra.mxu0 0.0
        %2755 = vmatpush.msra.mxu0 0.0
        %2756 = vmatpush.msra.mxu0 %v2335
        %2757 = vmatpush.msra.mxu0 %v2333
        %2758 = vmatpush.msra.mxu0 %v2330
        %2759 = vmatpush.msra.mxu0 %v2328
        %2760 = vmatpush.msra.mxu0 %v2325
        %2761 = vmatpush.msra.mxu0 %v2323
        %2762 = vmatpush.msra.mxu0 %v2320
        %2763 = vmatpush.msra.mxu0 %v2318
        %2764 = vmatmul.f32.gmra.mxu0 %v2725
        %v2765 = vpop.f32.mrf.mxu0
        %v2766 = vadd.f32 0.0, %v2765
        %2767 = vmatmul.f32.gmra.mxu0 %v2728
        %v2768 = vpop.f32.mrf.mxu0
        %v2769 = vadd.f32 0.0, %v2768
        %2770 = vmatmul.f32.gmra.mxu0 %v2731
        %v2771 = vpop.f32.mrf.mxu0
        %v2772 = vadd.f32 0.0, %v2771
        %2773 = vmatmul.f32.gmra.mxu0 %v2734
        %v2774 = vpop.f32.mrf.mxu0
        %v2775 = vadd.f32 0.0, %v2774
        %2776 = vmatmul.f32.gmra.mxu0 %v2737
        %v2777 = vpop.f32.mrf.mxu0
        %v2778 = vadd.f32 0.0, %v2777
        %2779 = vmatmul.f32.gmra.mxu0 %v2740
        %v2780 = vpop.f32.mrf.mxu0
        %v2781 = vadd.f32 0.0, %v2780
        %2782 = vmatmul.f32.gmra.mxu0 %v2743
        %v2783 = vpop.f32.mrf.mxu0
        %v2784 = vadd.f32 0.0, %v2783
        %2785 = vmatmul.f32.gmra.mxu0 %v2746
        %v2786 = vpop.f32.mrf.mxu0
        %v2787 = vadd.f32 0.0, %v2786
        %2788 = vdwg.mxu0
        %2789 = vrot.lane.b32.xlu0 %v1796, 64
        %v2790 = vpop.permute.xlu0 %2789
        %2791 = vrot.lane.b32.xlu0 %v1798, 64
        %v2792 = vpop.permute.xlu0 %2791
        %2793 = vrot.lane.b32.xlu0 %v1801, 64
        %v2794 = vpop.permute.xlu0 %2793
        %2795 = vrot.lane.b32.xlu0 %v1803, 64
        %v2796 = vpop.permute.xlu0 %2795
        %2797 = vrot.lane.b32.xlu0 %v1806, 64
        %v2798 = vpop.permute.xlu0 %2797
        %2799 = vrot.lane.b32.xlu0 %v1808, 64
        %v2800 = vpop.permute.xlu0 %2799
        %2801 = vrot.lane.b32.xlu0 %v1811, 64
        %v2802 = vpop.permute.xlu0 %2801
        %2803 = vrot.lane.b32.xlu0 %v1813, 64
        %v2804 = vpop.permute.xlu0 %2803
        %2805 = vrot.lane.b32.xlu0 %v2057, 64
        %v2806 = vpop.permute.xlu0 %2805
        %2807 = vrot.lane.b32.xlu0 %v2059, 64
        %v2808 = vpop.permute.xlu0 %2807
        %2809 = vrot.lane.b32.xlu0 %v2062, 64
        %v2810 = vpop.permute.xlu0 %2809
        %2811 = vrot.lane.b32.xlu0 %v2064, 64
        %v2812 = vpop.permute.xlu0 %2811
        %2813 = vrot.lane.b32.xlu0 %v2067, 64
        %v2814 = vpop.permute.xlu0 %2813
        %2815 = vrot.lane.b32.xlu0 %v2069, 64
        %v2816 = vpop.permute.xlu0 %2815
        %2817 = vrot.lane.b32.xlu0 %v2072, 64
        %v2818 = vpop.permute.xlu0 %2817
        %2819 = vrot.lane.b32.xlu0 %v2074, 64
        %v2820 = vpop.permute.xlu0 %2819
        %v2821 = vsel %vm2530, %v2790, 0
        %v2823 = vsel %vm2530, %v2792, 0
        %v2825 = vsel %vm2530, %v2794, 0
        %v2827 = vsel %vm2530, %v2796, 0
        %v2829 = vsel %vm2530, %v2798, 0
        %v2831 = vsel %vm2530, %v2800, 0
        %v2833 = vsel %vm2530, %v2802, 0
        %v2835 = vsel %vm2530, %v2804, 0
        %v2837 = vsel %vm2530, %v2806, 0
        %v2839 = vsel %vm2530, %v2808, 0
        %v2841 = vsel %vm2530, %v2810, 0
        %v2843 = vsel %vm2530, %v2812, 0
        %v2845 = vsel %vm2530, %v2814, 0
        %v2847 = vsel %vm2530, %v2816, 0
        %v2849 = vsel %vm2530, %v2818, 0
        %v2851 = vsel %vm2530, %v2820, 0
        %2853 = vmatpush.xpose.msra.mxu0 0.0
        %2854 = vmatpush.xpose.msra.mxu0 0.0
        %2855 = vmatpush.xpose.msra.mxu0 0.0
        %2856 = vmatpush.xpose.msra.mxu0 0.0
        %2857 = vmatpush.xpose.msra.mxu0 0.0
        %2858 = vmatpush.xpose.msra.mxu0 0.0
        %2859 = vmatpush.xpose.msra.mxu0 0.0
        %2860 = vmatpush.xpose.msra.mxu0 0.0
        %2861 = vmatpush.xpose.msra.mxu0 %v2851
        %2862 = vmatpush.xpose.msra.mxu0 %v2849
        %2863 = vmatpush.xpose.msra.mxu0 %v2847
        %2864 = vmatpush.xpose.msra.mxu0 %v2845
        %2865 = vmatpush.xpose.msra.mxu0 %v2843
        %2866 = vmatpush.xpose.msra.mxu0 %v2841
        %2867 = vmatpush.xpose.msra.mxu0 %v2839
        %2868 = vmatpush.xpose.msra.mxu0 %v2837
        %2869 = vmatmul.f32.gmra.mxu0 %v2821
        %v2870 = vpop.f32.mrf.mxu0
        %v2871 = vadd.f32 0.0, %v2870
        %2872 = vmatmul.f32.gmra.mxu0 %v2823
        %v2873 = vpop.f32.mrf.mxu0
        %v2874 = vadd.f32 0.0, %v2873
        %2875 = vmatmul.f32.gmra.mxu0 %v2825
        %v2876 = vpop.f32.mrf.mxu0
        %v2877 = vadd.f32 0.0, %v2876
        %2878 = vmatmul.f32.gmra.mxu0 %v2827
        %v2879 = vpop.f32.mrf.mxu0
        %v2880 = vadd.f32 0.0, %v2879
        %2881 = vmatmul.f32.gmra.mxu0 %v2829
        %v2882 = vpop.f32.mrf.mxu0
        %v2883 = vadd.f32 0.0, %v2882
        %2884 = vmatmul.f32.gmra.mxu0 %v2831
        %v2885 = vpop.f32.mrf.mxu0
        %v2886 = vadd.f32 0.0, %v2885
        %2887 = vmatmul.f32.gmra.mxu0 %v2833
        %v2888 = vpop.f32.mrf.mxu0
        %v2889 = vadd.f32 0.0, %v2888
        %2890 = vmatmul.f32.gmra.mxu0 %v2835
        %v2891 = vpop.f32.mrf.mxu0
        %v2892 = vadd.f32 0.0, %v2891
        %2893 = vdwg.mxu0
        %v2894 = vmul.f32 %v2871, 0.125
        %v2895 = vmul.f32 %v2874, 0.125
        %v2896 = vmul.f32 %v2877, 0.125
        %v2897 = vmul.f32 %v2880, 0.125
        %v2898 = vmul.f32 %v2883, 0.125
        %v2899 = vmul.f32 %v2886, 0.125
        %v2900 = vmul.f32 %v2889, 0.125
        %v2901 = vmul.f32 %v2892, 0.125
        %v2902 = vsel %vm2522, %v2894, -1e+30
        %v2903 = vsel %vm2523, %v2895, -1e+30
        %v2904 = vsel %vm2524, %v2896, -1e+30
        %v2905 = vsel %vm2525, %v2897, -1e+30
        %v2906 = vsel %vm2526, %v2898, -1e+30
        %v2907 = vsel %vm2527, %v2899, -1e+30
        %v2908 = vsel %vm2528, %v2900, -1e+30
        %v2909 = vsel %vm2529, %v2901, -1e+30
        %v2910 = vsel %vm2530, %v2902, -inf
        %2911 = vmax.xlane.f32.xlu0 %v2910
        %v2912 = vpop.xlane.xlu0 %2911
        %v2913 = vsel %vm2530, %v2903, -inf
        %2914 = vmax.xlane.f32.xlu0 %v2913
        %v2915 = vpop.xlane.xlu0 %2914
        %v2916 = vsel %vm2530, %v2904, -inf
        %2917 = vmax.xlane.f32.xlu0 %v2916
        %v2918 = vpop.xlane.xlu0 %2917
        %v2919 = vsel %vm2530, %v2905, -inf
        %2920 = vmax.xlane.f32.xlu0 %v2919
        %v2921 = vpop.xlane.xlu0 %2920
        %v2922 = vsel %vm2530, %v2906, -inf
        %2923 = vmax.xlane.f32.xlu0 %v2922
        %v2924 = vpop.xlane.xlu0 %2923
        %v2925 = vsel %vm2530, %v2907, -inf
        %2926 = vmax.xlane.f32.xlu0 %v2925
        %v2927 = vpop.xlane.xlu0 %2926
        %v2928 = vsel %vm2530, %v2908, -inf
        %2929 = vmax.xlane.f32.xlu0 %v2928
        %v2930 = vpop.xlane.xlu0 %2929
        %v2931 = vsel %vm2530, %v2909, -inf
        %2932 = vmax.xlane.f32.xlu0 %v2931
        %v2933 = vpop.xlane.xlu0 %2932
        %v2934 = vsub.f32 %v2902, %v2912
        %v2935 = vsub.f32 %v2903, %v2915
        %v2936 = vsub.f32 %v2904, %v2918
        %v2937 = vsub.f32 %v2905, %v2921
        %v2938 = vsub.f32 %v2906, %v2924
        %v2939 = vsub.f32 %v2907, %v2927
        %v2940 = vsub.f32 %v2908, %v2930
        %v2941 = vsub.f32 %v2909, %v2933
        %v2942 = vmul.f32 %v2934, 1.442695
        %v2943 = vpow.pop %v2942
        %v2944 = vmul.f32 %v2935, 1.442695
        %v2945 = vpow.pop %v2944
        %v2946 = vmul.f32 %v2936, 1.442695
        %v2947 = vpow.pop %v2946
        %v2948 = vmul.f32 %v2937, 1.442695
        %v2949 = vpow.pop %v2948
        %v2950 = vmul.f32 %v2938, 1.442695
        %v2951 = vpow.pop %v2950
        %v2952 = vmul.f32 %v2939, 1.442695
        %v2953 = vpow.pop %v2952
        %v2954 = vmul.f32 %v2940, 1.442695
        %v2955 = vpow.pop %v2954
        %v2956 = vmul.f32 %v2941, 1.442695
        %v2957 = vpow.pop %v2956
        %v2958 = vsel %vm2530, %v2943, 0.0
        %2959 = vadd.xlane.f32.xlu0 %v2958
        %v2960 = vpop.xlane.xlu0 %2959
        %v2961 = vsel %vm2530, %v2945, 0.0
        %2962 = vadd.xlane.f32.xlu0 %v2961
        %v2963 = vpop.xlane.xlu0 %2962
        %v2964 = vsel %vm2530, %v2947, 0.0
        %2965 = vadd.xlane.f32.xlu0 %v2964
        %v2966 = vpop.xlane.xlu0 %2965
        %v2967 = vsel %vm2530, %v2949, 0.0
        %2968 = vadd.xlane.f32.xlu0 %v2967
        %v2969 = vpop.xlane.xlu0 %2968
        %v2970 = vsel %vm2530, %v2951, 0.0
        %2971 = vadd.xlane.f32.xlu0 %v2970
        %v2972 = vpop.xlane.xlu0 %2971
        %v2973 = vsel %vm2530, %v2953, 0.0
        %2974 = vadd.xlane.f32.xlu0 %v2973
        %v2975 = vpop.xlane.xlu0 %2974
        %v2976 = vsel %vm2530, %v2955, 0.0
        %2977 = vadd.xlane.f32.xlu0 %v2976
        %v2978 = vpop.xlane.xlu0 %2977
        %v2979 = vsel %vm2530, %v2957, 0.0
        %2980 = vadd.xlane.f32.xlu0 %v2979
        %v2981 = vpop.xlane.xlu0 %2980
        %v2982 = vrcp.pop %v2960
        %v2983 = vrcp.pop %v2963
        %v2984 = vrcp.pop %v2966
        %v2985 = vrcp.pop %v2969
        %v2986 = vrcp.pop %v2972
        %v2987 = vrcp.pop %v2975
        %v2988 = vrcp.pop %v2978
        %v2989 = vrcp.pop %v2981
        %v2990 = vmul.f32 %v2943, %v2982
        %v2991 = vmul.f32 %v2945, %v2983
        %v2992 = vmul.f32 %v2947, %v2984
        %v2993 = vmul.f32 %v2949, %v2985
        %v2994 = vmul.f32 %v2951, %v2986
        %v2995 = vmul.f32 %v2953, %v2987
        %v2996 = vmul.f32 %v2955, %v2988
        %v2997 = vmul.f32 %v2957, %v2989
        %3006 = vrot.lane.b32.xlu0 %v2318, 64
        %v3007 = vpop.permute.xlu0 %3006
        %3008 = vrot.lane.b32.xlu0 %v2320, 64
        %v3009 = vpop.permute.xlu0 %3008
        %3010 = vrot.lane.b32.xlu0 %v2323, 64
        %v3011 = vpop.permute.xlu0 %3010
        %3012 = vrot.lane.b32.xlu0 %v2325, 64
        %v3013 = vpop.permute.xlu0 %3012
        %3014 = vrot.lane.b32.xlu0 %v2328, 64
        %v3015 = vpop.permute.xlu0 %3014
        %3016 = vrot.lane.b32.xlu0 %v2330, 64
        %v3017 = vpop.permute.xlu0 %3016
        %3018 = vrot.lane.b32.xlu0 %v2333, 64
        %v3019 = vpop.permute.xlu0 %3018
        %3020 = vrot.lane.b32.xlu0 %v2335, 64
        %v3021 = vpop.permute.xlu0 %3020
        %v3031 = vsel %vm2530, %v2990, 0
        %v3034 = vsel %vm2530, %v2991, 0
        %v3037 = vsel %vm2530, %v2992, 0
        %v3040 = vsel %vm2530, %v2993, 0
        %v3043 = vsel %vm2530, %v2994, 0
        %v3046 = vsel %vm2530, %v2995, 0
        %v3049 = vsel %vm2530, %v2996, 0
        %v3052 = vsel %vm2530, %v2997, 0
        %3054 = vmatpush.msra.mxu0 0.0
        %3055 = vmatpush.msra.mxu0 0.0
        %3056 = vmatpush.msra.mxu0 0.0
        %3057 = vmatpush.msra.mxu0 0.0
        %3058 = vmatpush.msra.mxu0 0.0
        %3059 = vmatpush.msra.mxu0 0.0
        %3060 = vmatpush.msra.mxu0 0.0
        %3061 = vmatpush.msra.mxu0 0.0
        %3062 = vmatpush.msra.mxu0 %v3021
        %3063 = vmatpush.msra.mxu0 %v3019
        %3064 = vmatpush.msra.mxu0 %v3017
        %3065 = vmatpush.msra.mxu0 %v3015
        %3066 = vmatpush.msra.mxu0 %v3013
        %3067 = vmatpush.msra.mxu0 %v3011
        %3068 = vmatpush.msra.mxu0 %v3009
        %3069 = vmatpush.msra.mxu0 %v3007
        %3070 = vmatmul.f32.gmra.mxu0 %v3031
        %v3071 = vpop.f32.mrf.mxu0
        %v3072 = vadd.f32 0.0, %v3071
        %3073 = vmatmul.f32.gmra.mxu0 %v3034
        %v3074 = vpop.f32.mrf.mxu0
        %v3075 = vadd.f32 0.0, %v3074
        %3076 = vmatmul.f32.gmra.mxu0 %v3037
        %v3077 = vpop.f32.mrf.mxu0
        %v3078 = vadd.f32 0.0, %v3077
        %3079 = vmatmul.f32.gmra.mxu0 %v3040
        %v3080 = vpop.f32.mrf.mxu0
        %v3081 = vadd.f32 0.0, %v3080
        %3082 = vmatmul.f32.gmra.mxu0 %v3043
        %v3083 = vpop.f32.mrf.mxu0
        %v3084 = vadd.f32 0.0, %v3083
        %3085 = vmatmul.f32.gmra.mxu0 %v3046
        %v3086 = vpop.f32.mrf.mxu0
        %v3087 = vadd.f32 0.0, %v3086
        %3088 = vmatmul.f32.gmra.mxu0 %v3049
        %v3089 = vpop.f32.mrf.mxu0
        %v3090 = vadd.f32 0.0, %v3089
        %3091 = vmatmul.f32.gmra.mxu0 %v3052
        %v3092 = vpop.f32.mrf.mxu0
        %v3093 = vadd.f32 0.0, %v3092
        %3094 = vdwg.mxu0
        %v3096 = vsel %vm2530, %v1883, 0
        %v3099 = vsel %vm2530, %v1885, 0
        %v3102 = vsel %vm2530, %v1888, 0
        %v3105 = vsel %vm2530, %v1890, 0
        %v3108 = vsel %vm2530, %v1893, 0
        %v3111 = vsel %vm2530, %v1895, 0
        %v3114 = vsel %vm2530, %v1898, 0
        %v3117 = vsel %vm2530, %v1900, 0
        %v3120 = vsel %vm2530, %v2144, 0
        %v3123 = vsel %vm2530, %v2146, 0
        %v3126 = vsel %vm2530, %v2149, 0
        %v3129 = vsel %vm2530, %v2151, 0
        %v3132 = vsel %vm2530, %v2154, 0
        %v3135 = vsel %vm2530, %v2156, 0
        %v3138 = vsel %vm2530, %v2159, 0
        %v3141 = vsel %vm2530, %v2161, 0
        %3143 = vmatpush.xpose.msra.mxu0 0.0
        %3144 = vmatpush.xpose.msra.mxu0 0.0
        %3145 = vmatpush.xpose.msra.mxu0 0.0
        %3146 = vmatpush.xpose.msra.mxu0 0.0
        %3147 = vmatpush.xpose.msra.mxu0 0.0
        %3148 = vmatpush.xpose.msra.mxu0 0.0
        %3149 = vmatpush.xpose.msra.mxu0 0.0
        %3150 = vmatpush.xpose.msra.mxu0 0.0
        %3151 = vmatpush.xpose.msra.mxu0 %v3141
        %3152 = vmatpush.xpose.msra.mxu0 %v3138
        %3153 = vmatpush.xpose.msra.mxu0 %v3135
        %3154 = vmatpush.xpose.msra.mxu0 %v3132
        %3155 = vmatpush.xpose.msra.mxu0 %v3129
        %3156 = vmatpush.xpose.msra.mxu0 %v3126
        %3157 = vmatpush.xpose.msra.mxu0 %v3123
        %3158 = vmatpush.xpose.msra.mxu0 %v3120
        %3159 = vmatmul.f32.gmra.mxu0 %v3096
        %v3160 = vpop.f32.mrf.mxu0
        %v3161 = vadd.f32 0.0, %v3160
        %3162 = vmatmul.f32.gmra.mxu0 %v3099
        %v3163 = vpop.f32.mrf.mxu0
        %v3164 = vadd.f32 0.0, %v3163
        %3165 = vmatmul.f32.gmra.mxu0 %v3102
        %v3166 = vpop.f32.mrf.mxu0
        %v3167 = vadd.f32 0.0, %v3166
        %3168 = vmatmul.f32.gmra.mxu0 %v3105
        %v3169 = vpop.f32.mrf.mxu0
        %v3170 = vadd.f32 0.0, %v3169
        %3171 = vmatmul.f32.gmra.mxu0 %v3108
        %v3172 = vpop.f32.mrf.mxu0
        %v3173 = vadd.f32 0.0, %v3172
        %3174 = vmatmul.f32.gmra.mxu0 %v3111
        %v3175 = vpop.f32.mrf.mxu0
        %v3176 = vadd.f32 0.0, %v3175
        %3177 = vmatmul.f32.gmra.mxu0 %v3114
        %v3178 = vpop.f32.mrf.mxu0
        %v3179 = vadd.f32 0.0, %v3178
        %3180 = vmatmul.f32.gmra.mxu0 %v3117
        %v3181 = vpop.f32.mrf.mxu0
        %v3182 = vadd.f32 0.0, %v3181
        %3183 = vdwg.mxu0
        %v3184 = vmul.f32 %v3161, 0.125
        %v3185 = vmul.f32 %v3164, 0.125
        %v3186 = vmul.f32 %v3167, 0.125
        %v3187 = vmul.f32 %v3170, 0.125
        %v3188 = vmul.f32 %v3173, 0.125
        %v3189 = vmul.f32 %v3176, 0.125
        %v3190 = vmul.f32 %v3179, 0.125
        %v3191 = vmul.f32 %v3182, 0.125
        %v3192 = vsel %vm2522, %v3184, -1e+30
        %v3193 = vsel %vm2523, %v3185, -1e+30
        %v3194 = vsel %vm2524, %v3186, -1e+30
        %v3195 = vsel %vm2525, %v3187, -1e+30
        %v3196 = vsel %vm2526, %v3188, -1e+30
        %v3197 = vsel %vm2527, %v3189, -1e+30
        %v3198 = vsel %vm2528, %v3190, -1e+30
        %v3199 = vsel %vm2529, %v3191, -1e+30
        %v3200 = vsel %vm2530, %v3192, -inf
        %3201 = vmax.xlane.f32.xlu0 %v3200
        %v3202 = vpop.xlane.xlu0 %3201
        %v3203 = vsel %vm2530, %v3193, -inf
        %3204 = vmax.xlane.f32.xlu0 %v3203
        %v3205 = vpop.xlane.xlu0 %3204
        %v3206 = vsel %vm2530, %v3194, -inf
        %3207 = vmax.xlane.f32.xlu0 %v3206
        %v3208 = vpop.xlane.xlu0 %3207
        %v3209 = vsel %vm2530, %v3195, -inf
        %3210 = vmax.xlane.f32.xlu0 %v3209
        %v3211 = vpop.xlane.xlu0 %3210
        %v3212 = vsel %vm2530, %v3196, -inf
        %3213 = vmax.xlane.f32.xlu0 %v3212
        %v3214 = vpop.xlane.xlu0 %3213
        %v3215 = vsel %vm2530, %v3197, -inf
        %3216 = vmax.xlane.f32.xlu0 %v3215
        %v3217 = vpop.xlane.xlu0 %3216
        %v3218 = vsel %vm2530, %v3198, -inf
        %3219 = vmax.xlane.f32.xlu0 %v3218
        %v3220 = vpop.xlane.xlu0 %3219
        %v3221 = vsel %vm2530, %v3199, -inf
        %3222 = vmax.xlane.f32.xlu0 %v3221
        %v3223 = vpop.xlane.xlu0 %3222
        %v3224 = vsub.f32 %v3192, %v3202
        %v3225 = vsub.f32 %v3193, %v3205
        %v3226 = vsub.f32 %v3194, %v3208
        %v3227 = vsub.f32 %v3195, %v3211
        %v3228 = vsub.f32 %v3196, %v3214
        %v3229 = vsub.f32 %v3197, %v3217
        %v3230 = vsub.f32 %v3198, %v3220
        %v3231 = vsub.f32 %v3199, %v3223
        %v3232 = vmul.f32 %v3224, 1.442695
        %v3233 = vpow.pop %v3232
        %v3234 = vmul.f32 %v3225, 1.442695
        %v3235 = vpow.pop %v3234
        %v3236 = vmul.f32 %v3226, 1.442695
        %v3237 = vpow.pop %v3236
        %v3238 = vmul.f32 %v3227, 1.442695
        %v3239 = vpow.pop %v3238
        %v3240 = vmul.f32 %v3228, 1.442695
        %v3241 = vpow.pop %v3240
        %v3242 = vmul.f32 %v3229, 1.442695
        %v3243 = vpow.pop %v3242
        %v3244 = vmul.f32 %v3230, 1.442695
        %v3245 = vpow.pop %v3244
        %v3246 = vmul.f32 %v3231, 1.442695
        %v3247 = vpow.pop %v3246
        %v3248 = vsel %vm2530, %v3233, 0.0
        %3249 = vadd.xlane.f32.xlu0 %v3248
        %v3250 = vpop.xlane.xlu0 %3249
        %v3251 = vsel %vm2530, %v3235, 0.0
        %3252 = vadd.xlane.f32.xlu0 %v3251
        %v3253 = vpop.xlane.xlu0 %3252
        %v3254 = vsel %vm2530, %v3237, 0.0
        %3255 = vadd.xlane.f32.xlu0 %v3254
        %v3256 = vpop.xlane.xlu0 %3255
        %v3257 = vsel %vm2530, %v3239, 0.0
        %3258 = vadd.xlane.f32.xlu0 %v3257
        %v3259 = vpop.xlane.xlu0 %3258
        %v3260 = vsel %vm2530, %v3241, 0.0
        %3261 = vadd.xlane.f32.xlu0 %v3260
        %v3262 = vpop.xlane.xlu0 %3261
        %v3263 = vsel %vm2530, %v3243, 0.0
        %3264 = vadd.xlane.f32.xlu0 %v3263
        %v3265 = vpop.xlane.xlu0 %3264
        %v3266 = vsel %vm2530, %v3245, 0.0
        %3267 = vadd.xlane.f32.xlu0 %v3266
        %v3268 = vpop.xlane.xlu0 %3267
        %v3269 = vsel %vm2530, %v3247, 0.0
        %3270 = vadd.xlane.f32.xlu0 %v3269
        %v3271 = vpop.xlane.xlu0 %3270
        %v3272 = vrcp.pop %v3250
        %v3273 = vrcp.pop %v3253
        %v3274 = vrcp.pop %v3256
        %v3275 = vrcp.pop %v3259
        %v3276 = vrcp.pop %v3262
        %v3277 = vrcp.pop %v3265
        %v3278 = vrcp.pop %v3268
        %v3279 = vrcp.pop %v3271
        %v3280 = vmul.f32 %v3233, %v3272
        %v3281 = vmul.f32 %v3235, %v3273
        %v3282 = vmul.f32 %v3237, %v3274
        %v3283 = vmul.f32 %v3239, %v3275
        %v3284 = vmul.f32 %v3241, %v3276
        %v3285 = vmul.f32 %v3243, %v3277
        %v3286 = vmul.f32 %v3245, %v3278
        %v3287 = vmul.f32 %v3247, %v3279
        %v3289 = vsel %vm2530, %v3280, 0
        %v3292 = vsel %vm2530, %v3281, 0
        %v3295 = vsel %vm2530, %v3282, 0
        %v3298 = vsel %vm2530, %v3283, 0
        %v3301 = vsel %vm2530, %v3284, 0
        %v3304 = vsel %vm2530, %v3285, 0
        %v3307 = vsel %vm2530, %v3286, 0
        %v3310 = vsel %vm2530, %v3287, 0
        %3312 = vmatpush.msra.mxu0 0.0
        %3313 = vmatpush.msra.mxu0 0.0
        %3314 = vmatpush.msra.mxu0 0.0
        %3315 = vmatpush.msra.mxu0 0.0
        %3316 = vmatpush.msra.mxu0 0.0
        %3317 = vmatpush.msra.mxu0 0.0
        %3318 = vmatpush.msra.mxu0 0.0
        %3319 = vmatpush.msra.mxu0 0.0
        %3320 = vmatpush.msra.mxu0 %v2422
        %3321 = vmatpush.msra.mxu0 %v2420
        %3322 = vmatpush.msra.mxu0 %v2417
        %3323 = vmatpush.msra.mxu0 %v2415
        %3324 = vmatpush.msra.mxu0 %v2412
        %3325 = vmatpush.msra.mxu0 %v2410
        %3326 = vmatpush.msra.mxu0 %v2407
        %3327 = vmatpush.msra.mxu0 %v2405
        %3328 = vmatmul.f32.gmra.mxu0 %v3289
        %v3329 = vpop.f32.mrf.mxu0
        %v3330 = vadd.f32 0.0, %v3329
        %3331 = vmatmul.f32.gmra.mxu0 %v3292
        %v3332 = vpop.f32.mrf.mxu0
        %v3333 = vadd.f32 0.0, %v3332
        %3334 = vmatmul.f32.gmra.mxu0 %v3295
        %v3335 = vpop.f32.mrf.mxu0
        %v3336 = vadd.f32 0.0, %v3335
        %3337 = vmatmul.f32.gmra.mxu0 %v3298
        %v3338 = vpop.f32.mrf.mxu0
        %v3339 = vadd.f32 0.0, %v3338
        %3340 = vmatmul.f32.gmra.mxu0 %v3301
        %v3341 = vpop.f32.mrf.mxu0
        %v3342 = vadd.f32 0.0, %v3341
        %3343 = vmatmul.f32.gmra.mxu0 %v3304
        %v3344 = vpop.f32.mrf.mxu0
        %v3345 = vadd.f32 0.0, %v3344
        %3346 = vmatmul.f32.gmra.mxu0 %v3307
        %v3347 = vpop.f32.mrf.mxu0
        %v3348 = vadd.f32 0.0, %v3347
        %3349 = vmatmul.f32.gmra.mxu0 %v3310
        %v3350 = vpop.f32.mrf.mxu0
        %v3351 = vadd.f32 0.0, %v3350
        %3352 = vdwg.mxu0
        %3353 = vrot.lane.b32.xlu0 %v1883, 64
        %v3354 = vpop.permute.xlu0 %3353
        %3355 = vrot.lane.b32.xlu0 %v1885, 64
        %v3356 = vpop.permute.xlu0 %3355
        %3357 = vrot.lane.b32.xlu0 %v1888, 64
        %v3358 = vpop.permute.xlu0 %3357
        %3359 = vrot.lane.b32.xlu0 %v1890, 64
        %v3360 = vpop.permute.xlu0 %3359
        %3361 = vrot.lane.b32.xlu0 %v1893, 64
        %v3362 = vpop.permute.xlu0 %3361
        %3363 = vrot.lane.b32.xlu0 %v1895, 64
        %v3364 = vpop.permute.xlu0 %3363
        %3365 = vrot.lane.b32.xlu0 %v1898, 64
        %v3366 = vpop.permute.xlu0 %3365
        %3367 = vrot.lane.b32.xlu0 %v1900, 64
        %v3368 = vpop.permute.xlu0 %3367
        %3369 = vrot.lane.b32.xlu0 %v2144, 64
        %v3370 = vpop.permute.xlu0 %3369
        %3371 = vrot.lane.b32.xlu0 %v2146, 64
        %v3372 = vpop.permute.xlu0 %3371
        %3373 = vrot.lane.b32.xlu0 %v2149, 64
        %v3374 = vpop.permute.xlu0 %3373
        %3375 = vrot.lane.b32.xlu0 %v2151, 64
        %v3376 = vpop.permute.xlu0 %3375
        %3377 = vrot.lane.b32.xlu0 %v2154, 64
        %v3378 = vpop.permute.xlu0 %3377
        %3379 = vrot.lane.b32.xlu0 %v2156, 64
        %v3380 = vpop.permute.xlu0 %3379
        %3381 = vrot.lane.b32.xlu0 %v2159, 64
        %v3382 = vpop.permute.xlu0 %3381
        %3383 = vrot.lane.b32.xlu0 %v2161, 64
        %v3384 = vpop.permute.xlu0 %3383
        %v3385 = vsel %vm2530, %v3354, 0
        %v3387 = vsel %vm2530, %v3356, 0
        %v3389 = vsel %vm2530, %v3358, 0
        %v3391 = vsel %vm2530, %v3360, 0
        %v3393 = vsel %vm2530, %v3362, 0
        %v3395 = vsel %vm2530, %v3364, 0
        %v3397 = vsel %vm2530, %v3366, 0
        %v3399 = vsel %vm2530, %v3368, 0
        %v3401 = vsel %vm2530, %v3370, 0
        %v3403 = vsel %vm2530, %v3372, 0
        %v3405 = vsel %vm2530, %v3374, 0
        %v3407 = vsel %vm2530, %v3376, 0
        %v3409 = vsel %vm2530, %v3378, 0
        %v3411 = vsel %vm2530, %v3380, 0
        %v3413 = vsel %vm2530, %v3382, 0
        %v3415 = vsel %vm2530, %v3384, 0
        %3417 = vmatpush.xpose.msra.mxu0 0.0
        %3418 = vmatpush.xpose.msra.mxu0 0.0
        %3419 = vmatpush.xpose.msra.mxu0 0.0
        %3420 = vmatpush.xpose.msra.mxu0 0.0
        %3421 = vmatpush.xpose.msra.mxu0 0.0
        %3422 = vmatpush.xpose.msra.mxu0 0.0
        %3423 = vmatpush.xpose.msra.mxu0 0.0
        %3424 = vmatpush.xpose.msra.mxu0 0.0
        %3425 = vmatpush.xpose.msra.mxu0 %v3415
        %3426 = vmatpush.xpose.msra.mxu0 %v3413
        %3427 = vmatpush.xpose.msra.mxu0 %v3411
        %3428 = vmatpush.xpose.msra.mxu0 %v3409
        %3429 = vmatpush.xpose.msra.mxu0 %v3407
        %3430 = vmatpush.xpose.msra.mxu0 %v3405
        %3431 = vmatpush.xpose.msra.mxu0 %v3403
        %3432 = vmatpush.xpose.msra.mxu0 %v3401
        %3433 = vmatmul.f32.gmra.mxu0 %v3385
        %v3434 = vpop.f32.mrf.mxu0
        %v3435 = vadd.f32 0.0, %v3434
        %3436 = vmatmul.f32.gmra.mxu0 %v3387
        %v3437 = vpop.f32.mrf.mxu0
        %v3438 = vadd.f32 0.0, %v3437
        %3439 = vmatmul.f32.gmra.mxu0 %v3389
        %v3440 = vpop.f32.mrf.mxu0
        %v3441 = vadd.f32 0.0, %v3440
        %3442 = vmatmul.f32.gmra.mxu0 %v3391
        %v3443 = vpop.f32.mrf.mxu0
        %v3444 = vadd.f32 0.0, %v3443
        %3445 = vmatmul.f32.gmra.mxu0 %v3393
        %v3446 = vpop.f32.mrf.mxu0
        %v3447 = vadd.f32 0.0, %v3446
        %3448 = vmatmul.f32.gmra.mxu0 %v3395
        %v3449 = vpop.f32.mrf.mxu0
        %v3450 = vadd.f32 0.0, %v3449
        %3451 = vmatmul.f32.gmra.mxu0 %v3397
        %v3452 = vpop.f32.mrf.mxu0
        %v3453 = vadd.f32 0.0, %v3452
        %3454 = vmatmul.f32.gmra.mxu0 %v3399
        %v3455 = vpop.f32.mrf.mxu0
        %v3456 = vadd.f32 0.0, %v3455
        %3457 = vdwg.mxu0
        %v3458 = vmul.f32 %v3435, 0.125
        %v3459 = vmul.f32 %v3438, 0.125
        %v3460 = vmul.f32 %v3441, 0.125
        %v3461 = vmul.f32 %v3444, 0.125
        %v3462 = vmul.f32 %v3447, 0.125
        %v3463 = vmul.f32 %v3450, 0.125
        %v3464 = vmul.f32 %v3453, 0.125
        %v3465 = vmul.f32 %v3456, 0.125
        %v3466 = vsel %vm2522, %v3458, -1e+30
        %v3467 = vsel %vm2523, %v3459, -1e+30
        %v3468 = vsel %vm2524, %v3460, -1e+30
        %v3469 = vsel %vm2525, %v3461, -1e+30
        %v3470 = vsel %vm2526, %v3462, -1e+30
        %v3471 = vsel %vm2527, %v3463, -1e+30
        %v3472 = vsel %vm2528, %v3464, -1e+30
        %v3473 = vsel %vm2529, %v3465, -1e+30
        %v3474 = vsel %vm2530, %v3466, -inf
        %3475 = vmax.xlane.f32.xlu0 %v3474
        %v3476 = vpop.xlane.xlu0 %3475
        %v3477 = vsel %vm2530, %v3467, -inf
        %3478 = vmax.xlane.f32.xlu0 %v3477
        %v3479 = vpop.xlane.xlu0 %3478
        %v3480 = vsel %vm2530, %v3468, -inf
        %3481 = vmax.xlane.f32.xlu0 %v3480
        %v3482 = vpop.xlane.xlu0 %3481
        %v3483 = vsel %vm2530, %v3469, -inf
        %3484 = vmax.xlane.f32.xlu0 %v3483
        %v3485 = vpop.xlane.xlu0 %3484
        %v3486 = vsel %vm2530, %v3470, -inf
        %3487 = vmax.xlane.f32.xlu0 %v3486
        %v3488 = vpop.xlane.xlu0 %3487
        %v3489 = vsel %vm2530, %v3471, -inf
        %3490 = vmax.xlane.f32.xlu0 %v3489
        %v3491 = vpop.xlane.xlu0 %3490
        %v3492 = vsel %vm2530, %v3472, -inf
        %3493 = vmax.xlane.f32.xlu0 %v3492
        %v3494 = vpop.xlane.xlu0 %3493
        %v3495 = vsel %vm2530, %v3473, -inf
        %3496 = vmax.xlane.f32.xlu0 %v3495
        %v3497 = vpop.xlane.xlu0 %3496
        %v3498 = vsub.f32 %v3466, %v3476
        %v3499 = vsub.f32 %v3467, %v3479
        %v3500 = vsub.f32 %v3468, %v3482
        %v3501 = vsub.f32 %v3469, %v3485
        %v3502 = vsub.f32 %v3470, %v3488
        %v3503 = vsub.f32 %v3471, %v3491
        %v3504 = vsub.f32 %v3472, %v3494
        %v3505 = vsub.f32 %v3473, %v3497
        %v3506 = vmul.f32 %v3498, 1.442695
        %v3507 = vpow.pop %v3506
        %v3508 = vmul.f32 %v3499, 1.442695
        %v3509 = vpow.pop %v3508
        %v3510 = vmul.f32 %v3500, 1.442695
        %v3511 = vpow.pop %v3510
        %v3512 = vmul.f32 %v3501, 1.442695
        %v3513 = vpow.pop %v3512
        %v3514 = vmul.f32 %v3502, 1.442695
        %v3515 = vpow.pop %v3514
        %v3516 = vmul.f32 %v3503, 1.442695
        %v3517 = vpow.pop %v3516
        %v3518 = vmul.f32 %v3504, 1.442695
        %v3519 = vpow.pop %v3518
        %v3520 = vmul.f32 %v3505, 1.442695
        %v3521 = vpow.pop %v3520
        %v3522 = vsel %vm2530, %v3507, 0.0
        %3523 = vadd.xlane.f32.xlu0 %v3522
        %v3524 = vpop.xlane.xlu0 %3523
        %v3525 = vsel %vm2530, %v3509, 0.0
        %3526 = vadd.xlane.f32.xlu0 %v3525
        %v3527 = vpop.xlane.xlu0 %3526
        %v3528 = vsel %vm2530, %v3511, 0.0
        %3529 = vadd.xlane.f32.xlu0 %v3528
        %v3530 = vpop.xlane.xlu0 %3529
        %v3531 = vsel %vm2530, %v3513, 0.0
        %3532 = vadd.xlane.f32.xlu0 %v3531
        %v3533 = vpop.xlane.xlu0 %3532
        %v3534 = vsel %vm2530, %v3515, 0.0
        %3535 = vadd.xlane.f32.xlu0 %v3534
        %v3536 = vpop.xlane.xlu0 %3535
        %v3537 = vsel %vm2530, %v3517, 0.0
        %3538 = vadd.xlane.f32.xlu0 %v3537
        %v3539 = vpop.xlane.xlu0 %3538
        %v3540 = vsel %vm2530, %v3519, 0.0
        %3541 = vadd.xlane.f32.xlu0 %v3540
        %v3542 = vpop.xlane.xlu0 %3541
        %v3543 = vsel %vm2530, %v3521, 0.0
        %3544 = vadd.xlane.f32.xlu0 %v3543
        %v3545 = vpop.xlane.xlu0 %3544
        %v3546 = vrcp.pop %v3524
        %v3547 = vrcp.pop %v3527
        %v3548 = vrcp.pop %v3530
        %v3549 = vrcp.pop %v3533
        %v3550 = vrcp.pop %v3536
        %v3551 = vrcp.pop %v3539
        %v3552 = vrcp.pop %v3542
        %v3553 = vrcp.pop %v3545
        %v3554 = vmul.f32 %v3507, %v3546
        %v3555 = vmul.f32 %v3509, %v3547
        %v3556 = vmul.f32 %v3511, %v3548
        %v3557 = vmul.f32 %v3513, %v3549
        %v3558 = vmul.f32 %v3515, %v3550
        %v3559 = vmul.f32 %v3517, %v3551
        %v3560 = vmul.f32 %v3519, %v3552
        %v3561 = vmul.f32 %v3521, %v3553
        %3570 = vrot.lane.b32.xlu0 %v2405, 64
        %v3571 = vpop.permute.xlu0 %3570
        %3572 = vrot.lane.b32.xlu0 %v2407, 64
        %v3573 = vpop.permute.xlu0 %3572
        %3574 = vrot.lane.b32.xlu0 %v2410, 64
        %v3575 = vpop.permute.xlu0 %3574
        %3576 = vrot.lane.b32.xlu0 %v2412, 64
        %v3577 = vpop.permute.xlu0 %3576
        %3578 = vrot.lane.b32.xlu0 %v2415, 64
        %v3579 = vpop.permute.xlu0 %3578
        %3580 = vrot.lane.b32.xlu0 %v2417, 64
        %v3581 = vpop.permute.xlu0 %3580
        %3582 = vrot.lane.b32.xlu0 %v2420, 64
        %v3583 = vpop.permute.xlu0 %3582
        %3584 = vrot.lane.b32.xlu0 %v2422, 64
        %v3585 = vpop.permute.xlu0 %3584
        %v3595 = vsel %vm2530, %v3554, 0
        %v3598 = vsel %vm2530, %v3555, 0
        %v3601 = vsel %vm2530, %v3556, 0
        %v3604 = vsel %vm2530, %v3557, 0
        %v3607 = vsel %vm2530, %v3558, 0
        %v3610 = vsel %vm2530, %v3559, 0
        %v3613 = vsel %vm2530, %v3560, 0
        %v3616 = vsel %vm2530, %v3561, 0
        %3618 = vmatpush.msra.mxu0 0.0
        %3619 = vmatpush.msra.mxu0 0.0
        %3620 = vmatpush.msra.mxu0 0.0
        %3621 = vmatpush.msra.mxu0 0.0
        %3622 = vmatpush.msra.mxu0 0.0
        %3623 = vmatpush.msra.mxu0 0.0
        %3624 = vmatpush.msra.mxu0 0.0
        %3625 = vmatpush.msra.mxu0 0.0
        %3626 = vmatpush.msra.mxu0 %v3585
        %3627 = vmatpush.msra.mxu0 %v3583
        %3628 = vmatpush.msra.mxu0 %v3581
        %3629 = vmatpush.msra.mxu0 %v3579
        %3630 = vmatpush.msra.mxu0 %v3577
        %3631 = vmatpush.msra.mxu0 %v3575
        %3632 = vmatpush.msra.mxu0 %v3573
        %3633 = vmatpush.msra.mxu0 %v3571
        %3634 = vmatmul.f32.gmra.mxu0 %v3595
        %v3635 = vpop.f32.mrf.mxu0
        %v3636 = vadd.f32 0.0, %v3635
        %3637 = vmatmul.f32.gmra.mxu0 %v3598
        %v3638 = vpop.f32.mrf.mxu0
        %v3639 = vadd.f32 0.0, %v3638
        %3640 = vmatmul.f32.gmra.mxu0 %v3601
        %v3641 = vpop.f32.mrf.mxu0
        %v3642 = vadd.f32 0.0, %v3641
        %3643 = vmatmul.f32.gmra.mxu0 %v3604
        %v3644 = vpop.f32.mrf.mxu0
        %v3645 = vadd.f32 0.0, %v3644
        %3646 = vmatmul.f32.gmra.mxu0 %v3607
        %v3647 = vpop.f32.mrf.mxu0
        %v3648 = vadd.f32 0.0, %v3647
        %3649 = vmatmul.f32.gmra.mxu0 %v3610
        %v3650 = vpop.f32.mrf.mxu0
        %v3651 = vadd.f32 0.0, %v3650
        %3652 = vmatmul.f32.gmra.mxu0 %v3613
        %v3653 = vpop.f32.mrf.mxu0
        %v3654 = vadd.f32 0.0, %v3653
        %3655 = vmatmul.f32.gmra.mxu0 %v3616
        %v3656 = vpop.f32.mrf.mxu0
        %v3657 = vadd.f32 0.0, %v3656
        %3658 = vdwg.mxu0
        %v3660 = vsel %vm2530, %v1970, 0
        %v3663 = vsel %vm2530, %v1972, 0
        %v3666 = vsel %vm2530, %v1975, 0
        %v3669 = vsel %vm2530, %v1977, 0
        %v3672 = vsel %vm2530, %v1980, 0
        %v3675 = vsel %vm2530, %v1982, 0
        %v3678 = vsel %vm2530, %v1985, 0
        %v3681 = vsel %vm2530, %v1987, 0
        %v3684 = vsel %vm2530, %v2231, 0
        %v3687 = vsel %vm2530, %v2233, 0
        %v3690 = vsel %vm2530, %v2236, 0
        %v3693 = vsel %vm2530, %v2238, 0
        %v3696 = vsel %vm2530, %v2241, 0
        %v3699 = vsel %vm2530, %v2243, 0
        %v3702 = vsel %vm2530, %v2246, 0
        %v3705 = vsel %vm2530, %v2248, 0
        %3707 = vmatpush.xpose.msra.mxu0 0.0
        %3708 = vmatpush.xpose.msra.mxu0 0.0
        %3709 = vmatpush.xpose.msra.mxu0 0.0
        %3710 = vmatpush.xpose.msra.mxu0 0.0
        %3711 = vmatpush.xpose.msra.mxu0 0.0
        %3712 = vmatpush.xpose.msra.mxu0 0.0
        %3713 = vmatpush.xpose.msra.mxu0 0.0
        %3714 = vmatpush.xpose.msra.mxu0 0.0
        %3715 = vmatpush.xpose.msra.mxu0 %v3705
        %3716 = vmatpush.xpose.msra.mxu0 %v3702
        %3717 = vmatpush.xpose.msra.mxu0 %v3699
        %3718 = vmatpush.xpose.msra.mxu0 %v3696
        %3719 = vmatpush.xpose.msra.mxu0 %v3693
        %3720 = vmatpush.xpose.msra.mxu0 %v3690
        %3721 = vmatpush.xpose.msra.mxu0 %v3687
        %3722 = vmatpush.xpose.msra.mxu0 %v3684
        %3723 = vmatmul.f32.gmra.mxu0 %v3660
        %v3724 = vpop.f32.mrf.mxu0
        %v3725 = vadd.f32 0.0, %v3724
        %3726 = vmatmul.f32.gmra.mxu0 %v3663
        %v3727 = vpop.f32.mrf.mxu0
        %v3728 = vadd.f32 0.0, %v3727
        %3729 = vmatmul.f32.gmra.mxu0 %v3666
        %v3730 = vpop.f32.mrf.mxu0
        %v3731 = vadd.f32 0.0, %v3730
        %3732 = vmatmul.f32.gmra.mxu0 %v3669
        %v3733 = vpop.f32.mrf.mxu0
        %v3734 = vadd.f32 0.0, %v3733
        %3735 = vmatmul.f32.gmra.mxu0 %v3672
        %v3736 = vpop.f32.mrf.mxu0
        %v3737 = vadd.f32 0.0, %v3736
        %3738 = vmatmul.f32.gmra.mxu0 %v3675
        %v3739 = vpop.f32.mrf.mxu0
        %v3740 = vadd.f32 0.0, %v3739
        %3741 = vmatmul.f32.gmra.mxu0 %v3678
        %v3742 = vpop.f32.mrf.mxu0
        %v3743 = vadd.f32 0.0, %v3742
        %3744 = vmatmul.f32.gmra.mxu0 %v3681
        %v3745 = vpop.f32.mrf.mxu0
        %v3746 = vadd.f32 0.0, %v3745
        %3747 = vdwg.mxu0
        %v3748 = vmul.f32 %v3725, 0.125
        %v3749 = vmul.f32 %v3728, 0.125
        %v3750 = vmul.f32 %v3731, 0.125
        %v3751 = vmul.f32 %v3734, 0.125
        %v3752 = vmul.f32 %v3737, 0.125
        %v3753 = vmul.f32 %v3740, 0.125
        %v3754 = vmul.f32 %v3743, 0.125
        %v3755 = vmul.f32 %v3746, 0.125
        %v3756 = vsel %vm2522, %v3748, -1e+30
        %v3757 = vsel %vm2523, %v3749, -1e+30
        %v3758 = vsel %vm2524, %v3750, -1e+30
        %v3759 = vsel %vm2525, %v3751, -1e+30
        %v3760 = vsel %vm2526, %v3752, -1e+30
        %v3761 = vsel %vm2527, %v3753, -1e+30
        %v3762 = vsel %vm2528, %v3754, -1e+30
        %v3763 = vsel %vm2529, %v3755, -1e+30
        %v3764 = vsel %vm2530, %v3756, -inf
        %3765 = vmax.xlane.f32.xlu0 %v3764
        %v3766 = vpop.xlane.xlu0 %3765
        %v3767 = vsel %vm2530, %v3757, -inf
        %3768 = vmax.xlane.f32.xlu0 %v3767
        %v3769 = vpop.xlane.xlu0 %3768
        %v3770 = vsel %vm2530, %v3758, -inf
        %3771 = vmax.xlane.f32.xlu0 %v3770
        %v3772 = vpop.xlane.xlu0 %3771
        %v3773 = vsel %vm2530, %v3759, -inf
        %3774 = vmax.xlane.f32.xlu0 %v3773
        %v3775 = vpop.xlane.xlu0 %3774
        %v3776 = vsel %vm2530, %v3760, -inf
        %3777 = vmax.xlane.f32.xlu0 %v3776
        %v3778 = vpop.xlane.xlu0 %3777
        %v3779 = vsel %vm2530, %v3761, -inf
        %3780 = vmax.xlane.f32.xlu0 %v3779
        %v3781 = vpop.xlane.xlu0 %3780
        %v3782 = vsel %vm2530, %v3762, -inf
        %3783 = vmax.xlane.f32.xlu0 %v3782
        %v3784 = vpop.xlane.xlu0 %3783
        %v3785 = vsel %vm2530, %v3763, -inf
        %3786 = vmax.xlane.f32.xlu0 %v3785
        %v3787 = vpop.xlane.xlu0 %3786
        %v3788 = vsub.f32 %v3756, %v3766
        %v3789 = vsub.f32 %v3757, %v3769
        %v3790 = vsub.f32 %v3758, %v3772
        %v3791 = vsub.f32 %v3759, %v3775
        %v3792 = vsub.f32 %v3760, %v3778
        %v3793 = vsub.f32 %v3761, %v3781
        %v3794 = vsub.f32 %v3762, %v3784
        %v3795 = vsub.f32 %v3763, %v3787
        %v3796 = vmul.f32 %v3788, 1.442695
        %v3797 = vpow.pop %v3796
        %v3798 = vmul.f32 %v3789, 1.442695
        %v3799 = vpow.pop %v3798
        %v3800 = vmul.f32 %v3790, 1.442695
        %v3801 = vpow.pop %v3800
        %v3802 = vmul.f32 %v3791, 1.442695
        %v3803 = vpow.pop %v3802
        %v3804 = vmul.f32 %v3792, 1.442695
        %v3805 = vpow.pop %v3804
        %v3806 = vmul.f32 %v3793, 1.442695
        %v3807 = vpow.pop %v3806
        %v3808 = vmul.f32 %v3794, 1.442695
        %v3809 = vpow.pop %v3808
        %v3810 = vmul.f32 %v3795, 1.442695
        %v3811 = vpow.pop %v3810
        %v3812 = vsel %vm2530, %v3797, 0.0
        %3813 = vadd.xlane.f32.xlu0 %v3812
        %v3814 = vpop.xlane.xlu0 %3813
        %v3815 = vsel %vm2530, %v3799, 0.0
        %3816 = vadd.xlane.f32.xlu0 %v3815
        %v3817 = vpop.xlane.xlu0 %3816
        %v3818 = vsel %vm2530, %v3801, 0.0
        %3819 = vadd.xlane.f32.xlu0 %v3818
        %v3820 = vpop.xlane.xlu0 %3819
        %v3821 = vsel %vm2530, %v3803, 0.0
        %3822 = vadd.xlane.f32.xlu0 %v3821
        %v3823 = vpop.xlane.xlu0 %3822
        %v3824 = vsel %vm2530, %v3805, 0.0
        %3825 = vadd.xlane.f32.xlu0 %v3824
        %v3826 = vpop.xlane.xlu0 %3825
        %v3827 = vsel %vm2530, %v3807, 0.0
        %3828 = vadd.xlane.f32.xlu0 %v3827
        %v3829 = vpop.xlane.xlu0 %3828
        %v3830 = vsel %vm2530, %v3809, 0.0
        %3831 = vadd.xlane.f32.xlu0 %v3830
        %v3832 = vpop.xlane.xlu0 %3831
        %v3833 = vsel %vm2530, %v3811, 0.0
        %3834 = vadd.xlane.f32.xlu0 %v3833
        %v3835 = vpop.xlane.xlu0 %3834
        %v3836 = vrcp.pop %v3814
        %v3837 = vrcp.pop %v3817
        %v3838 = vrcp.pop %v3820
        %v3839 = vrcp.pop %v3823
        %v3840 = vrcp.pop %v3826
        %v3841 = vrcp.pop %v3829
        %v3842 = vrcp.pop %v3832
        %v3843 = vrcp.pop %v3835
        %v3844 = vmul.f32 %v3797, %v3836
        %v3845 = vmul.f32 %v3799, %v3837
        %v3846 = vmul.f32 %v3801, %v3838
        %v3847 = vmul.f32 %v3803, %v3839
        %v3848 = vmul.f32 %v3805, %v3840
        %v3849 = vmul.f32 %v3807, %v3841
        %v3850 = vmul.f32 %v3809, %v3842
        %v3851 = vmul.f32 %v3811, %v3843
        %v3853 = vsel %vm2530, %v3844, 0
        %v3856 = vsel %vm2530, %v3845, 0
        %v3859 = vsel %vm2530, %v3846, 0
        %v3862 = vsel %vm2530, %v3847, 0
        %v3865 = vsel %vm2530, %v3848, 0
        %v3868 = vsel %vm2530, %v3849, 0
        %v3871 = vsel %vm2530, %v3850, 0
        %v3874 = vsel %vm2530, %v3851, 0
        %3876 = vmatpush.msra.mxu0 0.0
        %3877 = vmatpush.msra.mxu0 0.0
        %3878 = vmatpush.msra.mxu0 0.0
        %3879 = vmatpush.msra.mxu0 0.0
        %3880 = vmatpush.msra.mxu0 0.0
        %3881 = vmatpush.msra.mxu0 0.0
        %3882 = vmatpush.msra.mxu0 0.0
        %3883 = vmatpush.msra.mxu0 0.0
        %3884 = vmatpush.msra.mxu0 %v2509
        %3885 = vmatpush.msra.mxu0 %v2507
        %3886 = vmatpush.msra.mxu0 %v2504
        %3887 = vmatpush.msra.mxu0 %v2502
        %3888 = vmatpush.msra.mxu0 %v2499
        %3889 = vmatpush.msra.mxu0 %v2497
        %3890 = vmatpush.msra.mxu0 %v2494
        %3891 = vmatpush.msra.mxu0 %v2492
        %3892 = vmatmul.f32.gmra.mxu0 %v3853
        %v3893 = vpop.f32.mrf.mxu0
        %v3894 = vadd.f32 0.0, %v3893
        %3895 = vmatmul.f32.gmra.mxu0 %v3856
        %v3896 = vpop.f32.mrf.mxu0
        %v3897 = vadd.f32 0.0, %v3896
        %3898 = vmatmul.f32.gmra.mxu0 %v3859
        %v3899 = vpop.f32.mrf.mxu0
        %v3900 = vadd.f32 0.0, %v3899
        %3901 = vmatmul.f32.gmra.mxu0 %v3862
        %v3902 = vpop.f32.mrf.mxu0
        %v3903 = vadd.f32 0.0, %v3902
        %3904 = vmatmul.f32.gmra.mxu0 %v3865
        %v3905 = vpop.f32.mrf.mxu0
        %v3906 = vadd.f32 0.0, %v3905
        %3907 = vmatmul.f32.gmra.mxu0 %v3868
        %v3908 = vpop.f32.mrf.mxu0
        %v3909 = vadd.f32 0.0, %v3908
        %3910 = vmatmul.f32.gmra.mxu0 %v3871
        %v3911 = vpop.f32.mrf.mxu0
        %v3912 = vadd.f32 0.0, %v3911
        %3913 = vmatmul.f32.gmra.mxu0 %v3874
        %v3914 = vpop.f32.mrf.mxu0
        %v3915 = vadd.f32 0.0, %v3914
        %3916 = vdwg.mxu0
        %3917 = vrot.lane.b32.xlu0 %v1970, 64
        %v3918 = vpop.permute.xlu0 %3917
        %3919 = vrot.lane.b32.xlu0 %v1972, 64
        %v3920 = vpop.permute.xlu0 %3919
        %3921 = vrot.lane.b32.xlu0 %v1975, 64
        %v3922 = vpop.permute.xlu0 %3921
        %3923 = vrot.lane.b32.xlu0 %v1977, 64
        %v3924 = vpop.permute.xlu0 %3923
        %3925 = vrot.lane.b32.xlu0 %v1980, 64
        %v3926 = vpop.permute.xlu0 %3925
        %3927 = vrot.lane.b32.xlu0 %v1982, 64
        %v3928 = vpop.permute.xlu0 %3927
        %3929 = vrot.lane.b32.xlu0 %v1985, 64
        %v3930 = vpop.permute.xlu0 %3929
        %3931 = vrot.lane.b32.xlu0 %v1987, 64
        %v3932 = vpop.permute.xlu0 %3931
        %3933 = vrot.lane.b32.xlu0 %v2231, 64
        %v3934 = vpop.permute.xlu0 %3933
        %3935 = vrot.lane.b32.xlu0 %v2233, 64
        %v3936 = vpop.permute.xlu0 %3935
        %3937 = vrot.lane.b32.xlu0 %v2236, 64
        %v3938 = vpop.permute.xlu0 %3937
        %3939 = vrot.lane.b32.xlu0 %v2238, 64
        %v3940 = vpop.permute.xlu0 %3939
        %3941 = vrot.lane.b32.xlu0 %v2241, 64
        %v3942 = vpop.permute.xlu0 %3941
        %3943 = vrot.lane.b32.xlu0 %v2243, 64
        %v3944 = vpop.permute.xlu0 %3943
        %3945 = vrot.lane.b32.xlu0 %v2246, 64
        %v3946 = vpop.permute.xlu0 %3945
        %3947 = vrot.lane.b32.xlu0 %v2248, 64
        %v3948 = vpop.permute.xlu0 %3947
        %v3949 = vsel %vm2530, %v3918, 0
        %v3951 = vsel %vm2530, %v3920, 0
        %v3953 = vsel %vm2530, %v3922, 0
        %v3955 = vsel %vm2530, %v3924, 0
        %v3957 = vsel %vm2530, %v3926, 0
        %v3959 = vsel %vm2530, %v3928, 0
        %v3961 = vsel %vm2530, %v3930, 0
        %v3963 = vsel %vm2530, %v3932, 0
        %v3965 = vsel %vm2530, %v3934, 0
        %v3967 = vsel %vm2530, %v3936, 0
        %v3969 = vsel %vm2530, %v3938, 0
        %v3971 = vsel %vm2530, %v3940, 0
        %v3973 = vsel %vm2530, %v3942, 0
        %v3975 = vsel %vm2530, %v3944, 0
        %v3977 = vsel %vm2530, %v3946, 0
        %v3979 = vsel %vm2530, %v3948, 0
        %3981 = vmatpush.xpose.msra.mxu0 0.0
        %3982 = vmatpush.xpose.msra.mxu0 0.0
        %3983 = vmatpush.xpose.msra.mxu0 0.0
        %3984 = vmatpush.xpose.msra.mxu0 0.0
        %3985 = vmatpush.xpose.msra.mxu0 0.0
        %3986 = vmatpush.xpose.msra.mxu0 0.0
        %3987 = vmatpush.xpose.msra.mxu0 0.0
        %3988 = vmatpush.xpose.msra.mxu0 0.0
        %3989 = vmatpush.xpose.msra.mxu0 %v3979
        %3990 = vmatpush.xpose.msra.mxu0 %v3977
        %3991 = vmatpush.xpose.msra.mxu0 %v3975
        %3992 = vmatpush.xpose.msra.mxu0 %v3973
        %3993 = vmatpush.xpose.msra.mxu0 %v3971
        %3994 = vmatpush.xpose.msra.mxu0 %v3969
        %3995 = vmatpush.xpose.msra.mxu0 %v3967
        %3996 = vmatpush.xpose.msra.mxu0 %v3965
        %3997 = vmatmul.f32.gmra.mxu0 %v3949
        %v3998 = vpop.f32.mrf.mxu0
        %v3999 = vadd.f32 0.0, %v3998
        %4000 = vmatmul.f32.gmra.mxu0 %v3951
        %v4001 = vpop.f32.mrf.mxu0
        %v4002 = vadd.f32 0.0, %v4001
        %4003 = vmatmul.f32.gmra.mxu0 %v3953
        %v4004 = vpop.f32.mrf.mxu0
        %v4005 = vadd.f32 0.0, %v4004
        %4006 = vmatmul.f32.gmra.mxu0 %v3955
        %v4007 = vpop.f32.mrf.mxu0
        %v4008 = vadd.f32 0.0, %v4007
        %4009 = vmatmul.f32.gmra.mxu0 %v3957
        %v4010 = vpop.f32.mrf.mxu0
        %v4011 = vadd.f32 0.0, %v4010
        %4012 = vmatmul.f32.gmra.mxu0 %v3959
        %v4013 = vpop.f32.mrf.mxu0
        %v4014 = vadd.f32 0.0, %v4013
        %4015 = vmatmul.f32.gmra.mxu0 %v3961
        %v4016 = vpop.f32.mrf.mxu0
        %v4017 = vadd.f32 0.0, %v4016
        %4018 = vmatmul.f32.gmra.mxu0 %v3963
        %v4019 = vpop.f32.mrf.mxu0
        %v4020 = vadd.f32 0.0, %v4019
        %4021 = vdwg.mxu0
        %v4022 = vmul.f32 %v3999, 0.125
        %v4023 = vmul.f32 %v4002, 0.125
        %v4024 = vmul.f32 %v4005, 0.125
        %v4025 = vmul.f32 %v4008, 0.125
        %v4026 = vmul.f32 %v4011, 0.125
        %v4027 = vmul.f32 %v4014, 0.125
        %v4028 = vmul.f32 %v4017, 0.125
        %v4029 = vmul.f32 %v4020, 0.125
        %v4030 = vsel %vm2522, %v4022, -1e+30
        %v4031 = vsel %vm2523, %v4023, -1e+30
        %v4032 = vsel %vm2524, %v4024, -1e+30
        %v4033 = vsel %vm2525, %v4025, -1e+30
        %v4034 = vsel %vm2526, %v4026, -1e+30
        %v4035 = vsel %vm2527, %v4027, -1e+30
        %v4036 = vsel %vm2528, %v4028, -1e+30
        %v4037 = vsel %vm2529, %v4029, -1e+30
        %v4038 = vsel %vm2530, %v4030, -inf
        %4039 = vmax.xlane.f32.xlu0 %v4038
        %v4040 = vpop.xlane.xlu0 %4039
        %v4041 = vsel %vm2530, %v4031, -inf
        %4042 = vmax.xlane.f32.xlu0 %v4041
        %v4043 = vpop.xlane.xlu0 %4042
        %v4044 = vsel %vm2530, %v4032, -inf
        %4045 = vmax.xlane.f32.xlu0 %v4044
        %v4046 = vpop.xlane.xlu0 %4045
        %v4047 = vsel %vm2530, %v4033, -inf
        %4048 = vmax.xlane.f32.xlu0 %v4047
        %v4049 = vpop.xlane.xlu0 %4048
        %v4050 = vsel %vm2530, %v4034, -inf
        %4051 = vmax.xlane.f32.xlu0 %v4050
        %v4052 = vpop.xlane.xlu0 %4051
        %v4053 = vsel %vm2530, %v4035, -inf
        %4054 = vmax.xlane.f32.xlu0 %v4053
        %v4055 = vpop.xlane.xlu0 %4054
        %v4056 = vsel %vm2530, %v4036, -inf
        %4057 = vmax.xlane.f32.xlu0 %v4056
        %v4058 = vpop.xlane.xlu0 %4057
        %v4059 = vsel %vm2530, %v4037, -inf
        %4060 = vmax.xlane.f32.xlu0 %v4059
        %v4061 = vpop.xlane.xlu0 %4060
        %v4062 = vsub.f32 %v4030, %v4040
        %v4063 = vsub.f32 %v4031, %v4043
        %v4064 = vsub.f32 %v4032, %v4046
        %v4065 = vsub.f32 %v4033, %v4049
        %v4066 = vsub.f32 %v4034, %v4052
        %v4067 = vsub.f32 %v4035, %v4055
        %v4068 = vsub.f32 %v4036, %v4058
        %v4069 = vsub.f32 %v4037, %v4061
        %v4070 = vmul.f32 %v4062, 1.442695
        %v4071 = vpow.pop %v4070
        %v4072 = vmul.f32 %v4063, 1.442695
        %v4073 = vpow.pop %v4072
        %v4074 = vmul.f32 %v4064, 1.442695
        %v4075 = vpow.pop %v4074
        %v4076 = vmul.f32 %v4065, 1.442695
        %v4077 = vpow.pop %v4076
        %v4078 = vmul.f32 %v4066, 1.442695
        %v4079 = vpow.pop %v4078
        %v4080 = vmul.f32 %v4067, 1.442695
        %v4081 = vpow.pop %v4080
        %v4082 = vmul.f32 %v4068, 1.442695
        %v4083 = vpow.pop %v4082
        %v4084 = vmul.f32 %v4069, 1.442695
        %v4085 = vpow.pop %v4084
        %v4086 = vsel %vm2530, %v4071, 0.0
        %4087 = vadd.xlane.f32.xlu0 %v4086
        %v4088 = vpop.xlane.xlu0 %4087
        %v4089 = vsel %vm2530, %v4073, 0.0
        %4090 = vadd.xlane.f32.xlu0 %v4089
        %v4091 = vpop.xlane.xlu0 %4090
        %v4092 = vsel %vm2530, %v4075, 0.0
        %4093 = vadd.xlane.f32.xlu0 %v4092
        %v4094 = vpop.xlane.xlu0 %4093
        %v4095 = vsel %vm2530, %v4077, 0.0
        %4096 = vadd.xlane.f32.xlu0 %v4095
        %v4097 = vpop.xlane.xlu0 %4096
        %v4098 = vsel %vm2530, %v4079, 0.0
        %4099 = vadd.xlane.f32.xlu0 %v4098
        %v4100 = vpop.xlane.xlu0 %4099
        %v4101 = vsel %vm2530, %v4081, 0.0
        %4102 = vadd.xlane.f32.xlu0 %v4101
        %v4103 = vpop.xlane.xlu0 %4102
        %v4104 = vsel %vm2530, %v4083, 0.0
        %4105 = vadd.xlane.f32.xlu0 %v4104
        %v4106 = vpop.xlane.xlu0 %4105
        %v4107 = vsel %vm2530, %v4085, 0.0
        %4108 = vadd.xlane.f32.xlu0 %v4107
        %v4109 = vpop.xlane.xlu0 %4108
        %v4110 = vrcp.pop %v4088
        %v4111 = vrcp.pop %v4091
        %v4112 = vrcp.pop %v4094
        %v4113 = vrcp.pop %v4097
        %v4114 = vrcp.pop %v4100
        %v4115 = vrcp.pop %v4103
        %v4116 = vrcp.pop %v4106
        %v4117 = vrcp.pop %v4109
        %v4118 = vmul.f32 %v4071, %v4110
        %v4119 = vmul.f32 %v4073, %v4111
        %v4120 = vmul.f32 %v4075, %v4112
        %v4121 = vmul.f32 %v4077, %v4113
        %v4122 = vmul.f32 %v4079, %v4114
        %v4123 = vmul.f32 %v4081, %v4115
        %v4124 = vmul.f32 %v4083, %v4116
        %v4125 = vmul.f32 %v4085, %v4117
        %4134 = vrot.lane.b32.xlu0 %v2492, 64
        %v4135 = vpop.permute.xlu0 %4134
        %4136 = vrot.lane.b32.xlu0 %v2494, 64
        %v4137 = vpop.permute.xlu0 %4136
        %4138 = vrot.lane.b32.xlu0 %v2497, 64
        %v4139 = vpop.permute.xlu0 %4138
        %4140 = vrot.lane.b32.xlu0 %v2499, 64
        %v4141 = vpop.permute.xlu0 %4140
        %4142 = vrot.lane.b32.xlu0 %v2502, 64
        %v4143 = vpop.permute.xlu0 %4142
        %4144 = vrot.lane.b32.xlu0 %v2504, 64
        %v4145 = vpop.permute.xlu0 %4144
        %4146 = vrot.lane.b32.xlu0 %v2507, 64
        %v4147 = vpop.permute.xlu0 %4146
        %4148 = vrot.lane.b32.xlu0 %v2509, 64
        %v4149 = vpop.permute.xlu0 %4148
        %v4159 = vsel %vm2530, %v4118, 0
        %v4162 = vsel %vm2530, %v4119, 0
        %v4165 = vsel %vm2530, %v4120, 0
        %v4168 = vsel %vm2530, %v4121, 0
        %v4171 = vsel %vm2530, %v4122, 0
        %v4174 = vsel %vm2530, %v4123, 0
        %v4177 = vsel %vm2530, %v4124, 0
        %v4180 = vsel %vm2530, %v4125, 0
        %4182 = vmatpush.msra.mxu0 0.0
        %4183 = vmatpush.msra.mxu0 0.0
        %4184 = vmatpush.msra.mxu0 0.0
        %4185 = vmatpush.msra.mxu0 0.0
        %4186 = vmatpush.msra.mxu0 0.0
        %4187 = vmatpush.msra.mxu0 0.0
        %4188 = vmatpush.msra.mxu0 0.0
        %4189 = vmatpush.msra.mxu0 0.0
        %4190 = vmatpush.msra.mxu0 %v4149
        %4191 = vmatpush.msra.mxu0 %v4147
        %4192 = vmatpush.msra.mxu0 %v4145
        %4193 = vmatpush.msra.mxu0 %v4143
        %4194 = vmatpush.msra.mxu0 %v4141
        %4195 = vmatpush.msra.mxu0 %v4139
        %4196 = vmatpush.msra.mxu0 %v4137
        %4197 = vmatpush.msra.mxu0 %v4135
        %4198 = vmatmul.f32.gmra.mxu0 %v4159
        %v4199 = vpop.f32.mrf.mxu0
        %v4200 = vadd.f32 0.0, %v4199
        %4201 = vmatmul.f32.gmra.mxu0 %v4162
        %v4202 = vpop.f32.mrf.mxu0
        %v4203 = vadd.f32 0.0, %v4202
        %4204 = vmatmul.f32.gmra.mxu0 %v4165
        %v4205 = vpop.f32.mrf.mxu0
        %v4206 = vadd.f32 0.0, %v4205
        %4207 = vmatmul.f32.gmra.mxu0 %v4168
        %v4208 = vpop.f32.mrf.mxu0
        %v4209 = vadd.f32 0.0, %v4208
        %4210 = vmatmul.f32.gmra.mxu0 %v4171
        %v4211 = vpop.f32.mrf.mxu0
        %v4212 = vadd.f32 0.0, %v4211
        %4213 = vmatmul.f32.gmra.mxu0 %v4174
        %v4214 = vpop.f32.mrf.mxu0
        %v4215 = vadd.f32 0.0, %v4214
        %4216 = vmatmul.f32.gmra.mxu0 %v4177
        %v4217 = vpop.f32.mrf.mxu0
        %v4218 = vadd.f32 0.0, %v4217
        %4219 = vmatmul.f32.gmra.mxu0 %v4180
        %v4220 = vpop.f32.mrf.mxu0
        %v4221 = vadd.f32 0.0, %v4220
        %4222 = vdwg.mxu0
        %4231 = vrot.lane.b32.xlu0 %v3072, 64
        %v4232 = vpop.permute.xlu0 %4231
        %4233 = vrot.lane.b32.xlu0 %v3075, 64
        %v4234 = vpop.permute.xlu0 %4233
        %4235 = vrot.lane.b32.xlu0 %v3078, 64
        %v4236 = vpop.permute.xlu0 %4235
        %4237 = vrot.lane.b32.xlu0 %v3081, 64
        %v4238 = vpop.permute.xlu0 %4237
        %4239 = vrot.lane.b32.xlu0 %v3084, 64
        %v4240 = vpop.permute.xlu0 %4239
        %4241 = vrot.lane.b32.xlu0 %v3087, 64
        %v4242 = vpop.permute.xlu0 %4241
        %4243 = vrot.lane.b32.xlu0 %v3090, 64
        %v4244 = vpop.permute.xlu0 %4243
        %4245 = vrot.lane.b32.xlu0 %v3093, 64
        %v4246 = vpop.permute.xlu0 %4245
        %4263 = vrot.lane.b32.xlu0 %v3636, 64
        %v4264 = vpop.permute.xlu0 %4263
        %4265 = vrot.lane.b32.xlu0 %v3639, 64
        %v4266 = vpop.permute.xlu0 %4265
        %4267 = vrot.lane.b32.xlu0 %v3642, 64
        %v4268 = vpop.permute.xlu0 %4267
        %4269 = vrot.lane.b32.xlu0 %v3645, 64
        %v4270 = vpop.permute.xlu0 %4269
        %4271 = vrot.lane.b32.xlu0 %v3648, 64
        %v4272 = vpop.permute.xlu0 %4271
        %4273 = vrot.lane.b32.xlu0 %v3651, 64
        %v4274 = vpop.permute.xlu0 %4273
        %4275 = vrot.lane.b32.xlu0 %v3654, 64
        %v4276 = vpop.permute.xlu0 %4275
        %4277 = vrot.lane.b32.xlu0 %v3657, 64
        %v4278 = vpop.permute.xlu0 %4277
        %4295 = vrot.lane.b32.xlu0 %v4200, 64
        %v4296 = vpop.permute.xlu0 %4295
        %4297 = vrot.lane.b32.xlu0 %v4203, 64
        %v4298 = vpop.permute.xlu0 %4297
        %4299 = vrot.lane.b32.xlu0 %v4206, 64
        %v4300 = vpop.permute.xlu0 %4299
        %4301 = vrot.lane.b32.xlu0 %v4209, 64
        %v4302 = vpop.permute.xlu0 %4301
        %4303 = vrot.lane.b32.xlu0 %v4212, 64
        %v4304 = vpop.permute.xlu0 %4303
        %4305 = vrot.lane.b32.xlu0 %v4215, 64
        %v4306 = vpop.permute.xlu0 %4305
        %4307 = vrot.lane.b32.xlu0 %v4218, 64
        %v4308 = vpop.permute.xlu0 %4307
        %4309 = vrot.lane.b32.xlu0 %v4221, 64
        %v4310 = vpop.permute.xlu0 %4309
        %v4319 = vsel %vm2530, %v2766, %v4232
        %v4320 = vsel %vm2530, %v2769, %v4234
        %v4321 = vsel %vm2530, %v2772, %v4236
        %v4322 = vsel %vm2530, %v2775, %v4238
        %v4323 = vsel %vm2530, %v2778, %v4240
        %v4324 = vsel %vm2530, %v2781, %v4242
        %v4325 = vsel %vm2530, %v2784, %v4244
        %v4326 = vsel %vm2530, %v2787, %v4246
        %v4327 = vsel %vm2530, %v3330, %v4264
        %v4328 = vsel %vm2530, %v3333, %v4266
        %v4329 = vsel %vm2530, %v3336, %v4268
        %v4330 = vsel %vm2530, %v3339, %v4270
        %v4331 = vsel %vm2530, %v3342, %v4272
        %v4332 = vsel %vm2530, %v3345, %v4274
        %v4333 = vsel %vm2530, %v3348, %v4276
        %v4334 = vsel %vm2530, %v3351, %v4278
        %v4335 = vsel %vm2530, %v3894, %v4296
        %v4336 = vsel %vm2530, %v3897, %v4298
        %v4337 = vsel %vm2530, %v3900, %v4300
        %v4338 = vsel %vm2530, %v3903, %v4302
        %v4339 = vsel %vm2530, %v3906, %v4304
        %v4340 = vsel %vm2530, %v3909, %v4306
        %v4341 = vsel %vm2530, %v3912, %v4308
        %v4342 = vsel %vm2530, %v3915, %v4310
        %4343 = vst [vmem:[%s303] sm:$0xff] %v4319
        %4344 = vst [vmem:[%s303 + $0x8] sm:$0xff] %v4327
        %4345 = vst [vmem:[%s303 + $0x10] sm:$0xff] %v4335
        %4346 = vst [vmem:[%s303 + $0x18] sm:$0xff] %v4320
        %4347 = vst [vmem:[%s303 + $0x20] sm:$0xff] %v4328
        %4348 = vst [vmem:[%s303 + $0x28] sm:$0xff] %v4336
        %4349 = vst [vmem:[%s303 + $0x30] sm:$0xff] %v4321
        %4350 = vst [vmem:[%s303 + $0x38] sm:$0xff] %v4329
        %4351 = vst [vmem:[%s303 + $0x40] sm:$0xff] %v4337
        %4352 = vst [vmem:[%s303 + $0x48] sm:$0xff] %v4322
        %4353 = vst [vmem:[%s303 + $0x50] sm:$0xff] %v4330
        %4354 = vst [vmem:[%s303 + $0x58] sm:$0xff] %v4338
        %4355 = vst [vmem:[%s303 + $0x60] sm:$0xff] %v4323
        %4356 = vst [vmem:[%s303 + $0x68] sm:$0xff] %v4331
        %4357 = vst [vmem:[%s303 + $0x70] sm:$0xff] %v4339
        %4358 = vst [vmem:[%s303 + $0x78] sm:$0xff] %v4324
        %4359 = vst [vmem:[%s303 + $0x80] sm:$0xff] %v4332
        %4360 = vst [vmem:[%s303 + $0x88] sm:$0xff] %v4340
        %4361 = vst [vmem:[%s303 + $0x90] sm:$0xff] %v4325
        %4362 = vst [vmem:[%s303 + $0x98] sm:$0xff] %v4333
        %4363 = vst [vmem:[%s303 + $0xa0] sm:$0xff] %v4341
        %4364 = vst [vmem:[%s303 + $0xa8] sm:$0xff] %v4326
        %4365 = vst [vmem:[%s303 + $0xb0] sm:$0xff] %v4334
        %4366 = vst [vmem:[%s303 + $0xb8] sm:$0xff] %v4342
        %v4367 = vld [vmem:[#allocation7] sm:$0xff]
        %v4368 = vld [vmem:[#allocation7 + $0x8] sm:$0xf]
        %v4369 = vld [vmem:[#allocation7 + $0xc] sm:$0xff]
        %v4370 = vld [vmem:[#allocation7 + $0x14] sm:$0xf]
        %v4371 = vld [vmem:[#allocation7 + $0x18] sm:$0xff]
        %v4372 = vld [vmem:[#allocation7 + $0x20] sm:$0xf]
        %v4373 = vld [vmem:[#allocation7 + $0x24] sm:$0xff]
        %v4374 = vld [vmem:[#allocation7 + $0x2c] sm:$0xf]
        %v4375 = vld [vmem:[#allocation7 + $0x30] sm:$0xff]
        %v4376 = vld [vmem:[#allocation7 + $0x38] sm:$0xf]
        %v4377 = vld [vmem:[#allocation7 + $0x3c] sm:$0xff]
        %v4378 = vld [vmem:[#allocation7 + $0x44] sm:$0xf]
        %v4379 = vld [vmem:[#allocation7 + $0x48] sm:$0xff]
        %v4380 = vld [vmem:[#allocation7 + $0x50] sm:$0xf]
        %v4381 = vld [vmem:[#allocation7 + $0x54] sm:$0xff]
        %v4382 = vld [vmem:[#allocation7 + $0x5c] sm:$0xf]
        %v4383 = vld [vmem:[#allocation7 + $0x60] sm:$0xff]
        %v4384 = vld [vmem:[#allocation7 + $0x68] sm:$0xf]
        %v4385 = vld [vmem:[#allocation7 + $0x6c] sm:$0xff]
        %v4386 = vld [vmem:[#allocation7 + $0x74] sm:$0xf]
        %v4387 = vld [vmem:[#allocation7 + $0x78] sm:$0xff]
        %v4388 = vld [vmem:[#allocation7 + $0x80] sm:$0xf]
        %v4389 = vld [vmem:[#allocation7 + $0x84] sm:$0xff]
        %v4390 = vld [vmem:[#allocation7 + $0x8c] sm:$0xf]
        %v4391 = vld [vmem:[#allocation7 + $0x90] sm:$0xff]
        %v4392 = vld [vmem:[#allocation7 + $0x98] sm:$0xf]
        %v4393 = vld [vmem:[#allocation7 + $0x9c] sm:$0xff]
        %v4394 = vld [vmem:[#allocation7 + $0xa4] sm:$0xf]
        %v4395 = vld [vmem:[#allocation7 + $0xa8] sm:$0xff]
        %v4396 = vld [vmem:[#allocation7 + $0xb0] sm:$0xf]
        %v4397 = vld [vmem:[#allocation7 + $0xb4] sm:$0xff]
        %v4398 = vld [vmem:[#allocation7 + $0xbc] sm:$0xf]
        %v4399 = vld [vmem:[#allocation7 + $0xc0] sm:$0xff]
        %v4400 = vld [vmem:[#allocation7 + $0xc8] sm:$0xf]
        %v4401 = vld [vmem:[#allocation7 + $0xcc] sm:$0xff]
        %v4402 = vld [vmem:[#allocation7 + $0xd4] sm:$0xf]
        %v4403 = vld [vmem:[#allocation7 + $0xd8] sm:$0xff]
        %v4404 = vld [vmem:[#allocation7 + $0xe0] sm:$0xf]
        %v4405 = vld [vmem:[#allocation7 + $0xe4] sm:$0xff]
        %v4406 = vld [vmem:[#allocation7 + $0xec] sm:$0xf]
        %v4407 = vld [vmem:[#allocation7 + $0xf0] sm:$0xff]
        %v4408 = vld [vmem:[#allocation7 + $0xf8] sm:$0xf]
        %v4409 = vld [vmem:[#allocation7 + $0xfc] sm:$0xff]
        %v4410 = vld [vmem:[#allocation7 + $0x104] sm:$0xf]
        %v4411 = vld [vmem:[#allocation7 + $0x108] sm:$0xff]
        %v4412 = vld [vmem:[#allocation7 + $0x110] sm:$0xf]
        %v4413 = vld [vmem:[#allocation7 + $0x114] sm:$0xff]
        %v4414 = vld [vmem:[#allocation7 + $0x11c] sm:$0xf]
        %v4415 = vld [vmem:[#allocation7 + $0x120] sm:$0xff]
        %v4416 = vld [vmem:[#allocation7 + $0x128] sm:$0xf]
        %v4417 = vld [vmem:[#allocation7 + $0x12c] sm:$0xff]
        %v4418 = vld [vmem:[#allocation7 + $0x134] sm:$0xf]
        %v4419 = vld [vmem:[#allocation7 + $0x138] sm:$0xff]
        %v4420 = vld [vmem:[#allocation7 + $0x140] sm:$0xf]
        %v4421 = vld [vmem:[#allocation7 + $0x144] sm:$0xff]
        %v4422 = vld [vmem:[#allocation7 + $0x14c] sm:$0xf]
        %v4423 = vld [vmem:[#allocation7 + $0x150] sm:$0xff]
        %v4424 = vld [vmem:[#allocation7 + $0x158] sm:$0xf]
        %v4425 = vld [vmem:[#allocation7 + $0x15c] sm:$0xff]
        %v4426 = vld [vmem:[#allocation7 + $0x164] sm:$0xf]
        %v4427 = vld [vmem:[#allocation7 + $0x168] sm:$0xff]
        %v4428 = vld [vmem:[#allocation7 + $0x170] sm:$0xf]
        %v4429 = vld [vmem:[#allocation7 + $0x174] sm:$0xff]
        %v4430 = vld [vmem:[#allocation7 + $0x17c] sm:$0xf]
        %v4431 = vld [vmem:[#allocation7 + $0x180] sm:$0xff]
        %v4432 = vld [vmem:[#allocation7 + $0x188] sm:$0xf]
        %v4433 = vld [vmem:[#allocation7 + $0x18c] sm:$0xff]
        %v4434 = vld [vmem:[#allocation7 + $0x194] sm:$0xf]
        %v4435 = vld [vmem:[#allocation7 + $0x198] sm:$0xff]
        %v4436 = vld [vmem:[#allocation7 + $0x1a0] sm:$0xf]
        %v4437 = vld [vmem:[#allocation7 + $0x1a4] sm:$0xff]
        %v4438 = vld [vmem:[#allocation7 + $0x1ac] sm:$0xf]
        %v4439 = vld [vmem:[#allocation7 + $0x1b0] sm:$0xff]
        %v4440 = vld [vmem:[#allocation7 + $0x1b8] sm:$0xf]
        %v4441 = vld [vmem:[#allocation7 + $0x1bc] sm:$0xff]
        %v4442 = vld [vmem:[#allocation7 + $0x1c4] sm:$0xf]
        %v4443 = vld [vmem:[#allocation7 + $0x1c8] sm:$0xff]
        %v4444 = vld [vmem:[#allocation7 + $0x1d0] sm:$0xf]
        %v4445 = vld [vmem:[#allocation7 + $0x1d4] sm:$0xff]
        %v4446 = vld [vmem:[#allocation7 + $0x1dc] sm:$0xf]
        %v4447 = vld [vmem:[#allocation7 + $0x1e0] sm:$0xff]
        %v4448 = vld [vmem:[#allocation7 + $0x1e8] sm:$0xf]
        %v4449 = vld [vmem:[#allocation7 + $0x1ec] sm:$0xff]
        %v4450 = vld [vmem:[#allocation7 + $0x1f4] sm:$0xf]
        %v4451 = vld [vmem:[#allocation7 + $0x1f8] sm:$0xff]
        %v4452 = vld [vmem:[#allocation7 + $0x200] sm:$0xf]
        %v4453 = vld [vmem:[#allocation7 + $0x204] sm:$0xff]
        %v4454 = vld [vmem:[#allocation7 + $0x20c] sm:$0xf]
        %v4455 = vld [vmem:[#allocation7 + $0x210] sm:$0xff]
        %v4456 = vld [vmem:[#allocation7 + $0x218] sm:$0xf]
        %v4457 = vld [vmem:[#allocation7 + $0x21c] sm:$0xff]
        %v4458 = vld [vmem:[#allocation7 + $0x224] sm:$0xf]
        %v4459 = vld [vmem:[#allocation7 + $0x228] sm:$0xff]
        %v4460 = vld [vmem:[#allocation7 + $0x230] sm:$0xf]
        %v4461 = vld [vmem:[#allocation7 + $0x234] sm:$0xff]
        %v4462 = vld [vmem:[#allocation7 + $0x23c] sm:$0xf]
        %v4463 = vld [vmem:[#allocation8] sm:$0x7]
        %v4465 = vperm.slane %v4463, 0
        %v4466 = vperm.slane %v4463, 1
        %v4467 = vperm.slane %v4463, 2
        %v4567 = vunpack.c.l.b16 %v4367
        %v4568 = vunpack.c.h.b16 %v4367
        %v4569 = vunpack.c.l.b16 %v4368
        %v4570 = vunpack.c.l.b16 %v4369
        %v4571 = vunpack.c.h.b16 %v4369
        %v4572 = vunpack.c.l.b16 %v4370
        %v4573 = vunpack.c.l.b16 %v4371
        %v4574 = vunpack.c.h.b16 %v4371
        %v4575 = vunpack.c.l.b16 %v4372
        %v4576 = vunpack.c.l.b16 %v4373
        %v4577 = vunpack.c.h.b16 %v4373
        %v4578 = vunpack.c.l.b16 %v4374
        %v4579 = vunpack.c.l.b16 %v4375
        %v4580 = vunpack.c.h.b16 %v4375
        %v4581 = vunpack.c.l.b16 %v4376
        %v4582 = vunpack.c.l.b16 %v4377
        %v4583 = vunpack.c.h.b16 %v4377
        %v4584 = vunpack.c.l.b16 %v4378
        %v4585 = vunpack.c.l.b16 %v4379
        %v4586 = vunpack.c.h.b16 %v4379
        %v4587 = vunpack.c.l.b16 %v4380
        %v4588 = vunpack.c.l.b16 %v4381
        %v4589 = vunpack.c.h.b16 %v4381
        %v4590 = vunpack.c.l.b16 %v4382
        %v4591 = vunpack.c.l.b16 %v4383
        %v4592 = vunpack.c.h.b16 %v4383
        %v4593 = vunpack.c.l.b16 %v4384
        %v4594 = vunpack.c.l.b16 %v4385
        %v4595 = vunpack.c.h.b16 %v4385
        %v4596 = vunpack.c.l.b16 %v4386
        %v4597 = vunpack.c.l.b16 %v4387
        %v4598 = vunpack.c.h.b16 %v4387
        %v4599 = vunpack.c.l.b16 %v4388
        %v4600 = vunpack.c.l.b16 %v4389
        %v4601 = vunpack.c.h.b16 %v4389
        %v4602 = vunpack.c.l.b16 %v4390
        %v4603 = vunpack.c.l.b16 %v4391
        %v4604 = vunpack.c.h.b16 %v4391
        %v4605 = vunpack.c.l.b16 %v4392
        %v4606 = vunpack.c.l.b16 %v4393
        %v4607 = vunpack.c.h.b16 %v4393
        %v4608 = vunpack.c.l.b16 %v4394
        %v4609 = vunpack.c.l.b16 %v4395
        %v4610 = vunpack.c.h.b16 %v4395
        %v4611 = vunpack.c.l.b16 %v4396
        %v4612 = vunpack.c.l.b16 %v4397
        %v4613 = vunpack.c.h.b16 %v4397
        %v4614 = vunpack.c.l.b16 %v4398
        %v4615 = vunpack.c.l.b16 %v4399
        %v4616 = vunpack.c.h.b16 %v4399
        %v4617 = vunpack.c.l.b16 %v4400
        %v4618 = vunpack.c.l.b16 %v4401
        %v4619 = vunpack.c.h.b16 %v4401
        %v4620 = vunpack.c.l.b16 %v4402
        %v4621 = vunpack.c.l.b16 %v4403
        %v4622 = vunpack.c.h.b16 %v4403
        %v4623 = vunpack.c.l.b16 %v4404
        %v4624 = vunpack.c.l.b16 %v4405
        %v4625 = vunpack.c.h.b16 %v4405
        %v4626 = vunpack.c.l.b16 %v4406
        %v4627 = vunpack.c.l.b16 %v4407
        %v4628 = vunpack.c.h.b16 %v4407
        %v4629 = vunpack.c.l.b16 %v4408
        %v4630 = vunpack.c.l.b16 %v4409
        %v4631 = vunpack.c.h.b16 %v4409
        %v4632 = vunpack.c.l.b16 %v4410
        %v4633 = vunpack.c.l.b16 %v4411
        %v4634 = vunpack.c.h.b16 %v4411
        %v4635 = vunpack.c.l.b16 %v4412
        %v4636 = vunpack.c.l.b16 %v4413
        %v4637 = vunpack.c.h.b16 %v4413
        %v4638 = vunpack.c.l.b16 %v4414
        %v4639 = vunpack.c.l.b16 %v4415
        %v4640 = vunpack.c.h.b16 %v4415
        %v4641 = vunpack.c.l.b16 %v4416
        %v4642 = vunpack.c.l.b16 %v4417
        %v4643 = vunpack.c.h.b16 %v4417
        %v4644 = vunpack.c.l.b16 %v4418
        %v4645 = vunpack.c.l.b16 %v4419
        %v4646 = vunpack.c.h.b16 %v4419
        %v4647 = vunpack.c.l.b16 %v4420
        %v4648 = vunpack.c.l.b16 %v4421
        %v4649 = vunpack.c.h.b16 %v4421
        %v4650 = vunpack.c.l.b16 %v4422
        %v4651 = vunpack.c.l.b16 %v4423
        %v4652 = vunpack.c.h.b16 %v4423
        %v4653 = vunpack.c.l.b16 %v4424
        %v4654 = vunpack.c.l.b16 %v4425
        %v4655 = vunpack.c.h.b16 %v4425
        %v4656 = vunpack.c.l.b16 %v4426
        %v4657 = vunpack.c.l.b16 %v4427
        %v4658 = vunpack.c.h.b16 %v4427
        %v4659 = vunpack.c.l.b16 %v4428
        %v4660 = vunpack.c.l.b16 %v4429
        %v4661 = vunpack.c.h.b16 %v4429
        %v4662 = vunpack.c.l.b16 %v4430
        %v4663 = vunpack.c.l.b16 %v4431
        %v4664 = vunpack.c.h.b16 %v4431
        %v4665 = vunpack.c.l.b16 %v4432
        %v4666 = vunpack.c.l.b16 %v4433
        %v4667 = vunpack.c.h.b16 %v4433
        %v4668 = vunpack.c.l.b16 %v4434
        %v4669 = vunpack.c.l.b16 %v4435
        %v4670 = vunpack.c.h.b16 %v4435
        %v4671 = vunpack.c.l.b16 %v4436
        %v4672 = vunpack.c.l.b16 %v4437
        %v4673 = vunpack.c.h.b16 %v4437
        %v4674 = vunpack.c.l.b16 %v4438
        %v4675 = vunpack.c.l.b16 %v4439
        %v4676 = vunpack.c.h.b16 %v4439
        %v4677 = vunpack.c.l.b16 %v4440
        %v4678 = vunpack.c.l.b16 %v4441
        %v4679 = vunpack.c.h.b16 %v4441
        %v4680 = vunpack.c.l.b16 %v4442
        %v4681 = vunpack.c.l.b16 %v4443
        %v4682 = vunpack.c.h.b16 %v4443
        %v4683 = vunpack.c.l.b16 %v4444
        %v4684 = vunpack.c.l.b16 %v4445
        %v4685 = vunpack.c.h.b16 %v4445
        %v4686 = vunpack.c.l.b16 %v4446
        %v4687 = vunpack.c.l.b16 %v4447
        %v4688 = vunpack.c.h.b16 %v4447
        %v4689 = vunpack.c.l.b16 %v4448
        %v4690 = vunpack.c.l.b16 %v4449
        %v4691 = vunpack.c.h.b16 %v4449
        %v4692 = vunpack.c.l.b16 %v4450
        %v4693 = vunpack.c.l.b16 %v4451
        %v4694 = vunpack.c.h.b16 %v4451
        %v4695 = vunpack.c.l.b16 %v4452
        %v4696 = vunpack.c.l.b16 %v4453
        %v4697 = vunpack.c.h.b16 %v4453
        %v4698 = vunpack.c.l.b16 %v4454
        %v4699 = vunpack.c.l.b16 %v4455
        %v4700 = vunpack.c.h.b16 %v4455
        %v4701 = vunpack.c.l.b16 %v4456
        %v4702 = vunpack.c.l.b16 %v4457
        %v4703 = vunpack.c.h.b16 %v4457
        %v4704 = vunpack.c.l.b16 %v4458
        %v4705 = vunpack.c.l.b16 %v4459
        %v4706 = vunpack.c.h.b16 %v4459
        %v4707 = vunpack.c.l.b16 %v4460
        %v4708 = vunpack.c.l.b16 %v4461
        %v4709 = vunpack.c.h.b16 %v4461
        %v4710 = vunpack.c.l.b16 %v4462
        %v4711 = vpack.c.b16 %v4570, %v4567
        %v4712 = vpack.c.b16 %v4571, %v4568
        %v4713 = vpack.c.b16 %v4572, %v4569
        %v4714 = vpack.c.b16 %v4576, %v4573
        %v4715 = vpack.c.b16 %v4577, %v4574
        %v4716 = vpack.c.b16 %v4578, %v4575
        %v4717 = vpack.c.b16 %v4582, %v4579
        %v4718 = vpack.c.b16 %v4583, %v4580
        %v4719 = vpack.c.b16 %v4584, %v4581
        %v4720 = vpack.c.b16 %v4588, %v4585
        %v4721 = vpack.c.b16 %v4589, %v4586
        %v4722 = vpack.c.b16 %v4590, %v4587
        %v4723 = vpack.c.b16 %v4594, %v4591
        %v4724 = vpack.c.b16 %v4595, %v4592
        %v4725 = vpack.c.b16 %v4596, %v4593
        %v4726 = vpack.c.b16 %v4600, %v4597
        %v4727 = vpack.c.b16 %v4601, %v4598
        %v4728 = vpack.c.b16 %v4602, %v4599
        %v4729 = vpack.c.b16 %v4606, %v4603
        %v4730 = vpack.c.b16 %v4607, %v4604
        %v4731 = vpack.c.b16 %v4608, %v4605
        %v4732 = vpack.c.b16 %v4612, %v4609
        %v4733 = vpack.c.b16 %v4613, %v4610
        %v4734 = vpack.c.b16 %v4614, %v4611
        %v4735 = vpack.c.b16 %v4618, %v4615
        %v4736 = vpack.c.b16 %v4619, %v4616
        %v4737 = vpack.c.b16 %v4620, %v4617
        %v4738 = vpack.c.b16 %v4624, %v4621
        %v4739 = vpack.c.b16 %v4625, %v4622
        %v4740 = vpack.c.b16 %v4626, %v4623
        %v4741 = vpack.c.b16 %v4630, %v4627
        %v4742 = vpack.c.b16 %v4631, %v4628
        %v4743 = vpack.c.b16 %v4632, %v4629
        %v4744 = vpack.c.b16 %v4636, %v4633
        %v4745 = vpack.c.b16 %v4637, %v4634
        %v4746 = vpack.c.b16 %v4638, %v4635
        %v4747 = vpack.c.b16 %v4642, %v4639
        %v4748 = vpack.c.b16 %v4643, %v4640
        %v4749 = vpack.c.b16 %v4644, %v4641
        %v4750 = vpack.c.b16 %v4648, %v4645
        %v4751 = vpack.c.b16 %v4649, %v4646
        %v4752 = vpack.c.b16 %v4650, %v4647
        %v4753 = vpack.c.b16 %v4654, %v4651
        %v4754 = vpack.c.b16 %v4655, %v4652
        %v4755 = vpack.c.b16 %v4656, %v4653
        %v4756 = vpack.c.b16 %v4660, %v4657
        %v4757 = vpack.c.b16 %v4661, %v4658
        %v4758 = vpack.c.b16 %v4662, %v4659
        %v4759 = vpack.c.b16 %v4666, %v4663
        %v4760 = vpack.c.b16 %v4667, %v4664
        %v4761 = vpack.c.b16 %v4668, %v4665
        %v4762 = vpack.c.b16 %v4672, %v4669
        %v4763 = vpack.c.b16 %v4673, %v4670
        %v4764 = vpack.c.b16 %v4674, %v4671
        %v4765 = vpack.c.b16 %v4678, %v4675
        %v4766 = vpack.c.b16 %v4679, %v4676
        %v4767 = vpack.c.b16 %v4680, %v4677
        %v4768 = vpack.c.b16 %v4684, %v4681
        %v4769 = vpack.c.b16 %v4685, %v4682
        %v4770 = vpack.c.b16 %v4686, %v4683
        %v4771 = vpack.c.b16 %v4690, %v4687
        %v4772 = vpack.c.b16 %v4691, %v4688
        %v4773 = vpack.c.b16 %v4692, %v4689
        %v4774 = vpack.c.b16 %v4696, %v4693
        %v4775 = vpack.c.b16 %v4697, %v4694
        %v4776 = vpack.c.b16 %v4698, %v4695
        %v4777 = vpack.c.b16 %v4702, %v4699
        %v4778 = vpack.c.b16 %v4703, %v4700
        %v4779 = vpack.c.b16 %v4704, %v4701
        %v4780 = vpack.c.b16 %v4708, %v4705
        %v4781 = vpack.c.b16 %v4709, %v4706
        %v4782 = vpack.c.b16 %v4710, %v4707
        %4855 = vmatpush.bf16.msra.mxu0 %v4732
        %4856 = vmatpush.bf16.msra.mxu0 %v4729
        %4857 = vmatpush.bf16.msra.mxu0 %v4726
        %4858 = vmatpush.bf16.msra.mxu0 %v4723
        %4859 = vmatpush.bf16.msra.mxu0 %v4720
        %4860 = vmatpush.bf16.msra.mxu0 %v4717
        %4861 = vmatpush.bf16.msra.mxu0 %v4714
        %4862 = vmatpush.bf16.msra.mxu0 %v4711
        %4863 = vmatmul.bf16.gmra.mxu0 %v600
        %v4864 = vpop.f32.mrf.mxu0
        %v4865 = vadd.f32 %v4465, %v4864
        %v4866 = vpop.f32.mrf.mxu0
        %v4867 = vadd.f32 %v4465, %v4866
        %4868 = vmatmul.bf16.gmra.mxu0 %v603
        %v4869 = vpop.f32.mrf.mxu0
        %v4870 = vadd.f32 %v4465, %v4869
        %v4871 = vpop.f32.mrf.mxu0
        %v4872 = vadd.f32 %v4465, %v4871
        %4873 = vmatmul.bf16.gmra.mxu0 %v606
        %v4874 = vpop.f32.mrf.mxu0
        %v4875 = vadd.f32 %v4465, %v4874
        %v4876 = vpop.f32.mrf.mxu0
        %v4877 = vadd.f32 %v4465, %v4876
        %4878 = vmatmul.bf16.gmra.mxu0 %v609
        %v4879 = vpop.f32.mrf.mxu0
        %v4880 = vadd.f32 %v4465, %v4879
        %v4881 = vpop.f32.mrf.mxu0
        %v4882 = vadd.f32 %v4465, %v4881
        %4883 = vdwg.mxu0
        %4884 = vmatpush.bf16.msra.mxu0 %v4756
        %4885 = vmatpush.bf16.msra.mxu0 %v4753
        %4886 = vmatpush.bf16.msra.mxu0 %v4750
        %4887 = vmatpush.bf16.msra.mxu0 %v4747
        %4888 = vmatpush.bf16.msra.mxu0 %v4744
        %4889 = vmatpush.bf16.msra.mxu0 %v4741
        %4890 = vmatpush.bf16.msra.mxu0 %v4738
        %4891 = vmatpush.bf16.msra.mxu0 %v4735
        %4892 = vmatmul.bf16.gmra.mxu0 %v601
        %v4893 = vpop.f32.mrf.mxu0
        %v4894 = vadd.f32 %v4865, %v4893
        %v4895 = vpop.f32.mrf.mxu0
        %v4896 = vadd.f32 %v4867, %v4895
        %4897 = vmatmul.bf16.gmra.mxu0 %v604
        %v4898 = vpop.f32.mrf.mxu0
        %v4899 = vadd.f32 %v4870, %v4898
        %v4900 = vpop.f32.mrf.mxu0
        %v4901 = vadd.f32 %v4872, %v4900
        %4902 = vmatmul.bf16.gmra.mxu0 %v607
        %v4903 = vpop.f32.mrf.mxu0
        %v4904 = vadd.f32 %v4875, %v4903
        %v4905 = vpop.f32.mrf.mxu0
        %v4906 = vadd.f32 %v4877, %v4905
        %4907 = vmatmul.bf16.gmra.mxu0 %v610
        %v4908 = vpop.f32.mrf.mxu0
        %v4909 = vadd.f32 %v4880, %v4908
        %v4910 = vpop.f32.mrf.mxu0
        %v4911 = vadd.f32 %v4882, %v4910
        %4912 = vdwg.mxu0
        %4913 = vmatpush.bf16.msra.mxu0 %v4780
        %4914 = vmatpush.bf16.msra.mxu0 %v4777
        %4915 = vmatpush.bf16.msra.mxu0 %v4774
        %4916 = vmatpush.bf16.msra.mxu0 %v4771
        %4917 = vmatpush.bf16.msra.mxu0 %v4768
        %4918 = vmatpush.bf16.msra.mxu0 %v4765
        %4919 = vmatpush.bf16.msra.mxu0 %v4762
        %4920 = vmatpush.bf16.msra.mxu0 %v4759
        %4921 = vmatmul.bf16.gmra.mxu0 %v602
        %v4922 = vpop.f32.mrf.mxu0
        %v4923 = vadd.f32 %v4894, %v4922
        %v4924 = vpop.f32.mrf.mxu0
        %v4925 = vadd.f32 %v4896, %v4924
        %4926 = vmatmul.bf16.gmra.mxu0 %v605
        %v4927 = vpop.f32.mrf.mxu0
        %v4928 = vadd.f32 %v4899, %v4927
        %v4929 = vpop.f32.mrf.mxu0
        %v4930 = vadd.f32 %v4901, %v4929
        %4931 = vmatmul.bf16.gmra.mxu0 %v608
        %v4932 = vpop.f32.mrf.mxu0
        %v4933 = vadd.f32 %v4904, %v4932
        %v4934 = vpop.f32.mrf.mxu0
        %v4935 = vadd.f32 %v4906, %v4934
        %4936 = vmatmul.bf16.gmra.mxu0 %v611
        %v4937 = vpop.f32.mrf.mxu0
        %v4938 = vadd.f32 %v4909, %v4937
        %v4939 = vpop.f32.mrf.mxu0
        %v4940 = vadd.f32 %v4911, %v4939
        %4941 = vdwg.mxu0
        %4942 = vmatpush.bf16.msra.mxu0 %v4733
        %4943 = vmatpush.bf16.msra.mxu0 %v4730
        %4944 = vmatpush.bf16.msra.mxu0 %v4727
        %4945 = vmatpush.bf16.msra.mxu0 %v4724
        %4946 = vmatpush.bf16.msra.mxu0 %v4721
        %4947 = vmatpush.bf16.msra.mxu0 %v4718
        %4948 = vmatpush.bf16.msra.mxu0 %v4715
        %4949 = vmatpush.bf16.msra.mxu0 %v4712
        %4950 = vmatmul.bf16.gmra.mxu0 %v600
        %v4951 = vpop.f32.mrf.mxu0
        %v4952 = vadd.f32 %v4466, %v4951
        %v4953 = vpop.f32.mrf.mxu0
        %v4954 = vadd.f32 %v4466, %v4953
        %4955 = vmatmul.bf16.gmra.mxu0 %v603
        %v4956 = vpop.f32.mrf.mxu0
        %v4957 = vadd.f32 %v4466, %v4956
        %v4958 = vpop.f32.mrf.mxu0
        %v4959 = vadd.f32 %v4466, %v4958
        %4960 = vmatmul.bf16.gmra.mxu0 %v606
        %v4961 = vpop.f32.mrf.mxu0
        %v4962 = vadd.f32 %v4466, %v4961
        %v4963 = vpop.f32.mrf.mxu0
        %v4964 = vadd.f32 %v4466, %v4963
        %4965 = vmatmul.bf16.gmra.mxu0 %v609
        %v4966 = vpop.f32.mrf.mxu0
        %v4967 = vadd.f32 %v4466, %v4966
        %v4968 = vpop.f32.mrf.mxu0
        %v4969 = vadd.f32 %v4466, %v4968
        %4970 = vdwg.mxu0
        %4971 = vmatpush.bf16.msra.mxu0 %v4757
        %4972 = vmatpush.bf16.msra.mxu0 %v4754
        %4973 = vmatpush.bf16.msra.mxu0 %v4751
        %4974 = vmatpush.bf16.msra.mxu0 %v4748
        %4975 = vmatpush.bf16.msra.mxu0 %v4745
        %4976 = vmatpush.bf16.msra.mxu0 %v4742
        %4977 = vmatpush.bf16.msra.mxu0 %v4739
        %4978 = vmatpush.bf16.msra.mxu0 %v4736
        %4979 = vmatmul.bf16.gmra.mxu0 %v601
        %v4980 = vpop.f32.mrf.mxu0
        %v4981 = vadd.f32 %v4952, %v4980
        %v4982 = vpop.f32.mrf.mxu0
        %v4983 = vadd.f32 %v4954, %v4982
        %4984 = vmatmul.bf16.gmra.mxu0 %v604
        %v4985 = vpop.f32.mrf.mxu0
        %v4986 = vadd.f32 %v4957, %v4985
        %v4987 = vpop.f32.mrf.mxu0
        %v4988 = vadd.f32 %v4959, %v4987
        %4989 = vmatmul.bf16.gmra.mxu0 %v607
        %v4990 = vpop.f32.mrf.mxu0
        %v4991 = vadd.f32 %v4962, %v4990
        %v4992 = vpop.f32.mrf.mxu0
        %v4993 = vadd.f32 %v4964, %v4992
        %4994 = vmatmul.bf16.gmra.mxu0 %v610
        %v4995 = vpop.f32.mrf.mxu0
        %v4996 = vadd.f32 %v4967, %v4995
        %v4997 = vpop.f32.mrf.mxu0
        %v4998 = vadd.f32 %v4969, %v4997
        %4999 = vdwg.mxu0
        %5000 = vmatpush.bf16.msra.mxu0 %v4781
        %5001 = vmatpush.bf16.msra.mxu0 %v4778
        %5002 = vmatpush.bf16.msra.mxu0 %v4775
        %5003 = vmatpush.bf16.msra.mxu0 %v4772
        %5004 = vmatpush.bf16.msra.mxu0 %v4769
        %5005 = vmatpush.bf16.msra.mxu0 %v4766
        %5006 = vmatpush.bf16.msra.mxu0 %v4763
        %5007 = vmatpush.bf16.msra.mxu0 %v4760
        %5008 = vmatmul.bf16.gmra.mxu0 %v602
        %v5009 = vpop.f32.mrf.mxu0
        %v5010 = vadd.f32 %v4981, %v5009
        %v5011 = vpop.f32.mrf.mxu0
        %v5012 = vadd.f32 %v4983, %v5011
        %5013 = vmatmul.bf16.gmra.mxu0 %v605
        %v5014 = vpop.f32.mrf.mxu0
        %v5015 = vadd.f32 %v4986, %v5014
        %v5016 = vpop.f32.mrf.mxu0
        %v5017 = vadd.f32 %v4988, %v5016
        %5018 = vmatmul.bf16.gmra.mxu0 %v608
        %v5019 = vpop.f32.mrf.mxu0
        %v5020 = vadd.f32 %v4991, %v5019
        %v5021 = vpop.f32.mrf.mxu0
        %v5022 = vadd.f32 %v4993, %v5021
        %5023 = vmatmul.bf16.gmra.mxu0 %v611
        %v5024 = vpop.f32.mrf.mxu0
        %v5025 = vadd.f32 %v4996, %v5024
        %v5026 = vpop.f32.mrf.mxu0
        %v5027 = vadd.f32 %v4998, %v5026
        %5028 = vdwg.mxu0
        %5029 = vmatpush.bf16.msra.mxu0 %v4734
        %5030 = vmatpush.bf16.msra.mxu0 %v4731
        %5031 = vmatpush.bf16.msra.mxu0 %v4728
        %5032 = vmatpush.bf16.msra.mxu0 %v4725
        %5033 = vmatpush.bf16.msra.mxu0 %v4722
        %5034 = vmatpush.bf16.msra.mxu0 %v4719
        %5035 = vmatpush.bf16.msra.mxu0 %v4716
        %5036 = vmatpush.bf16.msra.mxu0 %v4713
        %5037 = vmatmul.bf16.gmra.mxu0 %v600
        %v5038 = vpop.f32.mrf.mxu0
        %v5039 = vadd.f32 %v4467, %v5038
        %v5040 = vpop.f32.mrf.mxu0
        %v5041 = vadd.f32 %v4467, %v5040
        %5042 = vmatmul.bf16.gmra.mxu0 %v603
        %v5043 = vpop.f32.mrf.mxu0
        %v5044 = vadd.f32 %v4467, %v5043
        %v5045 = vpop.f32.mrf.mxu0
        %v5046 = vadd.f32 %v4467, %v5045
        %5047 = vmatmul.bf16.gmra.mxu0 %v606
        %v5048 = vpop.f32.mrf.mxu0
        %v5049 = vadd.f32 %v4467, %v5048
        %v5050 = vpop.f32.mrf.mxu0
        %v5051 = vadd.f32 %v4467, %v5050
        %5052 = vmatmul.bf16.gmra.mxu0 %v609
        %v5053 = vpop.f32.mrf.mxu0
        %v5054 = vadd.f32 %v4467, %v5053
        %v5055 = vpop.f32.mrf.mxu0
        %v5056 = vadd.f32 %v4467, %v5055
        %5057 = vdwg.mxu0
        %5058 = vmatpush.bf16.msra.mxu0 %v4758
        %5059 = vmatpush.bf16.msra.mxu0 %v4755
        %5060 = vmatpush.bf16.msra.mxu0 %v4752
        %5061 = vmatpush.bf16.msra.mxu0 %v4749
        %5062 = vmatpush.bf16.msra.mxu0 %v4746
        %5063 = vmatpush.bf16.msra.mxu0 %v4743
        %5064 = vmatpush.bf16.msra.mxu0 %v4740
        %5065 = vmatpush.bf16.msra.mxu0 %v4737
        %5066 = vmatmul.bf16.gmra.mxu0 %v601
        %v5067 = vpop.f32.mrf.mxu0
        %v5068 = vadd.f32 %v5039, %v5067
        %v5069 = vpop.f32.mrf.mxu0
        %v5070 = vadd.f32 %v5041, %v5069
        %5071 = vmatmul.bf16.gmra.mxu0 %v604
        %v5072 = vpop.f32.mrf.mxu0
        %v5073 = vadd.f32 %v5044, %v5072
        %v5074 = vpop.f32.mrf.mxu0
        %v5075 = vadd.f32 %v5046, %v5074
        %5076 = vmatmul.bf16.gmra.mxu0 %v607
        %v5077 = vpop.f32.mrf.mxu0
        %v5078 = vadd.f32 %v5049, %v5077
        %v5079 = vpop.f32.mrf.mxu0
        %v5080 = vadd.f32 %v5051, %v5079
        %5081 = vmatmul.bf16.gmra.mxu0 %v610
        %v5082 = vpop.f32.mrf.mxu0
        %v5083 = vadd.f32 %v5054, %v5082
        %v5084 = vpop.f32.mrf.mxu0
        %v5085 = vadd.f32 %v5056, %v5084
        %5086 = vdwg.mxu0
        %5087 = vmatpush.bf16.msra.mxu0 %v4782
        %5088 = vmatpush.bf16.msra.mxu0 %v4779
        %5089 = vmatpush.bf16.msra.mxu0 %v4776
        %5090 = vmatpush.bf16.msra.mxu0 %v4773
        %5091 = vmatpush.bf16.msra.mxu0 %v4770
        %5092 = vmatpush.bf16.msra.mxu0 %v4767
        %5093 = vmatpush.bf16.msra.mxu0 %v4764
        %5094 = vmatpush.bf16.msra.mxu0 %v4761
        %5095 = vmatmul.bf16.gmra.mxu0 %v602
        %v5096 = vpop.f32.mrf.mxu0
        %v5097 = vadd.f32 %v5068, %v5096
        %v5098 = vpop.f32.mrf.mxu0
        %v5099 = vadd.f32 %v5070, %v5098
        %5100 = vmatmul.bf16.gmra.mxu0 %v605
        %v5101 = vpop.f32.mrf.mxu0
        %v5102 = vadd.f32 %v5073, %v5101
        %v5103 = vpop.f32.mrf.mxu0
        %v5104 = vadd.f32 %v5075, %v5103
        %5105 = vmatmul.bf16.gmra.mxu0 %v608
        %v5106 = vpop.f32.mrf.mxu0
        %v5107 = vadd.f32 %v5078, %v5106
        %v5108 = vpop.f32.mrf.mxu0
        %v5109 = vadd.f32 %v5080, %v5108
        %5110 = vmatmul.bf16.gmra.mxu0 %v611
        %v5111 = vpop.f32.mrf.mxu0
        %v5112 = vadd.f32 %v5083, %v5111
        %v5113 = vpop.f32.mrf.mxu0
        %v5114 = vadd.f32 %v5085, %v5113
        %5115 = vdwg.mxu0
        %5116 = vst [vmem:[%s296] sm:$0xff] %v4923
        %5117 = vst [vmem:[%s296 + $0x8] sm:$0xff] %v5010
        %5118 = vst [vmem:[%s296 + $0x10] sm:$0xff] %v5097
        %5119 = vst [vmem:[%s296 + $0x18] sm:$0xff] %v4925
        %5120 = vst [vmem:[%s296 + $0x20] sm:$0xff] %v5012
        %5121 = vst [vmem:[%s296 + $0x28] sm:$0xff] %v5099
        %5122 = vst [vmem:[%s296 + $0x30] sm:$0xff] %v4928
        %5123 = vst [vmem:[%s296 + $0x38] sm:$0xff] %v5015
        %5124 = vst [vmem:[%s296 + $0x40] sm:$0xff] %v5102
        %5125 = vst [vmem:[%s296 + $0x48] sm:$0xff] %v4930
        %5126 = vst [vmem:[%s296 + $0x50] sm:$0xff] %v5017
        %5127 = vst [vmem:[%s296 + $0x58] sm:$0xff] %v5104
        %5128 = vst [vmem:[%s296 + $0x60] sm:$0xff] %v4933
        %5129 = vst [vmem:[%s296 + $0x68] sm:$0xff] %v5020
        %5130 = vst [vmem:[%s296 + $0x70] sm:$0xff] %v5107
        %5131 = vst [vmem:[%s296 + $0x78] sm:$0xff] %v4935
        %5132 = vst [vmem:[%s296 + $0x80] sm:$0xff] %v5022
        %5133 = vst [vmem:[%s296 + $0x88] sm:$0xff] %v5109
        %5134 = vst [vmem:[%s296 + $0x90] sm:$0xff] %v4938
        %5135 = vst [vmem:[%s296 + $0x98] sm:$0xff] %v5025
        %5136 = vst [vmem:[%s296 + $0xa0] sm:$0xff] %v5112
        %5137 = vst [vmem:[%s296 + $0xa8] sm:$0xff] %v4940
        %5138 = vst [vmem:[%s296 + $0xb0] sm:$0xff] %v5027
        %5139 = vst [vmem:[%s296 + $0xb8] sm:$0xff] %v5114
        %s5140 = sand.u32 %s125, 1
        %s5141 = scalar_lea.sflag [#allocation4], %s5140
        %s5142 = sand.u32 %s125, 1
        %s5143 = smul.addr %s5142, 192
        %s5144 = scalar_lea.vmem [#allocation10], %s5143
        %s5145 = sand.u32 %s151, 1
        %s5146 = scalar_lea.sflag [#allocation12], %s5145
        %s5147 = sand.u32 %s151, 1
        %s5148 = smul.addr %s5147, 192
        %s5149 = scalar_lea.vmem [#allocation11], %s5148
        // Predicated region
        $region53: #{tpu_custom_call.1} parent=35 // pred_check
          %p5150 = pneg %p135
        $region54: #{tpu_custom_call.1} parent=35 // pred_check_branch
          %5152 = sbr.rel (%p5150) target = $region56
        $region55: #{tpu_custom_call.1} parent=35 // pred_region
          %5154 = vsyncadd %s5141, 0
          %s5155 = smul.addr %s28, 24
          %s5156 = smul.addr %s5155, 8
          %s5157 = scalar_lea.hbm %s4, %s5156
          %s5158 = sshll.u32 %s5144, 4
          %s5159 = int_to_ptr.vmem [resolvable:$true] %s5158
          %s5160 = sshll.u32 %s5157, 4
          %s5161 = int_to_ptr.hbm [resolvable:$true] %s5160
          %5166 = dma.vmem_to_hbm [thread:$0]  %s5159, 3072, %s5161, %s5141, 384, 384, 24
        $region56: #{tpu_custom_call.1} parent=35 // pred_fallthru
          _
        // Predicated region
        $region57: #{tpu_custom_call.1} parent=35 // pred_check
          %p5167 = pneg %p161
        $region58: #{tpu_custom_call.1} parent=35 // pred_check_branch
          %5169 = sbr.rel (%p5167) target = $region60
        $region59: #{tpu_custom_call.1} parent=35 // pred_region
          %5171 = vsyncadd %s5146, 0
          %s5172 = smul.addr %s28, 24
          %s5173 = smul.addr %s5172, 8
          %s5174 = scalar_lea.hbm %s5, %s5173
          %s5175 = sshll.u32 %s5149, 4
          %s5176 = int_to_ptr.vmem [resolvable:$true] %s5175
          %s5177 = sshll.u32 %s5174, 4
          %s5178 = int_to_ptr.hbm [resolvable:$true] %s5177
          %5183 = dma.vmem_to_hbm [thread:$0]  %s5176, 3072, %s5178, %s5146, 384, 384, 24
        $region60: #{tpu_custom_call.1} parent=35 // pred_fallthru
          _
      $region36: #{tpu_custom_call.1} parent=5 // pred_fallthru
        _
      %p5184 = scmp.le.s32.totalorder 2, %s23
      // Predicated region
      $region61: #{tpu_custom_call.1} parent=5 // pred_check
        %p5185 = pneg %p5184
      $region62: #{tpu_custom_call.1} parent=5 // pred_check_branch
        %5187 = sbr.rel (%p5185) target = $region64
      $region63: #{tpu_custom_call.1} parent=5 // pred_region
        %s5188 = ssub.s32 %s23, 2
        // Predicated region
        $region65: #{tpu_custom_call.1} parent=63 // pred_check
          %p5189 = pneg %p141
        $region66: #{tpu_custom_call.1} parent=63 // pred_check_branch
          %5191 = sbr.rel (%p5189) target = $region68
        $region67: #{tpu_custom_call.1} parent=63 // pred_region
          %s5192 = sand.u32 %s126, 1
          %s5193 = scalar_lea.sflag [#allocation4], %s5192
          %s5194 = sand.u32 %s126, 1
          %s5195 = smul.addr %s5194, 192
          %s5196 = scalar_lea.vmem [#allocation10], %s5195
          %5198 = dma.done %s5193, 3072
        $region68: #{tpu_custom_call.1} parent=63 // pred_fallthru
          _
        // Predicated region
        $region69: #{tpu_custom_call.1} parent=63 // pred_check
          %p5199 = pneg %p167
        $region70: #{tpu_custom_call.1} parent=63 // pred_check_branch
          %5201 = sbr.rel (%p5199) target = $region72
        $region71: #{tpu_custom_call.1} parent=63 // pred_region
          %s5202 = sand.u32 %s152, 1
          %s5203 = scalar_lea.sflag [#allocation12], %s5202
          %s5204 = sand.u32 %s152, 1
          %s5205 = smul.addr %s5204, 192
          %s5206 = scalar_lea.vmem [#allocation11], %s5205
          %5208 = dma.done %s5203, 3072
        $region72: #{tpu_custom_call.1} parent=63 // pred_fallthru
          _
      $region64: #{tpu_custom_call.1} parent=5 // pred_fallthru
        _
    $region6: #{tpu_custom_call.1} parent=1 // loop_footer
      %s27 = sadd.s32 1, %s23
    $region7: #{tpu_custom_call.1} parent=1 // loop_footer_branch
      %22 = sbr.rel target = $region3
    $region8: #{tpu_custom_call.1} parent=1 // loop_exit
      _
    %5209 = vsyncpa [#allocation3], 1
    %s5210 = scalar_lea.sflag [#allocation3], 1
    %5211 = vsyncpa %s5210, 1
    %5212 = vsyncpa [#allocation6], 1
    %5213 = vsyncpa [#allocation9], 1
    %5214 = vsyncpa [#allocation4], 1
    %s5215 = scalar_lea.sflag [#allocation4], 1
    %5216 = vsyncpa %s5215, 1
    %5217 = vsyncpa [#allocation12], 1
    %s5218 = scalar_lea.sflag [#allocation12], 1
    %5219 = vsyncpa %s5218, 1

</llo_original>
